<compile_context>
chip_gen: v6e
topology: v6e:2x2x1
jax: 0.10.0
libtpu: 0.0.40
codegen_flags: <defaults>
</compile_context>

<pallas_src>
import math
import functools

import jax
import jax.numpy as jnp
from jax.experimental import pallas as pl
from jax.experimental.pallas import tpu as pltpu

_BN_EPS = 1e-5


# ----------------------------------------------------------------------------
# Pallas kernels: bf16 MXU matmul + f32 epilogue (scale/bias/residual/act)
# ----------------------------------------------------------------------------
def _apply_act(acc, act, relu_cols):
    if act == "relu":
        if relu_cols is None:
            return jnp.maximum(acc, 0.0)
        # column-masked ReLU: used when the 1x1 downsample (no activation) is
        # packed along N next to conv1 (ReLU) in the same matmul.
        col = jax.lax.broadcasted_iota(jnp.int32, acc.shape, 1)
        return jnp.where(col < relu_cols, jnp.maximum(acc, 0.0), acc)
    if act == "sigmoid":
        return 1.0 / (1.0 + jnp.exp(-acc))
    return acc


def _mm_kernel(x_ref, w_ref, s_ref, b_ref, o_ref, *, act, relu_cols):
    acc = jnp.dot(x_ref[...], w_ref[...], preferred_element_type=jnp.float32)
    acc = acc * s_ref[...] + b_ref[...]
    o_ref[...] = _apply_act(acc, act, relu_cols)


def _mm_res_kernel(x_ref, w_ref, s_ref, b_ref, r_ref, o_ref, *, act, relu_cols):
    acc = jnp.dot(x_ref[...], w_ref[...], preferred_element_type=jnp.float32)
    acc = acc * s_ref[...] + b_ref[...] + r_ref[...]
    o_ref[...] = _apply_act(acc, act, relu_cols)


def fused_matmul(x, w, scale, bias, residual=None, act="none", relu_cols=None):
    """out = act((x @ w) * scale + bias [+ residual]).

    x is cast to bf16 (w is already bf16); scale/bias/residual and the whole
    epilogue stay in f32.  Everything here is tiny, so a single full-array
    block per operand is used (no padding, no output slice, no dummy residual).
    # TODO(synk): add M/K grid tiling (f32 acc scratch + pl.when init) before
    # running at realistic batch/spatial sizes on v7x (64 MiB VMEM).
    """
    M, K = x.shape
    K2, N = w.shape
    assert K == K2
    x = x.astype(jnp.bfloat16)
    scale = scale.reshape(1, N).astype(jnp.float32)
    bias = bias.reshape(1, N).astype(jnp.float32)

    in_specs = [
        pl.BlockSpec((M, K), lambda i: (0, 0)),
        pl.BlockSpec((K, N), lambda i: (0, 0)),
        pl.BlockSpec((1, N), lambda i: (0, 0)),
        pl.BlockSpec((1, N), lambda i: (0, 0)),
    ]
    args = [x, w, scale, bias]
    if residual is None:
        kern = functools.partial(_mm_kernel, act=act, relu_cols=relu_cols)
    else:
        in_specs.append(pl.BlockSpec((M, N), lambda i: (0, 0)))
        args.append(residual.astype(jnp.float32))
        kern = functools.partial(_mm_res_kernel, act=act, relu_cols=relu_cols)

    return pl.pallas_call(
        kern,
        out_shape=jax.ShapeDtypeStruct((M, N), jnp.float32),
        grid=(1,),
        in_specs=in_specs,
        out_specs=pl.BlockSpec((M, N), lambda i: (0, 0)),
        compiler_params=pltpu.CompilerParams(
            dimension_semantics=("arbitrary",)),
    )(*args)


# ----------------------------------------------------------------------------
# JAX glue (layout plumbing / patch extraction)
# ----------------------------------------------------------------------------
def im2col(x_nhwc, kh, kw, stride, pad):
    # TODO(synk): replace with in-kernel tap accumulation (K-grid over taps) to
    # avoid the kh*kw activation materialization at larger problem sizes.
    x = x_nhwc.astype(jnp.bfloat16)
    N, H, W, C = x.shape
    Ho = (H + 2 * pad - kh) // stride + 1
    Wo = (W + 2 * pad - kw) // stride + 1
    if pad:
        x = jnp.pad(x, ((0, 0), (pad, pad), (pad, pad), (0, 0)))
    taps = [x[:, i:i + stride * (Ho - 1) + 1:stride,
               j:j + stride * (Wo - 1) + 1:stride, :]
            for i in range(kh) for j in range(kw)]
    # flatten order (kh, kw, c) matches the prepared weight matrices
    patches = jnp.stack(taps, axis=3).reshape(N * Ho * Wo, kh * kw * C)
    return patches, Ho, Wo


def conv_bn(x_nhwc, pc, kh, kw, stride, pad, act, residual=None, relu_cols=None):
    N = x_nhwc.shape[0]
    patches, Ho, Wo = im2col(x_nhwc, kh, kw, stride, pad)
    out = fused_matmul(patches, pc["w"], pc["scale"], pc["bias"],
                       residual=residual, act=act, relu_cols=relu_cols)
    return out.reshape(N, Ho, Wo, out.shape[-1])


def basic_block(x_nhwc, blk, stride):
    N, H, W, C = x_nhwc.shape
    if "packed" in blk:
        # conv1 (ReLU) and the 1x1-stride-2 downsample (no act) share the same
        # strided centre-tap reads, so one packed matmul (N = 128+128 = 256)
        # produces both the main path and the identity path.
        cout = blk["packed"]["w"].shape[1] // 2
        y_all = conv_bn(x_nhwc, blk["packed"], 3, 3, stride, 1, "relu",
                        relu_cols=cout)
        _, Ho, Wo, _ = y_all.shape
        y = y_all[..., :cout]
        idn = y_all[..., cout:].reshape(N * Ho * Wo, cout)
    else:
        y = conv_bn(x_nhwc, blk["conv1"], 3, 3, stride, 1, "relu")
        _, Ho, Wo, _ = y.shape
        idn = x_nhwc.reshape(N * H * W, C)
    # conv2 + BN + residual add + ReLU fused into a single Pallas call.
    return conv_bn(y, blk["conv2"], 3, 3, 1, 1, "relu", residual=idn)


# ----------------------------------------------------------------------------
# Pools / head kept in XLA (per perf review: >90% padded work as Pallas calls)
# ----------------------------------------------------------------------------
def adaptive_pool_matrix(in_size, out_size):
    """Exact PyTorch AdaptiveAvgPool bins: [floor(i*In/Out), ceil((i+1)*In/Out))."""
    rows = []
    for i in range(out_size):
        start = (i * in_size) // out_size
        end = -((-(i + 1) * in_size) // out_size)
        row = [0.0] * in_size
        for j in range(start, end):
            row[j] = 1.0 / (end - start)
        rows.append(row)
    return jnp.array(rows, dtype=jnp.float32)


def adaptive_avg_pool2d(x_nchw, out_h, out_w):
    N, C, H, W = x_nchw.shape
    Ph = adaptive_pool_matrix(H, out_h)   # (out_h, H)
    Pw = adaptive_pool_matrix(W, out_w)   # (out_w, W)
    return jnp.einsum('nchw,oh,pw->ncop', x_nchw, Ph, Pw)


def maxpool_3x3_s2_p1(x_nhwc):
    N, H, W, C = x_nhwc.shape
    Ho = (H + 2 - 3) // 2 + 1
    Wo = (W + 2 - 3) // 2 + 1
    xp = jnp.pad(x_nhwc, ((0, 0), (1, 1), (1, 1), (0, 0)),
                 constant_values=-jnp.inf)
    out = None
    for i in range(3):
        for j in range(3):
            t = xp[:, i:i + 2 * (Ho - 1) + 1:2, j:j + 2 * (Wo - 1) + 1:2, :]
            out = t if out is None else jnp.maximum(out, t)
    return out


# ----------------------------------------------------------------------------
# Deterministic synthetic parameters (module __init__ shapes; no checkpoint)
# ----------------------------------------------------------------------------
def init_params(key):
    keys = iter(jax.random.split(key, 64))

    def conv(cout, cin, kh, kw):
        fan_in = cin * kh * kw
        return jax.random.normal(next(keys), (cout, cin, kh, kw),
                                 jnp.float32) / math.sqrt(fan_in)

    def bn(c):
        return dict(
            gamma=1.0 + 0.1 * jax.random.normal(next(keys), (c,), jnp.float32),
            beta=0.1 * jax.random.normal(next(keys), (c,), jnp.float32),
            mean=0.1 * jax.random.normal(next(keys), (c,), jnp.float32),
            var=0.5 + jax.random.uniform(next(keys), (c,), jnp.float32),
        )

    def block(cin, cout, downsample):
        b = dict(conv1=conv(cout, cin, 3, 3), bn1=bn(cout),
                 conv2=conv(cout, cout, 3, 3), bn2=bn(cout))
        if downsample:
            b["downsample_conv"] = conv(cout, cin, 1, 1)
            b["downsample_bn"] = bn(cout)
        return b

    return dict(
        conv1=conv(64, 2, 7, 7), bn1=bn(64),
        layer1=[block(64, 64, False), block(64, 64, False)],
        layer2=[block(64, 128, True), block(128, 128, False)],
        fc_w=jax.random.normal(next(keys), (1, 128), jnp.float32) / math.sqrt(128),
        fc_b=jnp.zeros((1,), jnp.float32),
    )


# ----------------------------------------------------------------------------
# One-time parameter preparation (hoisted out of the per-forward path)
# ----------------------------------------------------------------------------
def _prep_conv(w_pt, bn):
    cout, cin, kh, kw = w_pt.shape
    w = jnp.transpose(w_pt, (2, 3, 1, 0)).reshape(kh * kw * cin, cout)
    s = bn["gamma"] / jnp.sqrt(bn["var"] + _BN_EPS)
    b = bn["beta"] - bn["mean"] * s
    return dict(w=w.astype(jnp.bfloat16),
                scale=s.reshape(1, cout).astype(jnp.float32),
                bias=b.reshape(1, cout).astype(jnp.float32))


def _prep_block(blk):
    out = dict(conv2=_prep_conv(blk["conv2"], blk["bn2"]))
    c1 = _prep_conv(blk["conv1"], blk["bn1"])
    if "downsample_conv" in blk:
        ds = _prep_conv(blk["downsample_conv"], blk["downsample_bn"])
        cout, cin = blk["conv1"].shape[0], blk["conv1"].shape[1]
        K = c1["w"].shape[0]                       # 9 * cin
        # place the 1x1 downsample weight on the centre-tap (i=1, j=1) rows of
        # the 3x3 K range, then concatenate along N: [conv1 | downsample].
        wd = jnp.zeros((K, cout), jnp.bfloat16).at[4 * cin:5 * cin, :].set(ds["w"])
        out["packed"] = dict(
            w=jnp.concatenate([c1["w"], wd], axis=1),
            scale=jnp.concatenate([c1["scale"], ds["scale"]], axis=1),
            bias=jnp.concatenate([c1["bias"], ds["bias"]], axis=1))
    else:
        out["conv1"] = c1
    return out


def prepare_params(params):
    return dict(
        conv1=_prep_conv(params["conv1"], params["bn1"]),
        layer1=[_prep_block(b) for b in params["layer1"]],
        layer2=[_prep_block(b) for b in params["layer2"]],
        fc_w=params["fc_w"].astype(jnp.float32),
        fc_b=params["fc_b"].astype(jnp.float32),
    )


# ----------------------------------------------------------------------------
# Forward pass (CNN.forward, eval mode)
# ----------------------------------------------------------------------------
@functools.partial(jax.jit, static_argnames=("seq_len", "hw_rate"))
def cnn_forward(prepped, x_nchw, *, seq_len=64, hw_rate=1):
    width = int(math.sqrt(seq_len / hw_rate)) + 1
    height = int(width * hw_rate) + 1

    # self.pool = AdaptiveAvgPool2d((2, height*width)) -> reshape -> NHWC
    x = adaptive_avg_pool2d(x_nchw, 2, height * width)
    x = x.reshape(-1, 2, height, width)
    x = jnp.transpose(x, (0, 2, 3, 1))

    # resnet.conv1 (2->64, 7x7, s2, p3, no bias) + bn1 + relu   (Pallas)
    x = conv_bn(x, prepped["conv1"], 7, 7, 2, 3, "relu")
    # resnet.maxpool: MaxPool2d(3, stride=2, padding=1)          (XLA max tree)
    x = maxpool_3x3_s2_p1(x)

    # layer1: two BasicBlocks, 64ch, stride 1
    for blk in prepped["layer1"]:
        x = basic_block(x, blk, 1)
    # layer2: BasicBlock 64->128 stride 2 (packed downsample), then 128ch s1
    x = basic_block(x, prepped["layer2"][0], 2)
    x = basic_block(x, prepped["layer2"][1], 1)
    # layer3 / layer4: empty nn.Sequential() -> identity

    # avgpool + flatten; Dropout(0.2) identity in eval; Linear(128,1)+Sigmoid.
    feat = jnp.mean(x, axis=(1, 2))                    # (B, 128)
    logits = feat @ prepped["fc_w"].T + prepped["fc_b"]
    return jax.nn.sigmoid(logits)


if __name__ == "__main__":
    key = jax.random.PRNGKey(0)
    kp, kx = jax.random.split(key)
    params = init_params(kp)
    prepped = prepare_params(params)   # one-time: fold BN, transpose, bf16 cast
    # Input like the PyTorch module: NCHW. seq_len=64 => height=10, width=9.
    x = jax.random.normal(kx, (2, 3, 8, 8), jnp.float32)
    out = cnn_forward(prepped, x, seq_len=64, hw_rate=1)
    jax.block_until_ready(out)
    assert out.shape == (6, 1)         # (N*C*2*90)/(2*10*9) = 6 effective batch
    assert bool(jnp.all((out >= 0.0) & (out <= 1.0)))
    print("KERNEL_OK")
</pallas_src>

<mosaic_0001>
module attributes {stable_mosaic.version = 11 : i64} {
  func.func @_mm_kernel(%arg0: i32, %arg1: memref<150x98xbf16, #tpu.memory_space<vmem>>, %arg2: memref<98x64xbf16, #tpu.memory_space<vmem>>, %arg3: memref<1x64xf32, #tpu.memory_space<vmem>>, %arg4: memref<1x64xf32, #tpu.memory_space<vmem>>, %arg5: memref<150x64xf32, #tpu.memory_space<vmem>>) attributes {dimension_semantics = [#tpu.dimension_semantics<arbitrary>], iteration_bounds = array<i64: 1>, scalar_prefetch = 0 : i64, scratch_operands = 0 : i64, tpu.core_type = #tpu.core_type<tc>, window_params = [{pipeline_mode = #tpu.pipeline_mode<synchronous>, transform_indices = @transform_0, window_bounds = array<i64: 150, 98>}, {pipeline_mode = #tpu.pipeline_mode<synchronous>, transform_indices = @transform_1, window_bounds = array<i64: 98, 64>}, {pipeline_mode = #tpu.pipeline_mode<synchronous>, transform_indices = @transform_2, window_bounds = array<i64: 1, 64>}, {pipeline_mode = #tpu.pipeline_mode<synchronous>, transform_indices = @transform_3, window_bounds = array<i64: 1, 64>}, {pipeline_mode = #tpu.pipeline_mode<synchronous>, transform_indices = @transform_4, window_bounds = array<i64: 150, 64>}]} {
    %c0 = arith.constant 0 : index
    %c0_0 = arith.constant 0 : index
    %0 = vector.load %arg1[%c0, %c0_0] : memref<150x98xbf16, #tpu.memory_space<vmem>>, vector<150x98xbf16>
    %c0_1 = arith.constant 0 : index
    %c0_2 = arith.constant 0 : index
    %1 = vector.load %arg2[%c0_1, %c0_2] : memref<98x64xbf16, #tpu.memory_space<vmem>>, vector<98x64xbf16>
    %cst = arith.constant dense<0.000000e+00> : vector<150x64xf32>
    %2 = tpu.matmul %0, %1, %cst {dimension_numbers = #tpu.dot_dimension_numbers<[1], [0], [0], [1], [0, 0, 1, 1], [], []>} : vector<150x98xbf16>, vector<98x64xbf16>, vector<150x64xf32> -> vector<150x64xf32>
    %c0_3 = arith.constant 0 : index
    %c0_4 = arith.constant 0 : index
    %3 = vector.load %arg3[%c0_3, %c0_4] : memref<1x64xf32, #tpu.memory_space<vmem>>, vector<1x64xf32>
    %4 = vector.broadcast %3 : vector<1x64xf32> to vector<150x64xf32>
    %5 = arith.mulf %2, %4 : vector<150x64xf32>
    %c0_5 = arith.constant 0 : index
    %c0_6 = arith.constant 0 : index
    %6 = vector.load %arg4[%c0_5, %c0_6] : memref<1x64xf32, #tpu.memory_space<vmem>>, vector<1x64xf32>
    %7 = vector.broadcast %6 : vector<1x64xf32> to vector<150x64xf32>
    %8 = arith.addf %5, %7 : vector<150x64xf32>
    %cst_7 = arith.constant 0.000000e+00 : f32
    %9 = vector.broadcast %cst_7 : f32 to vector<150x64xf32>
    %10 = arith.maximumf %8, %9 : vector<150x64xf32>
    %c0_8 = arith.constant 0 : index
    %c0_9 = arith.constant 0 : index
    %11 = vector.load %arg5[%c0_8, %c0_9] : memref<150x64xf32, #tpu.memory_space<vmem>>, vector<150x64xf32>
    tpu.vector_store %arg5[%c0_8, %c0_9], %10 {strides = array<i32>} : memref<150x64xf32, #tpu.memory_space<vmem>>, vector<150x64xf32>,
    return
  }
  func.func @transform_0(%arg0: i32) -> (i32, i32) {
    %c0_i32 = arith.constant 0 : i32
    %c0_i32_0 = arith.constant 0 : i32
    %c0_i32_1 = arith.constant 0 : i32
    return %c0_i32, %c0_i32_0 : i32, i32
  }
  func.func @transform_1(%arg0: i32) -> (i32, i32) {
    %c0_i32 = arith.constant 0 : i32
    %c0_i32_0 = arith.constant 0 : i32
    %c0_i32_1 = arith.constant 0 : i32
    return %c0_i32, %c0_i32_0 : i32, i32
  }
  func.func @transform_2(%arg0: i32) -> (i32, i32) {
    %c0_i32 = arith.constant 0 : i32
    %c0_i32_0 = arith.constant 0 : i32
    %c0_i32_1 = arith.constant 0 : i32
    return %c0_i32, %c0_i32_0 : i32, i32
  }
  func.func @transform_3(%arg0: i32) -> (i32, i32) {
    %c0_i32 = arith.constant 0 : i32
    %c0_i32_0 = arith.constant 0 : i32
    %c0_i32_1 = arith.constant 0 : i32
    return %c0_i32, %c0_i32_0 : i32, i32
  }
  func.func @transform_4(%arg0: i32) -> (i32, i32) {
    %c0_i32 = arith.constant 0 : i32
    %c0_i32_0 = arith.constant 0 : i32
    %c0_i32_1 = arith.constant 0 : i32
    return %c0_i32, %c0_i32_0 : i32, i32
  }
}

module attributes {stable_mosaic.version = 11 : i64} {
  func.func @_mm_kernel(%arg0: i32, %arg1: memref<54x576xbf16, #tpu.memory_space<vmem>>, %arg2: memref<576x64xbf16, #tpu.memory_space<vmem>>, %arg3: memref<1x64xf32, #tpu.memory_space<vmem>>, %arg4: memref<1x64xf32, #tpu.memory_space<vmem>>, %arg5: memref<54x64xf32, #tpu.memory_space<vmem>>) attributes {dimension_semantics = [#tpu.dimension_semantics<arbitrary>], iteration_bounds = array<i64: 1>, scalar_prefetch = 0 : i64, scratch_operands = 0 : i64, tpu.core_type = #tpu.core_type<tc>, window_params = [{pipeline_mode = #tpu.pipeline_mode<synchronous>, transform_indices = @transform_0, window_bounds = array<i64: 54, 576>}, {pipeline_mode = #tpu.pipeline_mode<synchronous>, transform_indices = @transform_1, window_bounds = array<i64: 576, 64>}, {pipeline_mode = #tpu.pipeline_mode<synchronous>, transform_indices = @transform_2, window_bounds = array<i64: 1, 64>}, {pipeline_mode = #tpu.pipeline_mode<synchronous>, transform_indices = @transform_3, window_bounds = array<i64: 1, 64>}, {pipeline_mode = #tpu.pipeline_mode<synchronous>, transform_indices = @transform_4, window_bounds = array<i64: 54, 64>}]} {
    %c0 = arith.constant 0 : index
    %c0_0 = arith.constant 0 : index
    %0 = vector.load %arg1[%c0, %c0_0] : memref<54x576xbf16, #tpu.memory_space<vmem>>, vector<54x576xbf16>
    %c0_1 = arith.constant 0 : index
    %c0_2 = arith.constant 0 : index
    %1 = vector.load %arg2[%c0_1, %c0_2] : memref<576x64xbf16, #tpu.memory_space<vmem>>, vector<576x64xbf16>
    %cst = arith.constant dense<0.000000e+00> : vector<54x64xf32>
    %2 = tpu.matmul %0, %1, %cst {dimension_numbers = #tpu.dot_dimension_numbers<[1], [0], [0], [1], [0, 0, 1, 1], [], []>} : vector<54x576xbf16>, vector<576x64xbf16>, vector<54x64xf32> -> vector<54x64xf32>
    %c0_3 = arith.constant 0 : index
    %c0_4 = arith.constant 0 : index
    %3 = vector.load %arg3[%c0_3, %c0_4] : memref<1x64xf32, #tpu.memory_space<vmem>>, vector<1x64xf32>
    %4 = vector.broadcast %3 : vector<1x64xf32> to vector<54x64xf32>
    %5 = arith.mulf %2, %4 : vector<54x64xf32>
    %c0_5 = arith.constant 0 : index
    %c0_6 = arith.constant 0 : index
    %6 = vector.load %arg4[%c0_5, %c0_6] : memref<1x64xf32, #tpu.memory_space<vmem>>, vector<1x64xf32>
    %7 = vector.broadcast %6 : vector<1x64xf32> to vector<54x64xf32>
    %8 = arith.addf %5, %7 : vector<54x64xf32>
    %cst_7 = arith.constant 0.000000e+00 : f32
    %9 = vector.broadcast %cst_7 : f32 to vector<54x64xf32>
    %10 = arith.maximumf %8, %9 : vector<54x64xf32>
    %c0_8 = arith.constant 0 : index
    %c0_9 = arith.constant 0 : index
    %11 = vector.load %arg5[%c0_8, %c0_9] : memref<54x64xf32, #tpu.memory_space<vmem>>, vector<54x64xf32>
    tpu.vector_store %arg5[%c0_8, %c0_9], %10 {strides = array<i32>} : memref<54x64xf32, #tpu.memory_space<vmem>>, vector<54x64xf32>,
    return
  }
  func.func @transform_0(%arg0: i32) -> (i32, i32) {
    %c0_i32 = arith.constant 0 : i32
    %c0_i32_0 = arith.constant 0 : i32
    %c0_i32_1 = arith.constant 0 : i32
    return %c0_i32, %c0_i32_0 : i32, i32
  }
  func.func @transform_1(%arg0: i32) -> (i32, i32) {
    %c0_i32 = arith.constant 0 : i32
    %c0_i32_0 = arith.constant 0 : i32
    %c0_i32_1 = arith.constant 0 : i32
    return %c0_i32, %c0_i32_0 : i32, i32
  }
  func.func @transform_2(%arg0: i32) -> (i32, i32) {
    %c0_i32 = arith.constant 0 : i32
    %c0_i32_0 = arith.constant 0 : i32
    %c0_i32_1 = arith.constant 0 : i32
    return %c0_i32, %c0_i32_0 : i32, i32
  }
  func.func @transform_3(%arg0: i32) -> (i32, i32) {
    %c0_i32 = arith.constant 0 : i32
    %c0_i32_0 = arith.constant 0 : i32
    %c0_i32_1 = arith.constant 0 : i32
    return %c0_i32, %c0_i32_0 : i32, i32
  }
  func.func @transform_4(%arg0: i32) -> (i32, i32) {
    %c0_i32 = arith.constant 0 : i32
    %c0_i32_0 = arith.constant 0 : i32
    %c0_i32_1 = arith.constant 0 : i32
    return %c0_i32, %c0_i32_0 : i32, i32
  }
}

module attributes {stable_mosaic.version = 11 : i64} {
  func.func @_mm_res_kernel(%arg0: i32, %arg1: memref<54x576xbf16, #tpu.memory_space<vmem>>, %arg2: memref<576x64xbf16, #tpu.memory_space<vmem>>, %arg3: memref<1x64xf32, #tpu.memory_space<vmem>>, %arg4: memref<1x64xf32, #tpu.memory_space<vmem>>, %arg5: memref<54x64xf32, #tpu.memory_space<vmem>>, %arg6: memref<54x64xf32, #tpu.memory_space<vmem>>) attributes {dimension_semantics = [#tpu.dimension_semantics<arbitrary>], iteration_bounds = array<i64: 1>, scalar_prefetch = 0 : i64, scratch_operands = 0 : i64, tpu.core_type = #tpu.core_type<tc>, window_params = [{pipeline_mode = #tpu.pipeline_mode<synchronous>, transform_indices = @transform_0, window_bounds = array<i64: 54, 576>}, {pipeline_mode = #tpu.pipeline_mode<synchronous>, transform_indices = @transform_1, window_bounds = array<i64: 576, 64>}, {pipeline_mode = #tpu.pipeline_mode<synchronous>, transform_indices = @transform_2, window_bounds = array<i64: 1, 64>}, {pipeline_mode = #tpu.pipeline_mode<synchronous>, transform_indices = @transform_3, window_bounds = array<i64: 1, 64>}, {pipeline_mode = #tpu.pipeline_mode<synchronous>, transform_indices = @transform_4, window_bounds = array<i64: 54, 64>}, {pipeline_mode = #tpu.pipeline_mode<synchronous>, transform_indices = @transform_5, window_bounds = array<i64: 54, 64>}]} {
    %c0 = arith.constant 0 : index
    %c0_0 = arith.constant 0 : index
    %0 = vector.load %arg1[%c0, %c0_0] : memref<54x576xbf16, #tpu.memory_space<vmem>>, vector<54x576xbf16>
    %c0_1 = arith.constant 0 : index
    %c0_2 = arith.constant 0 : index
    %1 = vector.load %arg2[%c0_1, %c0_2] : memref<576x64xbf16, #tpu.memory_space<vmem>>, vector<576x64xbf16>
    %cst = arith.constant dense<0.000000e+00> : vector<54x64xf32>
    %2 = tpu.matmul %0, %1, %cst {dimension_numbers = #tpu.dot_dimension_numbers<[1], [0], [0], [1], [0, 0, 1, 1], [], []>} : vector<54x576xbf16>, vector<576x64xbf16>, vector<54x64xf32> -> vector<54x64xf32>
    %c0_3 = arith.constant 0 : index
    %c0_4 = arith.constant 0 : index
    %3 = vector.load %arg3[%c0_3, %c0_4] : memref<1x64xf32, #tpu.memory_space<vmem>>, vector<1x64xf32>
    %4 = vector.broadcast %3 : vector<1x64xf32> to vector<54x64xf32>
    %5 = arith.mulf %2, %4 : vector<54x64xf32>
    %c0_5 = arith.constant 0 : index
    %c0_6 = arith.constant 0 : index
    %6 = vector.load %arg4[%c0_5, %c0_6] : memref<1x64xf32, #tpu.memory_space<vmem>>, vector<1x64xf32>
    %7 = vector.broadcast %6 : vector<1x64xf32> to vector<54x64xf32>
    %8 = arith.addf %5, %7 : vector<54x64xf32>
    %c0_7 = arith.constant 0 : index
    %c0_8 = arith.constant 0 : index
    %9 = vector.load %arg5[%c0_7, %c0_8] : memref<54x64xf32, #tpu.memory_space<vmem>>, vector<54x64xf32>
    %10 = arith.addf %8, %9 : vector<54x64xf32>
    %cst_9 = arith.constant 0.000000e+00 : f32
    %11 = vector.broadcast %cst_9 : f32 to vector<54x64xf32>
    %12 = arith.maximumf %10, %11 : vector<54x64xf32>
    %c0_10 = arith.constant 0 : index
    %c0_11 = arith.constant 0 : index
    %13 = vector.load %arg6[%c0_10, %c0_11] : memref<54x64xf32, #tpu.memory_space<vmem>>, vector<54x64xf32>
    tpu.vector_store %arg6[%c0_10, %c0_11], %12 {strides = array<i32>} : memref<54x64xf32, #tpu.memory_space<vmem>>, vector<54x64xf32>,
    return
  }
  func.func @transform_0(%arg0: i32) -> (i32, i32) {
    %c0_i32 = arith.constant 0 : i32
    %c0_i32_0 = arith.constant 0 : i32
    %c0_i32_1 = arith.constant 0 : i32
    return %c0_i32, %c0_i32_0 : i32, i32
  }
  func.func @transform_1(%arg0: i32) -> (i32, i32) {
    %c0_i32 = arith.constant 0 : i32
    %c0_i32_0 = arith.constant 0 : i32
    %c0_i32_1 = arith.constant 0 : i32
    return %c0_i32, %c0_i32_0 : i32, i32
  }
  func.func @transform_2(%arg0: i32) -> (i32, i32) {
    %c0_i32 = arith.constant 0 : i32
    %c0_i32_0 = arith.constant 0 : i32
    %c0_i32_1 = arith.constant 0 : i32
    return %c0_i32, %c0_i32_0 : i32, i32
  }
  func.func @transform_3(%arg0: i32) -> (i32, i32) {
    %c0_i32 = arith.constant 0 : i32
    %c0_i32_0 = arith.constant 0 : i32
    %c0_i32_1 = arith.constant 0 : i32
    return %c0_i32, %c0_i32_0 : i32, i32
  }
  func.func @transform_4(%arg0: i32) -> (i32, i32) {
    %c0_i32 = arith.constant 0 : i32
    %c0_i32_0 = arith.constant 0 : i32
    %c0_i32_1 = arith.constant 0 : i32
    return %c0_i32, %c0_i32_0 : i32, i32
  }
  func.func @transform_5(%arg0: i32) -> (i32, i32) {
    %c0_i32 = arith.constant 0 : i32
    %c0_i32_0 = arith.constant 0 : i32
    %c0_i32_1 = arith.constant 0 : i32
    return %c0_i32, %c0_i32_0 : i32, i32
  }
}

module attributes {stable_mosaic.version = 11 : i64} {
  func.func @_mm_kernel(%arg0: i32, %arg1: memref<24x576xbf16, #tpu.memory_space<vmem>>, %arg2: memref<576x256xbf16, #tpu.memory_space<vmem>>, %arg3: memref<1x256xf32, #tpu.memory_space<vmem>>, %arg4: memref<1x256xf32, #tpu.memory_space<vmem>>, %arg5: memref<24x256xf32, #tpu.memory_space<vmem>>) attributes {dimension_semantics = [#tpu.dimension_semantics<arbitrary>], iteration_bounds = array<i64: 1>, scalar_prefetch = 0 : i64, scratch_operands = 0 : i64, tpu.core_type = #tpu.core_type<tc>, window_params = [{pipeline_mode = #tpu.pipeline_mode<synchronous>, transform_indices = @transform_0, window_bounds = array<i64: 24, 576>}, {pipeline_mode = #tpu.pipeline_mode<synchronous>, transform_indices = @transform_1, window_bounds = array<i64: 576, 256>}, {pipeline_mode = #tpu.pipeline_mode<synchronous>, transform_indices = @transform_2, window_bounds = array<i64: 1, 256>}, {pipeline_mode = #tpu.pipeline_mode<synchronous>, transform_indices = @transform_3, window_bounds = array<i64: 1, 256>}, {pipeline_mode = #tpu.pipeline_mode<synchronous>, transform_indices = @transform_4, window_bounds = array<i64: 24, 256>}]} {
    %c0 = arith.constant 0 : index
    %c0_0 = arith.constant 0 : index
    %0 = vector.load %arg1[%c0, %c0_0] : memref<24x576xbf16, #tpu.memory_space<vmem>>, vector<24x576xbf16>
    %c0_1 = arith.constant 0 : index
    %c0_2 = arith.constant 0 : index
    %1 = vector.load %arg2[%c0_1, %c0_2] : memref<576x256xbf16, #tpu.memory_space<vmem>>, vector<576x256xbf16>
    %cst = arith.constant dense<0.000000e+00> : vector<24x256xf32>
    %2 = tpu.matmul %0, %1, %cst {dimension_numbers = #tpu.dot_dimension_numbers<[1], [0], [0], [1], [0, 0, 1, 1], [], []>} : vector<24x576xbf16>, vector<576x256xbf16>, vector<24x256xf32> -> vector<24x256xf32>
    %c0_3 = arith.constant 0 : index
    %c0_4 = arith.constant 0 : index
    %3 = vector.load %arg3[%c0_3, %c0_4] : memref<1x256xf32, #tpu.memory_space<vmem>>, vector<1x256xf32>
    %4 = vector.broadcast %3 : vector<1x256xf32> to vector<24x256xf32>
    %5 = arith.mulf %2, %4 : vector<24x256xf32>
    %c0_5 = arith.constant 0 : index
    %c0_6 = arith.constant 0 : index
    %6 = vector.load %arg4[%c0_5, %c0_6] : memref<1x256xf32, #tpu.memory_space<vmem>>, vector<1x256xf32>
    %7 = vector.broadcast %6 : vector<1x256xf32> to vector<24x256xf32>
    %8 = arith.addf %5, %7 : vector<24x256xf32>
    %9 = tpu.iota {dimensions = array<i32: 1>} : vector<24x256xi32>
    %c128_i32 = arith.constant 128 : i32
    %10 = vector.broadcast %c128_i32 : i32 to vector<24x256xi32>
    %11 = arith.cmpi slt, %9, %10 : vector<24x256xi32>
    %cst_7 = arith.constant 0.000000e+00 : f32
    %12 = vector.broadcast %cst_7 : f32 to vector<24x256xf32>
    %13 = arith.maximumf %8, %12 : vector<24x256xf32>
    %14 = arith.select %11, %13, %8 : vector<24x256xi1>, vector<24x256xf32>
    %c0_8 = arith.constant 0 : index
    %c0_9 = arith.constant 0 : index
    %15 = vector.load %arg5[%c0_8, %c0_9] : memref<24x256xf32, #tpu.memory_space<vmem>>, vector<24x256xf32>
    tpu.vector_store %arg5[%c0_8, %c0_9], %14 {strides = array<i32>} : memref<24x256xf32, #tpu.memory_space<vmem>>, vector<24x256xf32>,
    return
  }
  func.func @transform_0(%arg0: i32) -> (i32, i32) {
    %c0_i32 = arith.constant 0 : i32
    %c0_i32_0 = arith.constant 0 : i32
    %c0_i32_1 = arith.constant 0 : i32
    return %c0_i32, %c0_i32_0 : i32, i32
  }
  func.func @transform_1(%arg0: i32) -> (i32, i32) {
    %c0_i32 = arith.constant 0 : i32
    %c0_i32_0 = arith.constant 0 : i32
    %c0_i32_1 = arith.constant 0 : i32
    return %c0_i32, %c0_i32_0 : i32, i32
  }
  func.func @transform_2(%arg0: i32) -> (i32, i32) {
    %c0_i32 = arith.constant 0 : i32
    %c0_i32_0 = arith.constant 0 : i32
    %c0_i32_1 = arith.constant 0 : i32
    return %c0_i32, %c0_i32_0 : i32, i32
  }
  func.func @transform_3(%arg0: i32) -> (i32, i32) {
    %c0_i32 = arith.constant 0 : i32
    %c0_i32_0 = arith.constant 0 : i32
    %c0_i32_1 = arith.constant 0 : i32
    return %c0_i32, %c0_i32_0 : i32, i32
  }
  func.func @transform_4(%arg0: i32) -> (i32, i32) {
    %c0_i32 = arith.constant 0 : i32
    %c0_i32_0 = arith.constant 0 : i32
    %c0_i32_1 = arith.constant 0 : i32
    return %c0_i32, %c0_i32_0 : i32, i32
  }
}

module attributes {stable_mosaic.version = 11 : i64} {
  func.func @_mm_res_kernel(%arg0: i32, %arg1: memref<24x1152xbf16, #tpu.memory_space<vmem>>, %arg2: memref<1152x128xbf16, #tpu.memory_space<vmem>>, %arg3: memref<1x128xf32, #tpu.memory_space<vmem>>, %arg4: memref<1x128xf32, #tpu.memory_space<vmem>>, %arg5: memref<24x128xf32, #tpu.memory_space<vmem>>, %arg6: memref<24x128xf32, #tpu.memory_space<vmem>>) attributes {dimension_semantics = [#tpu.dimension_semantics<arbitrary>], iteration_bounds = array<i64: 1>, scalar_prefetch = 0 : i64, scratch_operands = 0 : i64, tpu.core_type = #tpu.core_type<tc>, window_params = [{pipeline_mode = #tpu.pipeline_mode<synchronous>, transform_indices = @transform_0, window_bounds = array<i64: 24, 1152>}, {pipeline_mode = #tpu.pipeline_mode<synchronous>, transform_indices = @transform_1, window_bounds = array<i64: 1152, 128>}, {pipeline_mode = #tpu.pipeline_mode<synchronous>, transform_indices = @transform_2, window_bounds = array<i64: 1, 128>}, {pipeline_mode = #tpu.pipeline_mode<synchronous>, transform_indices = @transform_3, window_bounds = array<i64: 1, 128>}, {pipeline_mode = #tpu.pipeline_mode<synchronous>, transform_indices = @transform_4, window_bounds = array<i64: 24, 128>}, {pipeline_mode = #tpu.pipeline_mode<synchronous>, transform_indices = @transform_5, window_bounds = array<i64: 24, 128>}]} {
    %c0 = arith.constant 0 : index
    %c0_0 = arith.constant 0 : index
    %0 = vector.load %arg1[%c0, %c0_0] : memref<24x1152xbf16, #tpu.memory_space<vmem>>, vector<24x1152xbf16>
    %c0_1 = arith.constant 0 : index
    %c0_2 = arith.constant 0 : index
    %1 = vector.load %arg2[%c0_1, %c0_2] : memref<1152x128xbf16, #tpu.memory_space<vmem>>, vector<1152x128xbf16>
    %cst = arith.constant dense<0.000000e+00> : vector<24x128xf32>
    %2 = tpu.matmul %0, %1, %cst {dimension_numbers = #tpu.dot_dimension_numbers<[1], [0], [0], [1], [0, 0, 1, 1], [], []>} : vector<24x1152xbf16>, vector<1152x128xbf16>, vector<24x128xf32> -> vector<24x128xf32>
    %c0_3 = arith.constant 0 : index
    %c0_4 = arith.constant 0 : index
    %3 = vector.load %arg3[%c0_3, %c0_4] : memref<1x128xf32, #tpu.memory_space<vmem>>, vector<1x128xf32>
    %4 = vector.broadcast %3 : vector<1x128xf32> to vector<24x128xf32>
    %5 = arith.mulf %2, %4 : vector<24x128xf32>
    %c0_5 = arith.constant 0 : index
    %c0_6 = arith.constant 0 : index
    %6 = vector.load %arg4[%c0_5, %c0_6] : memref<1x128xf32, #tpu.memory_space<vmem>>, vector<1x128xf32>
    %7 = vector.broadcast %6 : vector<1x128xf32> to vector<24x128xf32>
    %8 = arith.addf %5, %7 : vector<24x128xf32>
    %c0_7 = arith.constant 0 : index
    %c0_8 = arith.constant 0 : index
    %9 = vector.load %arg5[%c0_7, %c0_8] : memref<24x128xf32, #tpu.memory_space<vmem>>, vector<24x128xf32>
    %10 = arith.addf %8, %9 : vector<24x128xf32>
    %cst_9 = arith.constant 0.000000e+00 : f32
    %11 = vector.broadcast %cst_9 : f32 to vector<24x128xf32>
    %12 = arith.maximumf %10, %11 : vector<24x128xf32>
    %c0_10 = arith.constant 0 : index
    %c0_11 = arith.constant 0 : index
    %13 = vector.load %arg6[%c0_10, %c0_11] : memref<24x128xf32, #tpu.memory_space<vmem>>, vector<24x128xf32>
    tpu.vector_store %arg6[%c0_10, %c0_11], %12 {strides = array<i32>} : memref<24x128xf32, #tpu.memory_space<vmem>>, vector<24x128xf32>,
    return
  }
  func.func @transform_0(%arg0: i32) -> (i32, i32) {
    %c0_i32 = arith.constant 0 : i32
    %c0_i32_0 = arith.constant 0 : i32
    %c0_i32_1 = arith.constant 0 : i32
    return %c0_i32, %c0_i32_0 : i32, i32
  }
  func.func @transform_1(%arg0: i32) -> (i32, i32) {
    %c0_i32 = arith.constant 0 : i32
    %c0_i32_0 = arith.constant 0 : i32
    %c0_i32_1 = arith.constant 0 : i32
    return %c0_i32, %c0_i32_0 : i32, i32
  }
  func.func @transform_2(%arg0: i32) -> (i32, i32) {
    %c0_i32 = arith.constant 0 : i32
    %c0_i32_0 = arith.constant 0 : i32
    %c0_i32_1 = arith.constant 0 : i32
    return %c0_i32, %c0_i32_0 : i32, i32
  }
  func.func @transform_3(%arg0: i32) -> (i32, i32) {
    %c0_i32 = arith.constant 0 : i32
    %c0_i32_0 = arith.constant 0 : i32
    %c0_i32_1 = arith.constant 0 : i32
    return %c0_i32, %c0_i32_0 : i32, i32
  }
  func.func @transform_4(%arg0: i32) -> (i32, i32) {
    %c0_i32 = arith.constant 0 : i32
    %c0_i32_0 = arith.constant 0 : i32
    %c0_i32_1 = arith.constant 0 : i32
    return %c0_i32, %c0_i32_0 : i32, i32
  }
  func.func @transform_5(%arg0: i32) -> (i32, i32) {
    %c0_i32 = arith.constant 0 : i32
    %c0_i32_0 = arith.constant 0 : i32
    %c0_i32_1 = arith.constant 0 : i32
    return %c0_i32, %c0_i32_0 : i32, i32
  }
}

module attributes {stable_mosaic.version = 11 : i64} {
  func.func @_mm_kernel(%arg0: i32, %arg1: memref<24x1152xbf16, #tpu.memory_space<vmem>>, %arg2: memref<1152x128xbf16, #tpu.memory_space<vmem>>, %arg3: memref<1x128xf32, #tpu.memory_space<vmem>>, %arg4: memref<1x128xf32, #tpu.memory_space<vmem>>, %arg5: memref<24x128xf32, #tpu.memory_space<vmem>>) attributes {dimension_semantics = [#tpu.dimension_semantics<arbitrary>], iteration_bounds = array<i64: 1>, scalar_prefetch = 0 : i64, scratch_operands = 0 : i64, tpu.core_type = #tpu.core_type<tc>, window_params = [{pipeline_mode = #tpu.pipeline_mode<synchronous>, transform_indices = @transform_0, window_bounds = array<i64: 24, 1152>}, {pipeline_mode = #tpu.pipeline_mode<synchronous>, transform_indices = @transform_1, window_bounds = array<i64: 1152, 128>}, {pipeline_mode = #tpu.pipeline_mode<synchronous>, transform_indices = @transform_2, window_bounds = array<i64: 1, 128>}, {pipeline_mode = #tpu.pipeline_mode<synchronous>, transform_indices = @transform_3, window_bounds = array<i64: 1, 128>}, {pipeline_mode = #tpu.pipeline_mode<synchronous>, transform_indices = @transform_4, window_bounds = array<i64: 24, 128>}]} {
    %c0 = arith.constant 0 : index
    %c0_0 = arith.constant 0 : index
    %0 = vector.load %arg1[%c0, %c0_0] : memref<24x1152xbf16, #tpu.memory_space<vmem>>, vector<24x1152xbf16>
    %c0_1 = arith.constant 0 : index
    %c0_2 = arith.constant 0 : index
    %1 = vector.load %arg2[%c0_1, %c0_2] : memref<1152x128xbf16, #tpu.memory_space<vmem>>, vector<1152x128xbf16>
    %cst = arith.constant dense<0.000000e+00> : vector<24x128xf32>
    %2 = tpu.matmul %0, %1, %cst {dimension_numbers = #tpu.dot_dimension_numbers<[1], [0], [0], [1], [0, 0, 1, 1], [], []>} : vector<24x1152xbf16>, vector<1152x128xbf16>, vector<24x128xf32> -> vector<24x128xf32>
    %c0_3 = arith.constant 0 : index
    %c0_4 = arith.constant 0 : index
    %3 = vector.load %arg3[%c0_3, %c0_4] : memref<1x128xf32, #tpu.memory_space<vmem>>, vector<1x128xf32>
    %4 = vector.broadcast %3 : vector<1x128xf32> to vector<24x128xf32>
    %5 = arith.mulf %2, %4 : vector<24x128xf32>
    %c0_5 = arith.constant 0 : index
    %c0_6 = arith.constant 0 : index
    %6 = vector.load %arg4[%c0_5, %c0_6] : memref<1x128xf32, #tpu.memory_space<vmem>>, vector<1x128xf32>
    %7 = vector.broadcast %6 : vector<1x128xf32> to vector<24x128xf32>
    %8 = arith.addf %5, %7 : vector<24x128xf32>
    %cst_7 = arith.constant 0.000000e+00 : f32
    %9 = vector.broadcast %cst_7 : f32 to vector<24x128xf32>
    %10 = arith.maximumf %8, %9 : vector<24x128xf32>
    %c0_8 = arith.constant 0 : index
    %c0_9 = arith.constant 0 : index
    %11 = vector.load %arg5[%c0_8, %c0_9] : memref<24x128xf32, #tpu.memory_space<vmem>>, vector<24x128xf32>
    tpu.vector_store %arg5[%c0_8, %c0_9], %10 {strides = array<i32>} : memref<24x128xf32, #tpu.memory_space<vmem>>, vector<24x128xf32>,
    return
  }
  func.func @transform_0(%arg0: i32) -> (i32, i32) {
    %c0_i32 = arith.constant 0 : i32
    %c0_i32_0 = arith.constant 0 : i32
    %c0_i32_1 = arith.constant 0 : i32
    return %c0_i32, %c0_i32_0 : i32, i32
  }
  func.func @transform_1(%arg0: i32) -> (i32, i32) {
    %c0_i32 = arith.constant 0 : i32
    %c0_i32_0 = arith.constant 0 : i32
    %c0_i32_1 = arith.constant 0 : i32
    return %c0_i32, %c0_i32_0 : i32, i32
  }
  func.func @transform_2(%arg0: i32) -> (i32, i32) {
    %c0_i32 = arith.constant 0 : i32
    %c0_i32_0 = arith.constant 0 : i32
    %c0_i32_1 = arith.constant 0 : i32
    return %c0_i32, %c0_i32_0 : i32, i32
  }
  func.func @transform_3(%arg0: i32) -> (i32, i32) {
    %c0_i32 = arith.constant 0 : i32
    %c0_i32_0 = arith.constant 0 : i32
    %c0_i32_1 = arith.constant 0 : i32
    return %c0_i32, %c0_i32_0 : i32, i32
  }
  func.func @transform_4(%arg0: i32) -> (i32, i32) {
    %c0_i32 = arith.constant 0 : i32
    %c0_i32_0 = arith.constant 0 : i32
    %c0_i32_1 = arith.constant 0 : i32
    return %c0_i32, %c0_i32_0 : i32, i32
  }
}

</mosaic_0001>

<llo_original>
// kernel: cnn_forward.9
$region0: #{cnn_forward.9}
  #allocation0 [shape = 'u32[]', space=smem, size = 0x4, offset = 0x4, fixed_abs, tag = 'smem constant byte address 0x4 - core index']
  #allocation1 [shape = 'u32[144,128]{1,0:T(1,128)}', space=vmem, size = 0x12000, scoped, tag = 'internal scratch']
  %s0 = inlined_call_operand.vmem [shape: bf16[150,98], index: 0, kind: input, shape index: {}]
  %s1 = inlined_call_operand.vmem [shape: bf16[98,64], index: 1, kind: input, shape index: {}]
  %s2 = inlined_call_operand.vmem [shape: f32[1,64], index: 2, kind: input, shape index: {}]
  %s3 = inlined_call_operand.vmem [shape: f32[1,64], index: 3, kind: input, shape index: {}]
  %s4 = inlined_call_operand.vmem [shape: f32[150,64], index: 4, kind: output, shape index: {}]
  %s5 = sld [smem:[#allocation0]]
  $region26: #{cnn_forward.9} parent=0
    _
  %s7 = ssub.s32 1, %s5
  %s8 = scalar_select 0, %s7, %s5
  // Predicated region
  $region2: #{cnn_forward.9} parent=0 // pred_check
    _
  $region3: #{cnn_forward.9} parent=0 // pred_check_branch
    %10 = sbr.rel (0) target = $region5
  $region4: #{cnn_forward.9} parent=0 // pred_region
    _
  $region5: #{cnn_forward.9} parent=0 // pred_fallthru
    _
  // Predicated region
  $region6: #{cnn_forward.9} parent=0 // pred_check
    _
  $region7: #{cnn_forward.9} parent=0 // pred_check_branch
    %12 = sbr.rel (0) target = $region9
  $region8: #{cnn_forward.9} parent=0 // pred_region
    _
  $region9: #{cnn_forward.9} parent=0 // pred_fallthru
    _
  // Predicated region
  $region10: #{cnn_forward.9} parent=0 // pred_check
    _
  $region11: #{cnn_forward.9} parent=0 // pred_check_branch
    %14 = sbr.rel (0) target = $region13
  $region12: #{cnn_forward.9} parent=0 // pred_region
    _
  $region13: #{cnn_forward.9} parent=0 // pred_fallthru
    _
  // Predicated region
  $region14: #{cnn_forward.9} parent=0 // pred_check
    _
  $region15: #{cnn_forward.9} parent=0 // pred_check_branch
    %16 = sbr.rel (0) target = $region17
  $region16: #{cnn_forward.9} parent=0 // pred_region
    _
  $region17: #{cnn_forward.9} parent=0 // pred_fallthru
    _
  %v18 = vld [vmem:[%s0] sm:$0xf]
  %v19 = vld [vmem:[%s0 + $0x4] sm:$0xf]
  %v20 = vld [vmem:[%s0 + $0x8] sm:$0xf]
  %v21 = vld [vmem:[%s0 + $0xc] sm:$0xf]
  %v22 = vld [vmem:[%s0 + $0x10] sm:$0xf]
  %v23 = vld [vmem:[%s0 + $0x14] sm:$0xf]
  %v24 = vld [vmem:[%s0 + $0x18] sm:$0xf]
  %v25 = vld [vmem:[%s0 + $0x1c] sm:$0xf]
  %v26 = vld [vmem:[%s0 + $0x20] sm:$0xf]
  %v27 = vld [vmem:[%s0 + $0x24] sm:$0xf]
  %v28 = vld [vmem:[%s0 + $0x28] sm:$0xf]
  %v29 = vld [vmem:[%s0 + $0x2c] sm:$0xf]
  %v30 = vld [vmem:[%s0 + $0x30] sm:$0xf]
  %v31 = vld [vmem:[%s0 + $0x34] sm:$0xf]
  %v32 = vld [vmem:[%s0 + $0x38] sm:$0xf]
  %v33 = vld [vmem:[%s0 + $0x3c] sm:$0xf]
  %v34 = vld [vmem:[%s0 + $0x40] sm:$0xf]
  %v35 = vld [vmem:[%s0 + $0x44] sm:$0xf]
  %v36 = vld [vmem:[%s0 + $0x48] sm:$0x7]
  %v37 = vld [vmem:[%s1] sm:$0xf]
  %v38 = vld [vmem:[%s1 + $0x4] sm:$0xf]
  %v39 = vld [vmem:[%s1 + $0x8] sm:$0xf]
  %v40 = vld [vmem:[%s1 + $0xc] sm:$0xf]
  %v41 = vld [vmem:[%s1 + $0x10] sm:$0xf]
  %v42 = vld [vmem:[%s1 + $0x14] sm:$0xf]
  %v43 = vld [vmem:[%s1 + $0x18] sm:$0xf]
  %v44 = vld [vmem:[%s1 + $0x1c] sm:$0xf]
  %v45 = vld [vmem:[%s1 + $0x20] sm:$0xf]
  %v46 = vld [vmem:[%s1 + $0x24] sm:$0xf]
  %v47 = vld [vmem:[%s1 + $0x28] sm:$0xf]
  %v48 = vld [vmem:[%s1 + $0x2c] sm:$0xf]
  %v49 = vld [vmem:[%s1 + $0x30] sm:$0x1]
  %v69 = vunpack.c.l.b16 %v18
  %v70 = vunpack.c.l.b16 %v19
  %v71 = vunpack.c.l.b16 %v20
  %v72 = vunpack.c.l.b16 %v21
  %v73 = vunpack.c.l.b16 %v22
  %v74 = vunpack.c.l.b16 %v23
  %v75 = vunpack.c.l.b16 %v24
  %v76 = vunpack.c.l.b16 %v25
  %v77 = vunpack.c.l.b16 %v26
  %v78 = vunpack.c.l.b16 %v27
  %v79 = vunpack.c.l.b16 %v28
  %v80 = vunpack.c.l.b16 %v29
  %v81 = vunpack.c.l.b16 %v30
  %v82 = vunpack.c.l.b16 %v31
  %v83 = vunpack.c.l.b16 %v32
  %v84 = vunpack.c.l.b16 %v33
  %v85 = vunpack.c.l.b16 %v34
  %v86 = vunpack.c.l.b16 %v35
  %v87 = vunpack.c.l.b16 %v36
  %v88 = vpack.c.b16 %v70, %v69
  %v89 = vpack.c.b16 %v72, %v71
  %v90 = vpack.c.b16 %v74, %v73
  %v91 = vpack.c.b16 %v76, %v75
  %v92 = vpack.c.b16 %v78, %v77
  %v93 = vpack.c.b16 %v80, %v79
  %v94 = vpack.c.b16 %v82, %v81
  %v95 = vpack.c.b16 %v84, %v83
  %v96 = vpack.c.b16 %v86, %v85
  %v97 = vpack.c.b16 %v87, %v87
  %v111 = vunpack.c.l.b16 %v37
  %v112 = vunpack.c.l.b16 %v38
  %v113 = vunpack.c.l.b16 %v39
  %v114 = vunpack.c.l.b16 %v40
  %v115 = vunpack.c.l.b16 %v41
  %v116 = vunpack.c.l.b16 %v42
  %v117 = vunpack.c.l.b16 %v43
  %v118 = vunpack.c.l.b16 %v44
  %v119 = vunpack.c.l.b16 %v45
  %v120 = vunpack.c.l.b16 %v46
  %v121 = vunpack.c.l.b16 %v47
  %v122 = vunpack.c.l.b16 %v48
  %v123 = vunpack.c.l.b16 %v49
  %v124 = vpack.c.b16 %v112, %v111
  %v125 = vpack.c.b16 %v114, %v113
  %v126 = vpack.c.b16 %v116, %v115
  %v127 = vpack.c.b16 %v118, %v117
  %v128 = vpack.c.b16 %v120, %v119
  %v129 = vpack.c.b16 %v122, %v121
  %v130 = vpack.c.b16 %v123, %v123
  %vm137 = vcmask 801792
  %v139 = vsel %vm137, %v88, 0
  %v142 = vsel %vm137, %v89, 0
  %v145 = vsel %vm137, %v90, 0
  %v148 = vsel %vm137, %v91, 0
  %v151 = vsel %vm137, %v92, 0
  %v154 = vsel %vm137, %v93, 0
  %v157 = vsel %vm137, %v94, 0
  %v160 = vsel %vm137, %v95, 0
  %v163 = vsel %vm137, %v96, 0
  %v166 = vsel %vm137, %v97, 0
  %vm168 = vcmask 1040384
  %v170 = vsel %vm168, %v130, 0
  %172 = vmatprep.subr.bf16.mxu0 0
  %173 = vmatpush1.bf16.msra.mxu0 0
  %174 = vmatprep.subr.bf16.mxu0 0
  %175 = vmatpush1.bf16.msra.mxu0 %v170
  %176 = vmatprep.subr.bf16.mxu0 0
  %177 = vmatpush1.bf16.msra.mxu0 %v129
  %178 = vmatprep.subr.bf16.mxu0 0
  %179 = vmatpush1.bf16.msra.mxu0 %v128
  %180 = vmatprep.subr.bf16.mxu0 0
  %181 = vmatpush1.bf16.msra.mxu0 %v127
  %182 = vmatprep.subr.bf16.mxu0 0
  %183 = vmatpush1.bf16.msra.mxu0 %v126
  %184 = vmatprep.subr.bf16.mxu0 0
  %185 = vmatpush1.bf16.msra.mxu0 %v125
  %186 = vmatprep.subr.bf16.mxu0 0
  %187 = vmatpush1.bf16.msra.mxu0 %v124
  %188 = vmatprep.subr.bf16.mxu0 0
  %189 = vmatpush2.bf16.msra.mxu0 0
  %190 = vmatprep.subr.bf16.mxu0 0
  %191 = vmatpush2.bf16.msra.mxu0 0
  %192 = vmatprep.subr.bf16.mxu0 0
  %193 = vmatpush2.bf16.msra.mxu0 0
  %194 = vmatprep.subr.bf16.mxu0 0
  %195 = vmatpush2.bf16.msra.mxu0 0
  %196 = vmatprep.subr.bf16.mxu0 0
  %197 = vmatpush2.bf16.msra.mxu0 0
  %198 = vmatprep.subr.bf16.mxu0 0
  %199 = vmatpush2.bf16.msra.mxu0 0
  %200 = vmatprep.subr.bf16.mxu0 0
  %201 = vmatpush2.bf16.msra.mxu0 0
  %202 = vmatprep.subr.bf16.mxu0 0
  %203 = vmatpush2.bf16.msra.mxu0 0
  %204 = vmatprep.mubr.bf16.mxu0 0
  %205 = vmatmul.mubr.bf16.gmra.mxu0 %v139
  %v206 = vpop.f32.mrf.mxu0
  %v207 = vadd.f32 0.0, %v206
  %v208 = vpop.f32.mrf.mxu0
  %v209 = vpop.f32.mrf.mxu0
  %v210 = vadd.f32 0.0, %v209
  %v211 = vpop.f32.mrf.mxu0
  %212 = vmatprep.mubr.bf16.mxu0 0
  %213 = vmatmul.mubr.bf16.gmra.mxu0 %v142
  %v214 = vpop.f32.mrf.mxu0
  %v215 = vadd.f32 0.0, %v214
  %v216 = vpop.f32.mrf.mxu0
  %v217 = vpop.f32.mrf.mxu0
  %v218 = vadd.f32 0.0, %v217
  %v219 = vpop.f32.mrf.mxu0
  %220 = vmatprep.mubr.bf16.mxu0 0
  %221 = vmatmul.mubr.bf16.gmra.mxu0 %v145
  %v222 = vpop.f32.mrf.mxu0
  %v223 = vadd.f32 0.0, %v222
  %v224 = vpop.f32.mrf.mxu0
  %v225 = vpop.f32.mrf.mxu0
  %v226 = vadd.f32 0.0, %v225
  %v227 = vpop.f32.mrf.mxu0
  %228 = vmatprep.mubr.bf16.mxu0 0
  %229 = vmatmul.mubr.bf16.gmra.mxu0 %v148
  %v230 = vpop.f32.mrf.mxu0
  %v231 = vadd.f32 0.0, %v230
  %v232 = vpop.f32.mrf.mxu0
  %v233 = vpop.f32.mrf.mxu0
  %v234 = vadd.f32 0.0, %v233
  %v235 = vpop.f32.mrf.mxu0
  %236 = vmatprep.mubr.bf16.mxu0 0
  %237 = vmatmul.mubr.bf16.gmra.mxu0 %v151
  %v238 = vpop.f32.mrf.mxu0
  %v239 = vadd.f32 0.0, %v238
  %v240 = vpop.f32.mrf.mxu0
  %v241 = vpop.f32.mrf.mxu0
  %v242 = vadd.f32 0.0, %v241
  %v243 = vpop.f32.mrf.mxu0
  %244 = vmatprep.mubr.bf16.mxu0 0
  %245 = vmatmul.mubr.bf16.gmra.mxu0 %v154
  %v246 = vpop.f32.mrf.mxu0
  %v247 = vadd.f32 0.0, %v246
  %v248 = vpop.f32.mrf.mxu0
  %v249 = vpop.f32.mrf.mxu0
  %v250 = vadd.f32 0.0, %v249
  %v251 = vpop.f32.mrf.mxu0
  %252 = vmatprep.mubr.bf16.mxu0 0
  %253 = vmatmul.mubr.bf16.gmra.mxu0 %v157
  %v254 = vpop.f32.mrf.mxu0
  %v255 = vadd.f32 0.0, %v254
  %v256 = vpop.f32.mrf.mxu0
  %v257 = vpop.f32.mrf.mxu0
  %v258 = vadd.f32 0.0, %v257
  %v259 = vpop.f32.mrf.mxu0
  %260 = vmatprep.mubr.bf16.mxu0 0
  %261 = vmatmul.mubr.bf16.gmra.mxu0 %v160
  %v262 = vpop.f32.mrf.mxu0
  %v263 = vadd.f32 0.0, %v262
  %v264 = vpop.f32.mrf.mxu0
  %v265 = vpop.f32.mrf.mxu0
  %v266 = vadd.f32 0.0, %v265
  %v267 = vpop.f32.mrf.mxu0
  %268 = vmatprep.mubr.bf16.mxu0 0
  %269 = vmatmul.mubr.bf16.gmra.mxu0 %v163
  %v270 = vpop.f32.mrf.mxu0
  %v271 = vadd.f32 0.0, %v270
  %v272 = vpop.f32.mrf.mxu0
  %v273 = vpop.f32.mrf.mxu0
  %v274 = vadd.f32 0.0, %v273
  %v275 = vpop.f32.mrf.mxu0
  %276 = vmatprep.mubr.bf16.mxu0 0
  %277 = vmatmul.mubr.bf16.gmra.mxu0 %v166
  %v278 = vpop.f32.mrf.mxu0
  %v279 = vadd.f32 0.0, %v278
  %v280 = vpop.f32.mrf.mxu0
  %v281 = vpop.f32.mrf.mxu0
  %v282 = vpop.f32.mrf.mxu0
  %283 = vdwg.mxu0
  %v284 = vld [vmem:[%s2] sm:$0x1]
  %v286 = vlaneseq
  %v287 = vshrl.u32 %v286, 7
  %v288 = vsub.s32 0, %v287
  %v289 = vrot.slane %v284, %v288
  %v291 = vmul.f32 %v207, %v289
  %v292 = vmul.f32 %v210, %v289
  %v293 = vmul.f32 %v215, %v289
  %v294 = vmul.f32 %v218, %v289
  %v295 = vmul.f32 %v223, %v289
  %v296 = vmul.f32 %v226, %v289
  %v297 = vmul.f32 %v231, %v289
  %v298 = vmul.f32 %v234, %v289
  %v299 = vmul.f32 %v239, %v289
  %v300 = vmul.f32 %v242, %v289
  %v301 = vmul.f32 %v247, %v289
  %v302 = vmul.f32 %v250, %v289
  %v303 = vmul.f32 %v255, %v289
  %v304 = vmul.f32 %v258, %v289
  %v305 = vmul.f32 %v263, %v289
  %v306 = vmul.f32 %v266, %v289
  %v307 = vmul.f32 %v271, %v289
  %v308 = vmul.f32 %v274, %v289
  %v309 = vmul.f32 %v279, %v289
  %v310 = vld [vmem:[%s3] sm:$0x1]
  %v312 = vlaneseq
  %v313 = vshrl.u32 %v312, 7
  %v314 = vsub.s32 0, %v313
  %v315 = vrot.slane %v310, %v314
  %v317 = vadd.f32 %v291, %v315
  %v318 = vadd.f32 %v292, %v315
  %v319 = vadd.f32 %v293, %v315
  %v320 = vadd.f32 %v294, %v315
  %v321 = vadd.f32 %v295, %v315
  %v322 = vadd.f32 %v296, %v315
  %v323 = vadd.f32 %v297, %v315
  %v324 = vadd.f32 %v298, %v315
  %v325 = vadd.f32 %v299, %v315
  %v326 = vadd.f32 %v300, %v315
  %v327 = vadd.f32 %v301, %v315
  %v328 = vadd.f32 %v302, %v315
  %v329 = vadd.f32 %v303, %v315
  %v330 = vadd.f32 %v304, %v315
  %v331 = vadd.f32 %v305, %v315
  %v332 = vadd.f32 %v306, %v315
  %v333 = vadd.f32 %v307, %v315
  %v334 = vadd.f32 %v308, %v315
  %v335 = vadd.f32 %v309, %v315
  %v336 = vmax.f32 %v317, 0.0
  %v337 = vmax.f32 %v318, 0.0
  %v338 = vmax.f32 %v319, 0.0
  %v339 = vmax.f32 %v320, 0.0
  %v340 = vmax.f32 %v321, 0.0
  %v341 = vmax.f32 %v322, 0.0
  %v342 = vmax.f32 %v323, 0.0
  %v343 = vmax.f32 %v324, 0.0
  %v344 = vmax.f32 %v325, 0.0
  %v345 = vmax.f32 %v326, 0.0
  %v346 = vmax.f32 %v327, 0.0
  %v347 = vmax.f32 %v328, 0.0
  %v348 = vmax.f32 %v329, 0.0
  %v349 = vmax.f32 %v330, 0.0
  %v350 = vmax.f32 %v331, 0.0
  %v351 = vmax.f32 %v332, 0.0
  %v352 = vmax.f32 %v333, 0.0
  %v353 = vmax.f32 %v334, 0.0
  %v354 = vmax.f32 %v335, 0.0
  %vm355 = vcmask 523264
  %356 = vst.msk [vmem:[%s4] sm:$0xff] %vm355, %v336
  %357 = vst.msk [vmem:[%s4 + $0x8] sm:$0xff] %vm355, %v337
  %358 = vst.msk [vmem:[%s4 + $0x10] sm:$0xff] %vm355, %v338
  %359 = vst.msk [vmem:[%s4 + $0x18] sm:$0xff] %vm355, %v339
  %360 = vst.msk [vmem:[%s4 + $0x20] sm:$0xff] %vm355, %v340
  %361 = vst.msk [vmem:[%s4 + $0x28] sm:$0xff] %vm355, %v341
  %362 = vst.msk [vmem:[%s4 + $0x30] sm:$0xff] %vm355, %v342
  %363 = vst.msk [vmem:[%s4 + $0x38] sm:$0xff] %vm355, %v343
  %364 = vst.msk [vmem:[%s4 + $0x40] sm:$0xff] %vm355, %v344
  %365 = vst.msk [vmem:[%s4 + $0x48] sm:$0xff] %vm355, %v345
  %366 = vst.msk [vmem:[%s4 + $0x50] sm:$0xff] %vm355, %v346
  %367 = vst.msk [vmem:[%s4 + $0x58] sm:$0xff] %vm355, %v347
  %368 = vst.msk [vmem:[%s4 + $0x60] sm:$0xff] %vm355, %v348
  %369 = vst.msk [vmem:[%s4 + $0x68] sm:$0xff] %vm355, %v349
  %370 = vst.msk [vmem:[%s4 + $0x70] sm:$0xff] %vm355, %v350
  %371 = vst.msk [vmem:[%s4 + $0x78] sm:$0xff] %vm355, %v351
  %372 = vst.msk [vmem:[%s4 + $0x80] sm:$0xff] %vm355, %v352
  %373 = vst.msk [vmem:[%s4 + $0x88] sm:$0xff] %vm355, %v353
  %vm374 = vcmask 521216
  %375 = vst.msk [vmem:[%s4 + $0x90] sm:$0x3f] %vm374, %v354
  // Predicated region
  $region18: #{cnn_forward.9} parent=0 // pred_check
    _
  $region19: #{cnn_forward.9} parent=0 // pred_check_branch
    %377 = sbr.rel (0) target = $region21
  $region20: #{cnn_forward.9} parent=0 // pred_region
    _
  $region21: #{cnn_forward.9} parent=0 // pred_fallthru
    _
  // Predicated region
  $region22: #{cnn_forward.9} parent=0 // pred_check
    _
  $region23: #{cnn_forward.9} parent=0 // pred_check_branch
    %379 = sbr.rel (0) target = $region25
  $region24: #{cnn_forward.9} parent=0 // pred_region
    _
  $region25: #{cnn_forward.9} parent=0 // pred_fallthru
    _

// kernel: cnn_forward.10
$region0: #{cnn_forward.10}
  #allocation0 [shape = 'u32[]', space=smem, size = 0x4, offset = 0x4, fixed_abs, tag = 'smem constant byte address 0x4 - core index']
  #allocation1 [shape = 'u32[144,128]{1,0:T(1,128)}', space=vmem, size = 0x12000, scoped, tag = 'internal scratch']
  %s0 = inlined_call_operand.vmem [shape: bf16[54,576], index: 0, kind: input, shape index: {}]
  %s1 = inlined_call_operand.vmem [shape: bf16[576,64], index: 1, kind: input, shape index: {}]
  %s2 = inlined_call_operand.vmem [shape: f32[1,64], index: 2, kind: input, shape index: {}]
  %s3 = inlined_call_operand.vmem [shape: f32[1,64], index: 3, kind: input, shape index: {}]
  %s4 = inlined_call_operand.vmem [shape: f32[54,64], index: 4, kind: output, shape index: {}]
  %s5 = sld [smem:[#allocation0]]
  $region26: #{cnn_forward.10} parent=0
    _
  %s7 = ssub.s32 1, %s5
  %s8 = scalar_select 0, %s7, %s5
  // Predicated region
  $region2: #{cnn_forward.10} parent=0 // pred_check
    _
  $region3: #{cnn_forward.10} parent=0 // pred_check_branch
    %10 = sbr.rel (0) target = $region5
  $region4: #{cnn_forward.10} parent=0 // pred_region
    _
  $region5: #{cnn_forward.10} parent=0 // pred_fallthru
    _
  // Predicated region
  $region6: #{cnn_forward.10} parent=0 // pred_check
    _
  $region7: #{cnn_forward.10} parent=0 // pred_check_branch
    %12 = sbr.rel (0) target = $region9
  $region8: #{cnn_forward.10} parent=0 // pred_region
    _
  $region9: #{cnn_forward.10} parent=0 // pred_fallthru
    _
  // Predicated region
  $region10: #{cnn_forward.10} parent=0 // pred_check
    _
  $region11: #{cnn_forward.10} parent=0 // pred_check_branch
    %14 = sbr.rel (0) target = $region13
  $region12: #{cnn_forward.10} parent=0 // pred_region
    _
  $region13: #{cnn_forward.10} parent=0 // pred_fallthru
    _
  // Predicated region
  $region14: #{cnn_forward.10} parent=0 // pred_check
    _
  $region15: #{cnn_forward.10} parent=0 // pred_check_branch
    %16 = sbr.rel (0) target = $region17
  $region16: #{cnn_forward.10} parent=0 // pred_region
    _
  $region17: #{cnn_forward.10} parent=0 // pred_fallthru
    _
  %v18 = vld [vmem:[%s0] sm:$0xff]
  %v19 = vld [vmem:[%s0 + $0x8] sm:$0xff]
  %v20 = vld [vmem:[%s0 + $0x10] sm:$0xf]
  %v21 = vld [vmem:[%s0 + $0x14] sm:$0xff]
  %v22 = vld [vmem:[%s0 + $0x1c] sm:$0xff]
  %v23 = vld [vmem:[%s0 + $0x24] sm:$0xf]
  %v24 = vld [vmem:[%s0 + $0x28] sm:$0xff]
  %v25 = vld [vmem:[%s0 + $0x30] sm:$0xff]
  %v26 = vld [vmem:[%s0 + $0x38] sm:$0xf]
  %v27 = vld [vmem:[%s0 + $0x3c] sm:$0xff]
  %v28 = vld [vmem:[%s0 + $0x44] sm:$0xff]
  %v29 = vld [vmem:[%s0 + $0x4c] sm:$0xf]
  %v30 = vld [vmem:[%s0 + $0x50] sm:$0xff]
  %v31 = vld [vmem:[%s0 + $0x58] sm:$0xff]
  %v32 = vld [vmem:[%s0 + $0x60] sm:$0xf]
  %v33 = vld [vmem:[%s0 + $0x64] sm:$0xff]
  %v34 = vld [vmem:[%s0 + $0x6c] sm:$0xff]
  %v35 = vld [vmem:[%s0 + $0x74] sm:$0xf]
  %v36 = vld [vmem:[%s0 + $0x78] sm:$0x77]
  %v37 = vld [vmem:[%s0 + $0x80] sm:$0x77]
  %v38 = vld [vmem:[%s0 + $0x88] sm:$0x7]
  %v39 = vld [vmem:[%s1] sm:$0xf]
  %v40 = vld [vmem:[%s1 + $0x4] sm:$0xf]
  %v41 = vld [vmem:[%s1 + $0x8] sm:$0xf]
  %v42 = vld [vmem:[%s1 + $0xc] sm:$0xf]
  %v43 = vld [vmem:[%s1 + $0x10] sm:$0xf]
  %v44 = vld [vmem:[%s1 + $0x14] sm:$0xf]
  %v45 = vld [vmem:[%s1 + $0x18] sm:$0xf]
  %v46 = vld [vmem:[%s1 + $0x1c] sm:$0xf]
  %v47 = vld [vmem:[%s1 + $0x20] sm:$0xf]
  %v48 = vld [vmem:[%s1 + $0x24] sm:$0xf]
  %v49 = vld [vmem:[%s1 + $0x28] sm:$0xf]
  %v50 = vld [vmem:[%s1 + $0x2c] sm:$0xf]
  %v51 = vld [vmem:[%s1 + $0x30] sm:$0xf]
  %v52 = vld [vmem:[%s1 + $0x34] sm:$0xf]
  %v53 = vld [vmem:[%s1 + $0x38] sm:$0xf]
  %v54 = vld [vmem:[%s1 + $0x3c] sm:$0xf]
  %v55 = vld [vmem:[%s1 + $0x40] sm:$0xf]
  %v56 = vld [vmem:[%s1 + $0x44] sm:$0xf]
  %v57 = vld [vmem:[%s1 + $0x48] sm:$0xf]
  %v58 = vld [vmem:[%s1 + $0x4c] sm:$0xf]
  %v59 = vld [vmem:[%s1 + $0x50] sm:$0xf]
  %v60 = vld [vmem:[%s1 + $0x54] sm:$0xf]
  %v61 = vld [vmem:[%s1 + $0x58] sm:$0xf]
  %v62 = vld [vmem:[%s1 + $0x5c] sm:$0xf]
  %v63 = vld [vmem:[%s1 + $0x60] sm:$0xf]
  %v64 = vld [vmem:[%s1 + $0x64] sm:$0xf]
  %v65 = vld [vmem:[%s1 + $0x68] sm:$0xf]
  %v66 = vld [vmem:[%s1 + $0x6c] sm:$0xf]
  %v67 = vld [vmem:[%s1 + $0x70] sm:$0xf]
  %v68 = vld [vmem:[%s1 + $0x74] sm:$0xf]
  %v69 = vld [vmem:[%s1 + $0x78] sm:$0xf]
  %v70 = vld [vmem:[%s1 + $0x7c] sm:$0xf]
  %v71 = vld [vmem:[%s1 + $0x80] sm:$0xf]
  %v72 = vld [vmem:[%s1 + $0x84] sm:$0xf]
  %v73 = vld [vmem:[%s1 + $0x88] sm:$0xf]
  %v74 = vld [vmem:[%s1 + $0x8c] sm:$0xf]
  %v75 = vld [vmem:[%s1 + $0x90] sm:$0xf]
  %v76 = vld [vmem:[%s1 + $0x94] sm:$0xf]
  %v77 = vld [vmem:[%s1 + $0x98] sm:$0xf]
  %v78 = vld [vmem:[%s1 + $0x9c] sm:$0xf]
  %v79 = vld [vmem:[%s1 + $0xa0] sm:$0xf]
  %v80 = vld [vmem:[%s1 + $0xa4] sm:$0xf]
  %v81 = vld [vmem:[%s1 + $0xa8] sm:$0xf]
  %v82 = vld [vmem:[%s1 + $0xac] sm:$0xf]
  %v83 = vld [vmem:[%s1 + $0xb0] sm:$0xf]
  %v84 = vld [vmem:[%s1 + $0xb4] sm:$0xf]
  %v85 = vld [vmem:[%s1 + $0xb8] sm:$0xf]
  %v86 = vld [vmem:[%s1 + $0xbc] sm:$0xf]
  %v87 = vld [vmem:[%s1 + $0xc0] sm:$0xf]
  %v88 = vld [vmem:[%s1 + $0xc4] sm:$0xf]
  %v89 = vld [vmem:[%s1 + $0xc8] sm:$0xf]
  %v90 = vld [vmem:[%s1 + $0xcc] sm:$0xf]
  %v91 = vld [vmem:[%s1 + $0xd0] sm:$0xf]
  %v92 = vld [vmem:[%s1 + $0xd4] sm:$0xf]
  %v93 = vld [vmem:[%s1 + $0xd8] sm:$0xf]
  %v94 = vld [vmem:[%s1 + $0xdc] sm:$0xf]
  %v95 = vld [vmem:[%s1 + $0xe0] sm:$0xf]
  %v96 = vld [vmem:[%s1 + $0xe4] sm:$0xf]
  %v97 = vld [vmem:[%s1 + $0xe8] sm:$0xf]
  %v98 = vld [vmem:[%s1 + $0xec] sm:$0xf]
  %v99 = vld [vmem:[%s1 + $0xf0] sm:$0xf]
  %v100 = vld [vmem:[%s1 + $0xf4] sm:$0xf]
  %v101 = vld [vmem:[%s1 + $0xf8] sm:$0xf]
  %v102 = vld [vmem:[%s1 + $0xfc] sm:$0xf]
  %v103 = vld [vmem:[%s1 + $0x100] sm:$0xf]
  %v104 = vld [vmem:[%s1 + $0x104] sm:$0xf]
  %v105 = vld [vmem:[%s1 + $0x108] sm:$0xf]
  %v106 = vld [vmem:[%s1 + $0x10c] sm:$0xf]
  %v107 = vld [vmem:[%s1 + $0x110] sm:$0xf]
  %v108 = vld [vmem:[%s1 + $0x114] sm:$0xf]
  %v109 = vld [vmem:[%s1 + $0x118] sm:$0xf]
  %v110 = vld [vmem:[%s1 + $0x11c] sm:$0xf]
  %v132 = vunpack.c.l.b16 %v18
  %v133 = vunpack.c.h.b16 %v18
  %v134 = vunpack.c.l.b16 %v19
  %v135 = vunpack.c.h.b16 %v19
  %v136 = vunpack.c.l.b16 %v20
  %v137 = vunpack.c.l.b16 %v21
  %v138 = vunpack.c.h.b16 %v21
  %v139 = vunpack.c.l.b16 %v22
  %v140 = vunpack.c.h.b16 %v22
  %v141 = vunpack.c.l.b16 %v23
  %v142 = vunpack.c.l.b16 %v24
  %v143 = vunpack.c.h.b16 %v24
  %v144 = vunpack.c.l.b16 %v25
  %v145 = vunpack.c.h.b16 %v25
  %v146 = vunpack.c.l.b16 %v26
  %v147 = vunpack.c.l.b16 %v27
  %v148 = vunpack.c.h.b16 %v27
  %v149 = vunpack.c.l.b16 %v28
  %v150 = vunpack.c.h.b16 %v28
  %v151 = vunpack.c.l.b16 %v29
  %v152 = vunpack.c.l.b16 %v30
  %v153 = vunpack.c.h.b16 %v30
  %v154 = vunpack.c.l.b16 %v31
  %v155 = vunpack.c.h.b16 %v31
  %v156 = vunpack.c.l.b16 %v32
  %v157 = vunpack.c.l.b16 %v33
  %v158 = vunpack.c.h.b16 %v33
  %v159 = vunpack.c.l.b16 %v34
  %v160 = vunpack.c.h.b16 %v34
  %v161 = vunpack.c.l.b16 %v35
  %v162 = vunpack.c.l.b16 %v36
  %v163 = vunpack.c.h.b16 %v36
  %v164 = vunpack.c.l.b16 %v37
  %v165 = vunpack.c.h.b16 %v37
  %v166 = vunpack.c.l.b16 %v38
  %v167 = vpack.c.b16 %v137, %v132
  %v168 = vpack.c.b16 %v138, %v133
  %v169 = vpack.c.b16 %v139, %v134
  %v170 = vpack.c.b16 %v140, %v135
  %v171 = vpack.c.b16 %v141, %v136
  %v172 = vpack.c.b16 %v147, %v142
  %v173 = vpack.c.b16 %v148, %v143
  %v174 = vpack.c.b16 %v149, %v144
  %v175 = vpack.c.b16 %v150, %v145
  %v176 = vpack.c.b16 %v151, %v146
  %v177 = vpack.c.b16 %v157, %v152
  %v178 = vpack.c.b16 %v158, %v153
  %v179 = vpack.c.b16 %v159, %v154
  %v180 = vpack.c.b16 %v160, %v155
  %v181 = vpack.c.b16 %v161, %v156
  %v182 = vpack.c.b16 %v162, %v162
  %v183 = vpack.c.b16 %v163, %v163
  %v184 = vpack.c.b16 %v164, %v164
  %v185 = vpack.c.b16 %v165, %v165
  %v186 = vpack.c.b16 %v166, %v166
  %v275 = vunpack.c.l.b16 %v39
  %v276 = vunpack.c.l.b16 %v40
  %v277 = vunpack.c.l.b16 %v41
  %v278 = vunpack.c.l.b16 %v42
  %v279 = vunpack.c.l.b16 %v43
  %v280 = vunpack.c.l.b16 %v44
  %v281 = vunpack.c.l.b16 %v45
  %v282 = vunpack.c.l.b16 %v46
  %v283 = vunpack.c.l.b16 %v47
  %v284 = vunpack.c.l.b16 %v48
  %v285 = vunpack.c.l.b16 %v49
  %v286 = vunpack.c.l.b16 %v50
  %v287 = vunpack.c.l.b16 %v51
  %v288 = vunpack.c.l.b16 %v52
  %v289 = vunpack.c.l.b16 %v53
  %v290 = vunpack.c.l.b16 %v54
  %v291 = vunpack.c.l.b16 %v55
  %v292 = vunpack.c.l.b16 %v56
  %v293 = vunpack.c.l.b16 %v57
  %v294 = vunpack.c.l.b16 %v58
  %v295 = vunpack.c.l.b16 %v59
  %v296 = vunpack.c.l.b16 %v60
  %v297 = vunpack.c.l.b16 %v61
  %v298 = vunpack.c.l.b16 %v62
  %v299 = vunpack.c.l.b16 %v63
  %v300 = vunpack.c.l.b16 %v64
  %v301 = vunpack.c.l.b16 %v65
  %v302 = vunpack.c.l.b16 %v66
  %v303 = vunpack.c.l.b16 %v67
  %v304 = vunpack.c.l.b16 %v68
  %v305 = vunpack.c.l.b16 %v69
  %v306 = vunpack.c.l.b16 %v70
  %v307 = vunpack.c.l.b16 %v71
  %v308 = vunpack.c.l.b16 %v72
  %v309 = vunpack.c.l.b16 %v73
  %v310 = vunpack.c.l.b16 %v74
  %v311 = vunpack.c.l.b16 %v75
  %v312 = vunpack.c.l.b16 %v76
  %v313 = vunpack.c.l.b16 %v77
  %v314 = vunpack.c.l.b16 %v78
  %v315 = vunpack.c.l.b16 %v79
  %v316 = vunpack.c.l.b16 %v80
  %v317 = vunpack.c.l.b16 %v81
  %v318 = vunpack.c.l.b16 %v82
  %v319 = vunpack.c.l.b16 %v83
  %v320 = vunpack.c.l.b16 %v84
  %v321 = vunpack.c.l.b16 %v85
  %v322 = vunpack.c.l.b16 %v86
  %v323 = vunpack.c.l.b16 %v87
  %v324 = vunpack.c.l.b16 %v88
  %v325 = vunpack.c.l.b16 %v89
  %v326 = vunpack.c.l.b16 %v90
  %v327 = vunpack.c.l.b16 %v91
  %v328 = vunpack.c.l.b16 %v92
  %v329 = vunpack.c.l.b16 %v93
  %v330 = vunpack.c.l.b16 %v94
  %v331 = vunpack.c.l.b16 %v95
  %v332 = vunpack.c.l.b16 %v96
  %v333 = vunpack.c.l.b16 %v97
  %v334 = vunpack.c.l.b16 %v98
  %v335 = vunpack.c.l.b16 %v99
  %v336 = vunpack.c.l.b16 %v100
  %v337 = vunpack.c.l.b16 %v101
  %v338 = vunpack.c.l.b16 %v102
  %v339 = vunpack.c.l.b16 %v103
  %v340 = vunpack.c.l.b16 %v104
  %v341 = vunpack.c.l.b16 %v105
  %v342 = vunpack.c.l.b16 %v106
  %v343 = vunpack.c.l.b16 %v107
  %v344 = vunpack.c.l.b16 %v108
  %v345 = vunpack.c.l.b16 %v109
  %v346 = vunpack.c.l.b16 %v110
  %v347 = vpack.c.b16 %v276, %v275
  %v348 = vpack.c.b16 %v278, %v277
  %v349 = vpack.c.b16 %v280, %v279
  %v350 = vpack.c.b16 %v282, %v281
  %v351 = vpack.c.b16 %v284, %v283
  %v352 = vpack.c.b16 %v286, %v285
  %v353 = vpack.c.b16 %v288, %v287
  %v354 = vpack.c.b16 %v290, %v289
  %v355 = vpack.c.b16 %v292, %v291
  %v356 = vpack.c.b16 %v294, %v293
  %v357 = vpack.c.b16 %v296, %v295
  %v358 = vpack.c.b16 %v298, %v297
  %v359 = vpack.c.b16 %v300, %v299
  %v360 = vpack.c.b16 %v302, %v301
  %v361 = vpack.c.b16 %v304, %v303
  %v362 = vpack.c.b16 %v306, %v305
  %v363 = vpack.c.b16 %v308, %v307
  %v364 = vpack.c.b16 %v310, %v309
  %v365 = vpack.c.b16 %v312, %v311
  %v366 = vpack.c.b16 %v314, %v313
  %v367 = vpack.c.b16 %v316, %v315
  %v368 = vpack.c.b16 %v318, %v317
  %v369 = vpack.c.b16 %v320, %v319
  %v370 = vpack.c.b16 %v322, %v321
  %v371 = vpack.c.b16 %v324, %v323
  %v372 = vpack.c.b16 %v326, %v325
  %v373 = vpack.c.b16 %v328, %v327
  %v374 = vpack.c.b16 %v330, %v329
  %v375 = vpack.c.b16 %v332, %v331
  %v376 = vpack.c.b16 %v334, %v333
  %v377 = vpack.c.b16 %v336, %v335
  %v378 = vpack.c.b16 %v338, %v337
  %v379 = vpack.c.b16 %v340, %v339
  %v380 = vpack.c.b16 %v342, %v341
  %v381 = vpack.c.b16 %v344, %v343
  %v382 = vpack.c.b16 %v346, %v345
  %vm419 = vcmask 523264
  %v421 = vsel %vm419, %v171, 0
  %v424 = vsel %vm419, %v176, 0
  %v427 = vsel %vm419, %v181, 0
  %v430 = vsel %vm419, %v186, 0
  %432 = vmatprep.subr.bf16.mxu0 0
  %433 = vmatpush1.bf16.msra.mxu0 %v354
  %434 = vmatprep.subr.bf16.mxu0 0
  %435 = vmatpush1.bf16.msra.mxu0 %v353
  %436 = vmatprep.subr.bf16.mxu0 0
  %437 = vmatpush1.bf16.msra.mxu0 %v352
  %438 = vmatprep.subr.bf16.mxu0 0
  %439 = vmatpush1.bf16.msra.mxu0 %v351
  %440 = vmatprep.subr.bf16.mxu0 0
  %441 = vmatpush1.bf16.msra.mxu0 %v350
  %442 = vmatprep.subr.bf16.mxu0 0
  %443 = vmatpush1.bf16.msra.mxu0 %v349
  %444 = vmatprep.subr.bf16.mxu0 0
  %445 = vmatpush1.bf16.msra.mxu0 %v348
  %446 = vmatprep.subr.bf16.mxu0 0
  %447 = vmatpush1.bf16.msra.mxu0 %v347
  %448 = vmatprep.subr.bf16.mxu0 0
  %449 = vmatpush2.bf16.msra.mxu0 %v362
  %450 = vmatprep.subr.bf16.mxu0 0
  %451 = vmatpush2.bf16.msra.mxu0 %v361
  %452 = vmatprep.subr.bf16.mxu0 0
  %453 = vmatpush2.bf16.msra.mxu0 %v360
  %454 = vmatprep.subr.bf16.mxu0 0
  %455 = vmatpush2.bf16.msra.mxu0 %v359
  %456 = vmatprep.subr.bf16.mxu0 0
  %457 = vmatpush2.bf16.msra.mxu0 %v358
  %458 = vmatprep.subr.bf16.mxu0 0
  %459 = vmatpush2.bf16.msra.mxu0 %v357
  %460 = vmatprep.subr.bf16.mxu0 0
  %461 = vmatpush2.bf16.msra.mxu0 %v356
  %462 = vmatprep.subr.bf16.mxu0 0
  %463 = vmatpush2.bf16.msra.mxu0 %v355
  %464 = vmatprep.mubr.bf16.mxu0 %v168
  %465 = vmatmul.mubr.bf16.gmra.mxu0 %v167
  %v466 = vpop.f32.mrf.mxu0
  %v467 = vadd.f32 0.0, %v466
  %v468 = vpop.f32.mrf.mxu0
  %v469 = vpop.f32.mrf.mxu0
  %v470 = vadd.f32 0.0, %v469
  %v471 = vpop.f32.mrf.mxu0
  %472 = vmatprep.mubr.bf16.mxu0 %v173
  %473 = vmatmul.mubr.bf16.gmra.mxu0 %v172
  %v474 = vpop.f32.mrf.mxu0
  %v475 = vadd.f32 0.0, %v474
  %v476 = vpop.f32.mrf.mxu0
  %v477 = vpop.f32.mrf.mxu0
  %v478 = vadd.f32 0.0, %v477
  %v479 = vpop.f32.mrf.mxu0
  %480 = vmatprep.mubr.bf16.mxu0 %v178
  %481 = vmatmul.mubr.bf16.gmra.mxu0 %v177
  %v482 = vpop.f32.mrf.mxu0
  %v483 = vadd.f32 0.0, %v482
  %v484 = vpop.f32.mrf.mxu0
  %v485 = vpop.f32.mrf.mxu0
  %v486 = vadd.f32 0.0, %v485
  %v487 = vpop.f32.mrf.mxu0
  %488 = vmatprep.mubr.bf16.mxu0 %v183
  %489 = vmatmul.mubr.bf16.gmra.mxu0 %v182
  %v490 = vpop.f32.mrf.mxu0
  %v491 = vadd.f32 0.0, %v490
  %v492 = vpop.f32.mrf.mxu0
  %v493 = vpop.f32.mrf.mxu0
  %v494 = vpop.f32.mrf.mxu0
  %495 = vdwg.mxu0
  %496 = vmatprep.subr.bf16.mxu0 0
  %497 = vmatpush1.bf16.msra.mxu0 %v370
  %498 = vmatprep.subr.bf16.mxu0 0
  %499 = vmatpush1.bf16.msra.mxu0 %v369
  %500 = vmatprep.subr.bf16.mxu0 0
  %501 = vmatpush1.bf16.msra.mxu0 %v368
  %502 = vmatprep.subr.bf16.mxu0 0
  %503 = vmatpush1.bf16.msra.mxu0 %v367
  %504 = vmatprep.subr.bf16.mxu0 0
  %505 = vmatpush1.bf16.msra.mxu0 %v366
  %506 = vmatprep.subr.bf16.mxu0 0
  %507 = vmatpush1.bf16.msra.mxu0 %v365
  %508 = vmatprep.subr.bf16.mxu0 0
  %509 = vmatpush1.bf16.msra.mxu0 %v364
  %510 = vmatprep.subr.bf16.mxu0 0
  %511 = vmatpush1.bf16.msra.mxu0 %v363
  %512 = vmatprep.subr.bf16.mxu0 0
  %513 = vmatpush2.bf16.msra.mxu0 %v378
  %514 = vmatprep.subr.bf16.mxu0 0
  %515 = vmatpush2.bf16.msra.mxu0 %v377
  %516 = vmatprep.subr.bf16.mxu0 0
  %517 = vmatpush2.bf16.msra.mxu0 %v376
  %518 = vmatprep.subr.bf16.mxu0 0
  %519 = vmatpush2.bf16.msra.mxu0 %v375
  %520 = vmatprep.subr.bf16.mxu0 0
  %521 = vmatpush2.bf16.msra.mxu0 %v374
  %522 = vmatprep.subr.bf16.mxu0 0
  %523 = vmatpush2.bf16.msra.mxu0 %v373
  %524 = vmatprep.subr.bf16.mxu0 0
  %525 = vmatpush2.bf16.msra.mxu0 %v372
  %526 = vmatprep.subr.bf16.mxu0 0
  %527 = vmatpush2.bf16.msra.mxu0 %v371
  %528 = vmatprep.mubr.bf16.mxu0 %v170
  %529 = vmatmul.mubr.bf16.gmra.mxu0 %v169
  %v530 = vpop.f32.mrf.mxu0
  %v531 = vadd.f32 %v467, %v530
  %v532 = vpop.f32.mrf.mxu0
  %v533 = vpop.f32.mrf.mxu0
  %v534 = vadd.f32 %v470, %v533
  %v535 = vpop.f32.mrf.mxu0
  %536 = vmatprep.mubr.bf16.mxu0 %v175
  %537 = vmatmul.mubr.bf16.gmra.mxu0 %v174
  %v538 = vpop.f32.mrf.mxu0
  %v539 = vadd.f32 %v475, %v538
  %v540 = vpop.f32.mrf.mxu0
  %v541 = vpop.f32.mrf.mxu0
  %v542 = vadd.f32 %v478, %v541
  %v543 = vpop.f32.mrf.mxu0
  %544 = vmatprep.mubr.bf16.mxu0 %v180
  %545 = vmatmul.mubr.bf16.gmra.mxu0 %v179
  %v546 = vpop.f32.mrf.mxu0
  %v547 = vadd.f32 %v483, %v546
  %v548 = vpop.f32.mrf.mxu0
  %v549 = vpop.f32.mrf.mxu0
  %v550 = vadd.f32 %v486, %v549
  %v551 = vpop.f32.mrf.mxu0
  %552 = vmatprep.mubr.bf16.mxu0 %v185
  %553 = vmatmul.mubr.bf16.gmra.mxu0 %v184
  %v554 = vpop.f32.mrf.mxu0
  %v555 = vadd.f32 %v491, %v554
  %v556 = vpop.f32.mrf.mxu0
  %v557 = vpop.f32.mrf.mxu0
  %v558 = vpop.f32.mrf.mxu0
  %559 = vdwg.mxu0
  %560 = vmatprep.subr.bf16.mxu0 0
  %561 = vmatpush1.bf16.msra.mxu0 0
  %562 = vmatprep.subr.bf16.mxu0 0
  %563 = vmatpush1.bf16.msra.mxu0 0
  %564 = vmatprep.subr.bf16.mxu0 0
  %565 = vmatpush1.bf16.msra.mxu0 0
  %566 = vmatprep.subr.bf16.mxu0 0
  %567 = vmatpush1.bf16.msra.mxu0 0
  %568 = vmatprep.subr.bf16.mxu0 0
  %569 = vmatpush1.bf16.msra.mxu0 %v382
  %570 = vmatprep.subr.bf16.mxu0 0
  %571 = vmatpush1.bf16.msra.mxu0 %v381
  %572 = vmatprep.subr.bf16.mxu0 0
  %573 = vmatpush1.bf16.msra.mxu0 %v380
  %574 = vmatprep.subr.bf16.mxu0 0
  %575 = vmatpush1.bf16.msra.mxu0 %v379
  %576 = vmatprep.subr.bf16.mxu0 0
  %577 = vmatpush2.bf16.msra.mxu0 0
  %578 = vmatprep.subr.bf16.mxu0 0
  %579 = vmatpush2.bf16.msra.mxu0 0
  %580 = vmatprep.subr.bf16.mxu0 0
  %581 = vmatpush2.bf16.msra.mxu0 0
  %582 = vmatprep.subr.bf16.mxu0 0
  %583 = vmatpush2.bf16.msra.mxu0 0
  %584 = vmatprep.subr.bf16.mxu0 0
  %585 = vmatpush2.bf16.msra.mxu0 0
  %586 = vmatprep.subr.bf16.mxu0 0
  %587 = vmatpush2.bf16.msra.mxu0 0
  %588 = vmatprep.subr.bf16.mxu0 0
  %589 = vmatpush2.bf16.msra.mxu0 0
  %590 = vmatprep.subr.bf16.mxu0 0
  %591 = vmatpush2.bf16.msra.mxu0 0
  %592 = vmatprep.mubr.bf16.mxu0 0
  %593 = vmatmul.mubr.bf16.gmra.mxu0 %v421
  %v594 = vpop.f32.mrf.mxu0
  %v595 = vadd.f32 %v531, %v594
  %v596 = vpop.f32.mrf.mxu0
  %v597 = vpop.f32.mrf.mxu0
  %v598 = vadd.f32 %v534, %v597
  %v599 = vpop.f32.mrf.mxu0
  %600 = vmatprep.mubr.bf16.mxu0 0
  %601 = vmatmul.mubr.bf16.gmra.mxu0 %v424
  %v602 = vpop.f32.mrf.mxu0
  %v603 = vadd.f32 %v539, %v602
  %v604 = vpop.f32.mrf.mxu0
  %v605 = vpop.f32.mrf.mxu0
  %v606 = vadd.f32 %v542, %v605
  %v607 = vpop.f32.mrf.mxu0
  %608 = vmatprep.mubr.bf16.mxu0 0
  %609 = vmatmul.mubr.bf16.gmra.mxu0 %v427
  %v610 = vpop.f32.mrf.mxu0
  %v611 = vadd.f32 %v547, %v610
  %v612 = vpop.f32.mrf.mxu0
  %v613 = vpop.f32.mrf.mxu0
  %v614 = vadd.f32 %v550, %v613
  %v615 = vpop.f32.mrf.mxu0
  %616 = vmatprep.mubr.bf16.mxu0 0
  %617 = vmatmul.mubr.bf16.gmra.mxu0 %v430
  %v618 = vpop.f32.mrf.mxu0
  %v619 = vadd.f32 %v555, %v618
  %v620 = vpop.f32.mrf.mxu0
  %v621 = vpop.f32.mrf.mxu0
  %v622 = vpop.f32.mrf.mxu0
  %623 = vdwg.mxu0
  %v624 = vld [vmem:[%s2] sm:$0x1]
  %v626 = vlaneseq
  %v627 = vshrl.u32 %v626, 7
  %v628 = vsub.s32 0, %v627
  %v629 = vrot.slane %v624, %v628
  %v631 = vmul.f32 %v595, %v629
  %v632 = vmul.f32 %v598, %v629
  %v633 = vmul.f32 %v603, %v629
  %v634 = vmul.f32 %v606, %v629
  %v635 = vmul.f32 %v611, %v629
  %v636 = vmul.f32 %v614, %v629
  %v637 = vmul.f32 %v619, %v629
  %v638 = vld [vmem:[%s3] sm:$0x1]
  %v640 = vlaneseq
  %v641 = vshrl.u32 %v640, 7
  %v642 = vsub.s32 0, %v641
  %v643 = vrot.slane %v638, %v642
  %v645 = vadd.f32 %v631, %v643
  %v646 = vadd.f32 %v632, %v643
  %v647 = vadd.f32 %v633, %v643
  %v648 = vadd.f32 %v634, %v643
  %v649 = vadd.f32 %v635, %v643
  %v650 = vadd.f32 %v636, %v643
  %v651 = vadd.f32 %v637, %v643
  %v652 = vmax.f32 %v645, 0.0
  %v653 = vmax.f32 %v646, 0.0
  %v654 = vmax.f32 %v647, 0.0
  %v655 = vmax.f32 %v648, 0.0
  %v656 = vmax.f32 %v649, 0.0
  %v657 = vmax.f32 %v650, 0.0
  %v658 = vmax.f32 %v651, 0.0
  %659 = vst.msk [vmem:[%s4] sm:$0xff] %vm419, %v652
  %660 = vst.msk [vmem:[%s4 + $0x8] sm:$0xff] %vm419, %v653
  %661 = vst.msk [vmem:[%s4 + $0x10] sm:$0xff] %vm419, %v654
  %662 = vst.msk [vmem:[%s4 + $0x18] sm:$0xff] %vm419, %v655
  %663 = vst.msk [vmem:[%s4 + $0x20] sm:$0xff] %vm419, %v656
  %664 = vst.msk [vmem:[%s4 + $0x28] sm:$0xff] %vm419, %v657
  %vm665 = vcmask 521216
  %666 = vst.msk [vmem:[%s4 + $0x30] sm:$0x3f] %vm665, %v658
  // Predicated region
  $region18: #{cnn_forward.10} parent=0 // pred_check
    _
  $region19: #{cnn_forward.10} parent=0 // pred_check_branch
    %668 = sbr.rel (0) target = $region21
  $region20: #{cnn_forward.10} parent=0 // pred_region
    _
  $region21: #{cnn_forward.10} parent=0 // pred_fallthru
    _
  // Predicated region
  $region22: #{cnn_forward.10} parent=0 // pred_check
    _
  $region23: #{cnn_forward.10} parent=0 // pred_check_branch
    %670 = sbr.rel (0) target = $region25
  $region24: #{cnn_forward.10} parent=0 // pred_region
    _
  $region25: #{cnn_forward.10} parent=0 // pred_fallthru
    _

// kernel: cnn_forward.11
$region0: #{cnn_forward.11}
  #allocation0 [shape = 'u32[]', space=smem, size = 0x4, offset = 0x4, fixed_abs, tag = 'smem constant byte address 0x4 - core index']
  #allocation1 [shape = 'u32[144,128]{1,0:T(1,128)}', space=vmem, size = 0x12000, scoped, tag = 'internal scratch']
  %s0 = inlined_call_operand.vmem [shape: bf16[54,576], index: 0, kind: input, shape index: {}]
  %s1 = inlined_call_operand.vmem [shape: bf16[576,64], index: 1, kind: input, shape index: {}]
  %s2 = inlined_call_operand.vmem [shape: f32[1,64], index: 2, kind: input, shape index: {}]
  %s3 = inlined_call_operand.vmem [shape: f32[1,64], index: 3, kind: input, shape index: {}]
  %s4 = inlined_call_operand.vmem [shape: f32[54,64], index: 4, kind: input, shape index: {}]
  %s5 = inlined_call_operand.vmem [shape: f32[54,64], index: 5, kind: output, shape index: {}]
  %s6 = sld [smem:[#allocation0]]
  $region30: #{cnn_forward.11} parent=0
    _
  %s8 = ssub.s32 1, %s6
  %s9 = scalar_select 0, %s8, %s6
  // Predicated region
  $region2: #{cnn_forward.11} parent=0 // pred_check
    _
  $region3: #{cnn_forward.11} parent=0 // pred_check_branch
    %11 = sbr.rel (0) target = $region5
  $region4: #{cnn_forward.11} parent=0 // pred_region
    _
  $region5: #{cnn_forward.11} parent=0 // pred_fallthru
    _
  // Predicated region
  $region6: #{cnn_forward.11} parent=0 // pred_check
    _
  $region7: #{cnn_forward.11} parent=0 // pred_check_branch
    %13 = sbr.rel (0) target = $region9
  $region8: #{cnn_forward.11} parent=0 // pred_region
    _
  $region9: #{cnn_forward.11} parent=0 // pred_fallthru
    _
  // Predicated region
  $region10: #{cnn_forward.11} parent=0 // pred_check
    _
  $region11: #{cnn_forward.11} parent=0 // pred_check_branch
    %15 = sbr.rel (0) target = $region13
  $region12: #{cnn_forward.11} parent=0 // pred_region
    _
  $region13: #{cnn_forward.11} parent=0 // pred_fallthru
    _
  // Predicated region
  $region14: #{cnn_forward.11} parent=0 // pred_check
    _
  $region15: #{cnn_forward.11} parent=0 // pred_check_branch
    %17 = sbr.rel (0) target = $region17
  $region16: #{cnn_forward.11} parent=0 // pred_region
    _
  $region17: #{cnn_forward.11} parent=0 // pred_fallthru
    _
  // Predicated region
  $region18: #{cnn_forward.11} parent=0 // pred_check
    _
  $region19: #{cnn_forward.11} parent=0 // pred_check_branch
    %19 = sbr.rel (0) target = $region21
  $region20: #{cnn_forward.11} parent=0 // pred_region
    _
  $region21: #{cnn_forward.11} parent=0 // pred_fallthru
    _
  %v21 = vld [vmem:[%s0] sm:$0xff]
  %v22 = vld [vmem:[%s0 + $0x8] sm:$0xff]
  %v23 = vld [vmem:[%s0 + $0x10] sm:$0xf]
  %v24 = vld [vmem:[%s0 + $0x14] sm:$0xff]
  %v25 = vld [vmem:[%s0 + $0x1c] sm:$0xff]
  %v26 = vld [vmem:[%s0 + $0x24] sm:$0xf]
  %v27 = vld [vmem:[%s0 + $0x28] sm:$0xff]
  %v28 = vld [vmem:[%s0 + $0x30] sm:$0xff]
  %v29 = vld [vmem:[%s0 + $0x38] sm:$0xf]
  %v30 = vld [vmem:[%s0 + $0x3c] sm:$0xff]
  %v31 = vld [vmem:[%s0 + $0x44] sm:$0xff]
  %v32 = vld [vmem:[%s0 + $0x4c] sm:$0xf]
  %v33 = vld [vmem:[%s0 + $0x50] sm:$0xff]
  %v34 = vld [vmem:[%s0 + $0x58] sm:$0xff]
  %v35 = vld [vmem:[%s0 + $0x60] sm:$0xf]
  %v36 = vld [vmem:[%s0 + $0x64] sm:$0xff]
  %v37 = vld [vmem:[%s0 + $0x6c] sm:$0xff]
  %v38 = vld [vmem:[%s0 + $0x74] sm:$0xf]
  %v39 = vld [vmem:[%s0 + $0x78] sm:$0x77]
  %v40 = vld [vmem:[%s0 + $0x80] sm:$0x77]
  %v41 = vld [vmem:[%s0 + $0x88] sm:$0x7]
  %v42 = vld [vmem:[%s1] sm:$0xf]
  %v43 = vld [vmem:[%s1 + $0x4] sm:$0xf]
  %v44 = vld [vmem:[%s1 + $0x8] sm:$0xf]
  %v45 = vld [vmem:[%s1 + $0xc] sm:$0xf]
  %v46 = vld [vmem:[%s1 + $0x10] sm:$0xf]
  %v47 = vld [vmem:[%s1 + $0x14] sm:$0xf]
  %v48 = vld [vmem:[%s1 + $0x18] sm:$0xf]
  %v49 = vld [vmem:[%s1 + $0x1c] sm:$0xf]
  %v50 = vld [vmem:[%s1 + $0x20] sm:$0xf]
  %v51 = vld [vmem:[%s1 + $0x24] sm:$0xf]
  %v52 = vld [vmem:[%s1 + $0x28] sm:$0xf]
  %v53 = vld [vmem:[%s1 + $0x2c] sm:$0xf]
  %v54 = vld [vmem:[%s1 + $0x30] sm:$0xf]
  %v55 = vld [vmem:[%s1 + $0x34] sm:$0xf]
  %v56 = vld [vmem:[%s1 + $0x38] sm:$0xf]
  %v57 = vld [vmem:[%s1 + $0x3c] sm:$0xf]
  %v58 = vld [vmem:[%s1 + $0x40] sm:$0xf]
  %v59 = vld [vmem:[%s1 + $0x44] sm:$0xf]
  %v60 = vld [vmem:[%s1 + $0x48] sm:$0xf]
  %v61 = vld [vmem:[%s1 + $0x4c] sm:$0xf]
  %v62 = vld [vmem:[%s1 + $0x50] sm:$0xf]
  %v63 = vld [vmem:[%s1 + $0x54] sm:$0xf]
  %v64 = vld [vmem:[%s1 + $0x58] sm:$0xf]
  %v65 = vld [vmem:[%s1 + $0x5c] sm:$0xf]
  %v66 = vld [vmem:[%s1 + $0x60] sm:$0xf]
  %v67 = vld [vmem:[%s1 + $0x64] sm:$0xf]
  %v68 = vld [vmem:[%s1 + $0x68] sm:$0xf]
  %v69 = vld [vmem:[%s1 + $0x6c] sm:$0xf]
  %v70 = vld [vmem:[%s1 + $0x70] sm:$0xf]
  %v71 = vld [vmem:[%s1 + $0x74] sm:$0xf]
  %v72 = vld [vmem:[%s1 + $0x78] sm:$0xf]
  %v73 = vld [vmem:[%s1 + $0x7c] sm:$0xf]
  %v74 = vld [vmem:[%s1 + $0x80] sm:$0xf]
  %v75 = vld [vmem:[%s1 + $0x84] sm:$0xf]
  %v76 = vld [vmem:[%s1 + $0x88] sm:$0xf]
  %v77 = vld [vmem:[%s1 + $0x8c] sm:$0xf]
  %v78 = vld [vmem:[%s1 + $0x90] sm:$0xf]
  %v79 = vld [vmem:[%s1 + $0x94] sm:$0xf]
  %v80 = vld [vmem:[%s1 + $0x98] sm:$0xf]
  %v81 = vld [vmem:[%s1 + $0x9c] sm:$0xf]
  %v82 = vld [vmem:[%s1 + $0xa0] sm:$0xf]
  %v83 = vld [vmem:[%s1 + $0xa4] sm:$0xf]
  %v84 = vld [vmem:[%s1 + $0xa8] sm:$0xf]
  %v85 = vld [vmem:[%s1 + $0xac] sm:$0xf]
  %v86 = vld [vmem:[%s1 + $0xb0] sm:$0xf]
  %v87 = vld [vmem:[%s1 + $0xb4] sm:$0xf]
  %v88 = vld [vmem:[%s1 + $0xb8] sm:$0xf]
  %v89 = vld [vmem:[%s1 + $0xbc] sm:$0xf]
  %v90 = vld [vmem:[%s1 + $0xc0] sm:$0xf]
  %v91 = vld [vmem:[%s1 + $0xc4] sm:$0xf]
  %v92 = vld [vmem:[%s1 + $0xc8] sm:$0xf]
  %v93 = vld [vmem:[%s1 + $0xcc] sm:$0xf]
  %v94 = vld [vmem:[%s1 + $0xd0] sm:$0xf]
  %v95 = vld [vmem:[%s1 + $0xd4] sm:$0xf]
  %v96 = vld [vmem:[%s1 + $0xd8] sm:$0xf]
  %v97 = vld [vmem:[%s1 + $0xdc] sm:$0xf]
  %v98 = vld [vmem:[%s1 + $0xe0] sm:$0xf]
  %v99 = vld [vmem:[%s1 + $0xe4] sm:$0xf]
  %v100 = vld [vmem:[%s1 + $0xe8] sm:$0xf]
  %v101 = vld [vmem:[%s1 + $0xec] sm:$0xf]
  %v102 = vld [vmem:[%s1 + $0xf0] sm:$0xf]
  %v103 = vld [vmem:[%s1 + $0xf4] sm:$0xf]
  %v104 = vld [vmem:[%s1 + $0xf8] sm:$0xf]
  %v105 = vld [vmem:[%s1 + $0xfc] sm:$0xf]
  %v106 = vld [vmem:[%s1 + $0x100] sm:$0xf]
  %v107 = vld [vmem:[%s1 + $0x104] sm:$0xf]
  %v108 = vld [vmem:[%s1 + $0x108] sm:$0xf]
  %v109 = vld [vmem:[%s1 + $0x10c] sm:$0xf]
  %v110 = vld [vmem:[%s1 + $0x110] sm:$0xf]
  %v111 = vld [vmem:[%s1 + $0x114] sm:$0xf]
  %v112 = vld [vmem:[%s1 + $0x118] sm:$0xf]
  %v113 = vld [vmem:[%s1 + $0x11c] sm:$0xf]
  %v135 = vunpack.c.l.b16 %v21
  %v136 = vunpack.c.h.b16 %v21
  %v137 = vunpack.c.l.b16 %v22
  %v138 = vunpack.c.h.b16 %v22
  %v139 = vunpack.c.l.b16 %v23
  %v140 = vunpack.c.l.b16 %v24
  %v141 = vunpack.c.h.b16 %v24
  %v142 = vunpack.c.l.b16 %v25
  %v143 = vunpack.c.h.b16 %v25
  %v144 = vunpack.c.l.b16 %v26
  %v145 = vunpack.c.l.b16 %v27
  %v146 = vunpack.c.h.b16 %v27
  %v147 = vunpack.c.l.b16 %v28
  %v148 = vunpack.c.h.b16 %v28
  %v149 = vunpack.c.l.b16 %v29
  %v150 = vunpack.c.l.b16 %v30
  %v151 = vunpack.c.h.b16 %v30
  %v152 = vunpack.c.l.b16 %v31
  %v153 = vunpack.c.h.b16 %v31
  %v154 = vunpack.c.l.b16 %v32
  %v155 = vunpack.c.l.b16 %v33
  %v156 = vunpack.c.h.b16 %v33
  %v157 = vunpack.c.l.b16 %v34
  %v158 = vunpack.c.h.b16 %v34
  %v159 = vunpack.c.l.b16 %v35
  %v160 = vunpack.c.l.b16 %v36
  %v161 = vunpack.c.h.b16 %v36
  %v162 = vunpack.c.l.b16 %v37
  %v163 = vunpack.c.h.b16 %v37
  %v164 = vunpack.c.l.b16 %v38
  %v165 = vunpack.c.l.b16 %v39
  %v166 = vunpack.c.h.b16 %v39
  %v167 = vunpack.c.l.b16 %v40
  %v168 = vunpack.c.h.b16 %v40
  %v169 = vunpack.c.l.b16 %v41
  %v170 = vpack.c.b16 %v140, %v135
  %v171 = vpack.c.b16 %v141, %v136
  %v172 = vpack.c.b16 %v142, %v137
  %v173 = vpack.c.b16 %v143, %v138
  %v174 = vpack.c.b16 %v144, %v139
  %v175 = vpack.c.b16 %v150, %v145
  %v176 = vpack.c.b16 %v151, %v146
  %v177 = vpack.c.b16 %v152, %v147
  %v178 = vpack.c.b16 %v153, %v148
  %v179 = vpack.c.b16 %v154, %v149
  %v180 = vpack.c.b16 %v160, %v155
  %v181 = vpack.c.b16 %v161, %v156
  %v182 = vpack.c.b16 %v162, %v157
  %v183 = vpack.c.b16 %v163, %v158
  %v184 = vpack.c.b16 %v164, %v159
  %v185 = vpack.c.b16 %v165, %v165
  %v186 = vpack.c.b16 %v166, %v166
  %v187 = vpack.c.b16 %v167, %v167
  %v188 = vpack.c.b16 %v168, %v168
  %v189 = vpack.c.b16 %v169, %v169
  %v278 = vunpack.c.l.b16 %v42
  %v279 = vunpack.c.l.b16 %v43
  %v280 = vunpack.c.l.b16 %v44
  %v281 = vunpack.c.l.b16 %v45
  %v282 = vunpack.c.l.b16 %v46
  %v283 = vunpack.c.l.b16 %v47
  %v284 = vunpack.c.l.b16 %v48
  %v285 = vunpack.c.l.b16 %v49
  %v286 = vunpack.c.l.b16 %v50
  %v287 = vunpack.c.l.b16 %v51
  %v288 = vunpack.c.l.b16 %v52
  %v289 = vunpack.c.l.b16 %v53
  %v290 = vunpack.c.l.b16 %v54
  %v291 = vunpack.c.l.b16 %v55
  %v292 = vunpack.c.l.b16 %v56
  %v293 = vunpack.c.l.b16 %v57
  %v294 = vunpack.c.l.b16 %v58
  %v295 = vunpack.c.l.b16 %v59
  %v296 = vunpack.c.l.b16 %v60
  %v297 = vunpack.c.l.b16 %v61
  %v298 = vunpack.c.l.b16 %v62
  %v299 = vunpack.c.l.b16 %v63
  %v300 = vunpack.c.l.b16 %v64
  %v301 = vunpack.c.l.b16 %v65
  %v302 = vunpack.c.l.b16 %v66
  %v303 = vunpack.c.l.b16 %v67
  %v304 = vunpack.c.l.b16 %v68
  %v305 = vunpack.c.l.b16 %v69
  %v306 = vunpack.c.l.b16 %v70
  %v307 = vunpack.c.l.b16 %v71
  %v308 = vunpack.c.l.b16 %v72
  %v309 = vunpack.c.l.b16 %v73
  %v310 = vunpack.c.l.b16 %v74
  %v311 = vunpack.c.l.b16 %v75
  %v312 = vunpack.c.l.b16 %v76
  %v313 = vunpack.c.l.b16 %v77
  %v314 = vunpack.c.l.b16 %v78
  %v315 = vunpack.c.l.b16 %v79
  %v316 = vunpack.c.l.b16 %v80
  %v317 = vunpack.c.l.b16 %v81
  %v318 = vunpack.c.l.b16 %v82
  %v319 = vunpack.c.l.b16 %v83
  %v320 = vunpack.c.l.b16 %v84
  %v321 = vunpack.c.l.b16 %v85
  %v322 = vunpack.c.l.b16 %v86
  %v323 = vunpack.c.l.b16 %v87
  %v324 = vunpack.c.l.b16 %v88
  %v325 = vunpack.c.l.b16 %v89
  %v326 = vunpack.c.l.b16 %v90
  %v327 = vunpack.c.l.b16 %v91
  %v328 = vunpack.c.l.b16 %v92
  %v329 = vunpack.c.l.b16 %v93
  %v330 = vunpack.c.l.b16 %v94
  %v331 = vunpack.c.l.b16 %v95
  %v332 = vunpack.c.l.b16 %v96
  %v333 = vunpack.c.l.b16 %v97
  %v334 = vunpack.c.l.b16 %v98
  %v335 = vunpack.c.l.b16 %v99
  %v336 = vunpack.c.l.b16 %v100
  %v337 = vunpack.c.l.b16 %v101
  %v338 = vunpack.c.l.b16 %v102
  %v339 = vunpack.c.l.b16 %v103
  %v340 = vunpack.c.l.b16 %v104
  %v341 = vunpack.c.l.b16 %v105
  %v342 = vunpack.c.l.b16 %v106
  %v343 = vunpack.c.l.b16 %v107
  %v344 = vunpack.c.l.b16 %v108
  %v345 = vunpack.c.l.b16 %v109
  %v346 = vunpack.c.l.b16 %v110
  %v347 = vunpack.c.l.b16 %v111
  %v348 = vunpack.c.l.b16 %v112
  %v349 = vunpack.c.l.b16 %v113
  %v350 = vpack.c.b16 %v279, %v278
  %v351 = vpack.c.b16 %v281, %v280
  %v352 = vpack.c.b16 %v283, %v282
  %v353 = vpack.c.b16 %v285, %v284
  %v354 = vpack.c.b16 %v287, %v286
  %v355 = vpack.c.b16 %v289, %v288
  %v356 = vpack.c.b16 %v291, %v290
  %v357 = vpack.c.b16 %v293, %v292
  %v358 = vpack.c.b16 %v295, %v294
  %v359 = vpack.c.b16 %v297, %v296
  %v360 = vpack.c.b16 %v299, %v298
  %v361 = vpack.c.b16 %v301, %v300
  %v362 = vpack.c.b16 %v303, %v302
  %v363 = vpack.c.b16 %v305, %v304
  %v364 = vpack.c.b16 %v307, %v306
  %v365 = vpack.c.b16 %v309, %v308
  %v366 = vpack.c.b16 %v311, %v310
  %v367 = vpack.c.b16 %v313, %v312
  %v368 = vpack.c.b16 %v315, %v314
  %v369 = vpack.c.b16 %v317, %v316
  %v370 = vpack.c.b16 %v319, %v318
  %v371 = vpack.c.b16 %v321, %v320
  %v372 = vpack.c.b16 %v323, %v322
  %v373 = vpack.c.b16 %v325, %v324
  %v374 = vpack.c.b16 %v327, %v326
  %v375 = vpack.c.b16 %v329, %v328
  %v376 = vpack.c.b16 %v331, %v330
  %v377 = vpack.c.b16 %v333, %v332
  %v378 = vpack.c.b16 %v335, %v334
  %v379 = vpack.c.b16 %v337, %v336
  %v380 = vpack.c.b16 %v339, %v338
  %v381 = vpack.c.b16 %v341, %v340
  %v382 = vpack.c.b16 %v343, %v342
  %v383 = vpack.c.b16 %v345, %v344
  %v384 = vpack.c.b16 %v347, %v346
  %v385 = vpack.c.b16 %v349, %v348
  %vm422 = vcmask 523264
  %v424 = vsel %vm422, %v174, 0
  %v427 = vsel %vm422, %v179, 0
  %v430 = vsel %vm422, %v184, 0
  %v433 = vsel %vm422, %v189, 0
  %435 = vmatprep.subr.bf16.mxu0 0
  %436 = vmatpush1.bf16.msra.mxu0 %v357
  %437 = vmatprep.subr.bf16.mxu0 0
  %438 = vmatpush1.bf16.msra.mxu0 %v356
  %439 = vmatprep.subr.bf16.mxu0 0
  %440 = vmatpush1.bf16.msra.mxu0 %v355
  %441 = vmatprep.subr.bf16.mxu0 0
  %442 = vmatpush1.bf16.msra.mxu0 %v354
  %443 = vmatprep.subr.bf16.mxu0 0
  %444 = vmatpush1.bf16.msra.mxu0 %v353
  %445 = vmatprep.subr.bf16.mxu0 0
  %446 = vmatpush1.bf16.msra.mxu0 %v352
  %447 = vmatprep.subr.bf16.mxu0 0
  %448 = vmatpush1.bf16.msra.mxu0 %v351
  %449 = vmatprep.subr.bf16.mxu0 0
  %450 = vmatpush1.bf16.msra.mxu0 %v350
  %451 = vmatprep.subr.bf16.mxu0 0
  %452 = vmatpush2.bf16.msra.mxu0 %v365
  %453 = vmatprep.subr.bf16.mxu0 0
  %454 = vmatpush2.bf16.msra.mxu0 %v364
  %455 = vmatprep.subr.bf16.mxu0 0
  %456 = vmatpush2.bf16.msra.mxu0 %v363
  %457 = vmatprep.subr.bf16.mxu0 0
  %458 = vmatpush2.bf16.msra.mxu0 %v362
  %459 = vmatprep.subr.bf16.mxu0 0
  %460 = vmatpush2.bf16.msra.mxu0 %v361
  %461 = vmatprep.subr.bf16.mxu0 0
  %462 = vmatpush2.bf16.msra.mxu0 %v360
  %463 = vmatprep.subr.bf16.mxu0 0
  %464 = vmatpush2.bf16.msra.mxu0 %v359
  %465 = vmatprep.subr.bf16.mxu0 0
  %466 = vmatpush2.bf16.msra.mxu0 %v358
  %467 = vmatprep.mubr.bf16.mxu0 %v171
  %468 = vmatmul.mubr.bf16.gmra.mxu0 %v170
  %v469 = vpop.f32.mrf.mxu0
  %v470 = vadd.f32 0.0, %v469
  %v471 = vpop.f32.mrf.mxu0
  %v472 = vpop.f32.mrf.mxu0
  %v473 = vadd.f32 0.0, %v472
  %v474 = vpop.f32.mrf.mxu0
  %475 = vmatprep.mubr.bf16.mxu0 %v176
  %476 = vmatmul.mubr.bf16.gmra.mxu0 %v175
  %v477 = vpop.f32.mrf.mxu0
  %v478 = vadd.f32 0.0, %v477
  %v479 = vpop.f32.mrf.mxu0
  %v480 = vpop.f32.mrf.mxu0
  %v481 = vadd.f32 0.0, %v480
  %v482 = vpop.f32.mrf.mxu0
  %483 = vmatprep.mubr.bf16.mxu0 %v181
  %484 = vmatmul.mubr.bf16.gmra.mxu0 %v180
  %v485 = vpop.f32.mrf.mxu0
  %v486 = vadd.f32 0.0, %v485
  %v487 = vpop.f32.mrf.mxu0
  %v488 = vpop.f32.mrf.mxu0
  %v489 = vadd.f32 0.0, %v488
  %v490 = vpop.f32.mrf.mxu0
  %491 = vmatprep.mubr.bf16.mxu0 %v186
  %492 = vmatmul.mubr.bf16.gmra.mxu0 %v185
  %v493 = vpop.f32.mrf.mxu0
  %v494 = vadd.f32 0.0, %v493
  %v495 = vpop.f32.mrf.mxu0
  %v496 = vpop.f32.mrf.mxu0
  %v497 = vpop.f32.mrf.mxu0
  %498 = vdwg.mxu0
  %499 = vmatprep.subr.bf16.mxu0 0
  %500 = vmatpush1.bf16.msra.mxu0 %v373
  %501 = vmatprep.subr.bf16.mxu0 0
  %502 = vmatpush1.bf16.msra.mxu0 %v372
  %503 = vmatprep.subr.bf16.mxu0 0
  %504 = vmatpush1.bf16.msra.mxu0 %v371
  %505 = vmatprep.subr.bf16.mxu0 0
  %506 = vmatpush1.bf16.msra.mxu0 %v370
  %507 = vmatprep.subr.bf16.mxu0 0
  %508 = vmatpush1.bf16.msra.mxu0 %v369
  %509 = vmatprep.subr.bf16.mxu0 0
  %510 = vmatpush1.bf16.msra.mxu0 %v368
  %511 = vmatprep.subr.bf16.mxu0 0
  %512 = vmatpush1.bf16.msra.mxu0 %v367
  %513 = vmatprep.subr.bf16.mxu0 0
  %514 = vmatpush1.bf16.msra.mxu0 %v366
  %515 = vmatprep.subr.bf16.mxu0 0
  %516 = vmatpush2.bf16.msra.mxu0 %v381
  %517 = vmatprep.subr.bf16.mxu0 0
  %518 = vmatpush2.bf16.msra.mxu0 %v380
  %519 = vmatprep.subr.bf16.mxu0 0
  %520 = vmatpush2.bf16.msra.mxu0 %v379
  %521 = vmatprep.subr.bf16.mxu0 0
  %522 = vmatpush2.bf16.msra.mxu0 %v378
  %523 = vmatprep.subr.bf16.mxu0 0
  %524 = vmatpush2.bf16.msra.mxu0 %v377
  %525 = vmatprep.subr.bf16.mxu0 0
  %526 = vmatpush2.bf16.msra.mxu0 %v376
  %527 = vmatprep.subr.bf16.mxu0 0
  %528 = vmatpush2.bf16.msra.mxu0 %v375
  %529 = vmatprep.subr.bf16.mxu0 0
  %530 = vmatpush2.bf16.msra.mxu0 %v374
  %531 = vmatprep.mubr.bf16.mxu0 %v173
  %532 = vmatmul.mubr.bf16.gmra.mxu0 %v172
  %v533 = vpop.f32.mrf.mxu0
  %v534 = vadd.f32 %v470, %v533
  %v535 = vpop.f32.mrf.mxu0
  %v536 = vpop.f32.mrf.mxu0
  %v537 = vadd.f32 %v473, %v536
  %v538 = vpop.f32.mrf.mxu0
  %539 = vmatprep.mubr.bf16.mxu0 %v178
  %540 = vmatmul.mubr.bf16.gmra.mxu0 %v177
  %v541 = vpop.f32.mrf.mxu0
  %v542 = vadd.f32 %v478, %v541
  %v543 = vpop.f32.mrf.mxu0
  %v544 = vpop.f32.mrf.mxu0
  %v545 = vadd.f32 %v481, %v544
  %v546 = vpop.f32.mrf.mxu0
  %547 = vmatprep.mubr.bf16.mxu0 %v183
  %548 = vmatmul.mubr.bf16.gmra.mxu0 %v182
  %v549 = vpop.f32.mrf.mxu0
  %v550 = vadd.f32 %v486, %v549
  %v551 = vpop.f32.mrf.mxu0
  %v552 = vpop.f32.mrf.mxu0
  %v553 = vadd.f32 %v489, %v552
  %v554 = vpop.f32.mrf.mxu0
  %555 = vmatprep.mubr.bf16.mxu0 %v188
  %556 = vmatmul.mubr.bf16.gmra.mxu0 %v187
  %v557 = vpop.f32.mrf.mxu0
  %v558 = vadd.f32 %v494, %v557
  %v559 = vpop.f32.mrf.mxu0
  %v560 = vpop.f32.mrf.mxu0
  %v561 = vpop.f32.mrf.mxu0
  %562 = vdwg.mxu0
  %563 = vmatprep.subr.bf16.mxu0 0
  %564 = vmatpush1.bf16.msra.mxu0 0
  %565 = vmatprep.subr.bf16.mxu0 0
  %566 = vmatpush1.bf16.msra.mxu0 0
  %567 = vmatprep.subr.bf16.mxu0 0
  %568 = vmatpush1.bf16.msra.mxu0 0
  %569 = vmatprep.subr.bf16.mxu0 0
  %570 = vmatpush1.bf16.msra.mxu0 0
  %571 = vmatprep.subr.bf16.mxu0 0
  %572 = vmatpush1.bf16.msra.mxu0 %v385
  %573 = vmatprep.subr.bf16.mxu0 0
  %574 = vmatpush1.bf16.msra.mxu0 %v384
  %575 = vmatprep.subr.bf16.mxu0 0
  %576 = vmatpush1.bf16.msra.mxu0 %v383
  %577 = vmatprep.subr.bf16.mxu0 0
  %578 = vmatpush1.bf16.msra.mxu0 %v382
  %579 = vmatprep.subr.bf16.mxu0 0
  %580 = vmatpush2.bf16.msra.mxu0 0
  %581 = vmatprep.subr.bf16.mxu0 0
  %582 = vmatpush2.bf16.msra.mxu0 0
  %583 = vmatprep.subr.bf16.mxu0 0
  %584 = vmatpush2.bf16.msra.mxu0 0
  %585 = vmatprep.subr.bf16.mxu0 0
  %586 = vmatpush2.bf16.msra.mxu0 0
  %587 = vmatprep.subr.bf16.mxu0 0
  %588 = vmatpush2.bf16.msra.mxu0 0
  %589 = vmatprep.subr.bf16.mxu0 0
  %590 = vmatpush2.bf16.msra.mxu0 0
  %591 = vmatprep.subr.bf16.mxu0 0
  %592 = vmatpush2.bf16.msra.mxu0 0
  %593 = vmatprep.subr.bf16.mxu0 0
  %594 = vmatpush2.bf16.msra.mxu0 0
  %595 = vmatprep.mubr.bf16.mxu0 0
  %596 = vmatmul.mubr.bf16.gmra.mxu0 %v424
  %v597 = vpop.f32.mrf.mxu0
  %v598 = vadd.f32 %v534, %v597
  %v599 = vpop.f32.mrf.mxu0
  %v600 = vpop.f32.mrf.mxu0
  %v601 = vadd.f32 %v537, %v600
  %v602 = vpop.f32.mrf.mxu0
  %603 = vmatprep.mubr.bf16.mxu0 0
  %604 = vmatmul.mubr.bf16.gmra.mxu0 %v427
  %v605 = vpop.f32.mrf.mxu0
  %v606 = vadd.f32 %v542, %v605
  %v607 = vpop.f32.mrf.mxu0
  %v608 = vpop.f32.mrf.mxu0
  %v609 = vadd.f32 %v545, %v608
  %v610 = vpop.f32.mrf.mxu0
  %611 = vmatprep.mubr.bf16.mxu0 0
  %612 = vmatmul.mubr.bf16.gmra.mxu0 %v430
  %v613 = vpop.f32.mrf.mxu0
  %v614 = vadd.f32 %v550, %v613
  %v615 = vpop.f32.mrf.mxu0
  %v616 = vpop.f32.mrf.mxu0
  %v617 = vadd.f32 %v553, %v616
  %v618 = vpop.f32.mrf.mxu0
  %619 = vmatprep.mubr.bf16.mxu0 0
  %620 = vmatmul.mubr.bf16.gmra.mxu0 %v433
  %v621 = vpop.f32.mrf.mxu0
  %v622 = vadd.f32 %v558, %v621
  %v623 = vpop.f32.mrf.mxu0
  %v624 = vpop.f32.mrf.mxu0
  %v625 = vpop.f32.mrf.mxu0
  %626 = vdwg.mxu0
  %v627 = vld [vmem:[%s2] sm:$0x1]
  %v629 = vlaneseq
  %v630 = vshrl.u32 %v629, 7
  %v631 = vsub.s32 0, %v630
  %v632 = vrot.slane %v627, %v631
  %v634 = vmul.f32 %v598, %v632
  %v635 = vmul.f32 %v601, %v632
  %v636 = vmul.f32 %v606, %v632
  %v637 = vmul.f32 %v609, %v632
  %v638 = vmul.f32 %v614, %v632
  %v639 = vmul.f32 %v617, %v632
  %v640 = vmul.f32 %v622, %v632
  %v641 = vld [vmem:[%s3] sm:$0x1]
  %v643 = vlaneseq
  %v644 = vshrl.u32 %v643, 7
  %v645 = vsub.s32 0, %v644
  %v646 = vrot.slane %v641, %v645
  %v648 = vadd.f32 %v634, %v646
  %v649 = vadd.f32 %v635, %v646
  %v650 = vadd.f32 %v636, %v646
  %v651 = vadd.f32 %v637, %v646
  %v652 = vadd.f32 %v638, %v646
  %v653 = vadd.f32 %v639, %v646
  %v654 = vadd.f32 %v640, %v646
  %v655 = vld [vmem:[%s4] sm:$0xff]
  %v656 = vld [vmem:[%s4 + $0x8] sm:$0xff]
  %v657 = vld [vmem:[%s4 + $0x10] sm:$0xff]
  %v658 = vld [vmem:[%s4 + $0x18] sm:$0xff]
  %v659 = vld [vmem:[%s4 + $0x20] sm:$0xff]
  %v660 = vld [vmem:[%s4 + $0x28] sm:$0xff]
  %v661 = vld [vmem:[%s4 + $0x30] sm:$0x3f]
  %v662 = vadd.f32 %v648, %v655
  %v663 = vadd.f32 %v649, %v656
  %v664 = vadd.f32 %v650, %v657
  %v665 = vadd.f32 %v651, %v658
  %v666 = vadd.f32 %v652, %v659
  %v667 = vadd.f32 %v653, %v660
  %v668 = vadd.f32 %v654, %v661
  %v669 = vmax.f32 %v662, 0.0
  %v670 = vmax.f32 %v663, 0.0
  %v671 = vmax.f32 %v664, 0.0
  %v672 = vmax.f32 %v665, 0.0
  %v673 = vmax.f32 %v666, 0.0
  %v674 = vmax.f32 %v667, 0.0
  %v675 = vmax.f32 %v668, 0.0
  %676 = vst.msk [vmem:[%s5] sm:$0xff] %vm422, %v669
  %677 = vst.msk [vmem:[%s5 + $0x8] sm:$0xff] %vm422, %v670
  %678 = vst.msk [vmem:[%s5 + $0x10] sm:$0xff] %vm422, %v671
  %679 = vst.msk [vmem:[%s5 + $0x18] sm:$0xff] %vm422, %v672
  %680 = vst.msk [vmem:[%s5 + $0x20] sm:$0xff] %vm422, %v673
  %681 = vst.msk [vmem:[%s5 + $0x28] sm:$0xff] %vm422, %v674
  %vm682 = vcmask 521216
  %683 = vst.msk [vmem:[%s5 + $0x30] sm:$0x3f] %vm682, %v675
  // Predicated region
  $region22: #{cnn_forward.11} parent=0 // pred_check
    _
  $region23: #{cnn_forward.11} parent=0 // pred_check_branch
    %685 = sbr.rel (0) target = $region25
  $region24: #{cnn_forward.11} parent=0 // pred_region
    _
  $region25: #{cnn_forward.11} parent=0 // pred_fallthru
    _
  // Predicated region
  $region26: #{cnn_forward.11} parent=0 // pred_check
    _
  $region27: #{cnn_forward.11} parent=0 // pred_check_branch
    %687 = sbr.rel (0) target = $region29
  $region28: #{cnn_forward.11} parent=0 // pred_region
    _
  $region29: #{cnn_forward.11} parent=0 // pred_fallthru
    _

// kernel: cnn_forward.14
$region0: #{cnn_forward.14}
  #allocation0 [shape = 'u32[]', space=smem, size = 0x4, offset = 0x4, fixed_abs, tag = 'smem constant byte address 0x4 - core index']
  #allocation1 [shape = 'u32[144,128]{1,0:T(1,128)}', space=vmem, size = 0x12000, scoped, tag = 'internal scratch']
  %s0 = inlined_call_operand.vmem [shape: bf16[24,576], index: 0, kind: input, shape index: {}]
  %s1 = inlined_call_operand.vmem [shape: bf16[576,256], index: 1, kind: input, shape index: {}]
  %s2 = inlined_call_operand.vmem [shape: f32[1,256], index: 2, kind: input, shape index: {}]
  %s3 = inlined_call_operand.vmem [shape: f32[1,256], index: 3, kind: input, shape index: {}]
  %s4 = inlined_call_operand.vmem [shape: f32[24,256], index: 4, kind: output, shape index: {}]
  %s5 = sld [smem:[#allocation0]]
  $region26: #{cnn_forward.14} parent=0
    _
  %s7 = ssub.s32 1, %s5
  %s8 = scalar_select 0, %s7, %s5
  // Predicated region
  $region2: #{cnn_forward.14} parent=0 // pred_check
    _
  $region3: #{cnn_forward.14} parent=0 // pred_check_branch
    %10 = sbr.rel (0) target = $region5
  $region4: #{cnn_forward.14} parent=0 // pred_region
    _
  $region5: #{cnn_forward.14} parent=0 // pred_fallthru
    _
  // Predicated region
  $region6: #{cnn_forward.14} parent=0 // pred_check
    _
  $region7: #{cnn_forward.14} parent=0 // pred_check_branch
    %12 = sbr.rel (0) target = $region9
  $region8: #{cnn_forward.14} parent=0 // pred_region
    _
  $region9: #{cnn_forward.14} parent=0 // pred_fallthru
    _
  // Predicated region
  $region10: #{cnn_forward.14} parent=0 // pred_check
    _
  $region11: #{cnn_forward.14} parent=0 // pred_check_branch
    %14 = sbr.rel (0) target = $region13
  $region12: #{cnn_forward.14} parent=0 // pred_region
    _
  $region13: #{cnn_forward.14} parent=0 // pred_fallthru
    _
  // Predicated region
  $region14: #{cnn_forward.14} parent=0 // pred_check
    _
  $region15: #{cnn_forward.14} parent=0 // pred_check_branch
    %16 = sbr.rel (0) target = $region17
  $region16: #{cnn_forward.14} parent=0 // pred_region
    _
  $region17: #{cnn_forward.14} parent=0 // pred_fallthru
    _
  %v18 = vld [vmem:[%s0] sm:$0xff]
  %v19 = vld [vmem:[%s0 + $0x8] sm:$0xff]
  %v20 = vld [vmem:[%s0 + $0x10] sm:$0xf]
  %v21 = vld [vmem:[%s0 + $0x14] sm:$0xff]
  %v22 = vld [vmem:[%s0 + $0x1c] sm:$0xff]
  %v23 = vld [vmem:[%s0 + $0x24] sm:$0xf]
  %v24 = vld [vmem:[%s0 + $0x28] sm:$0xff]
  %v25 = vld [vmem:[%s0 + $0x30] sm:$0xff]
  %v26 = vld [vmem:[%s0 + $0x38] sm:$0xf]
  %v27 = vld [vmem:[%s1] sm:$0xff]
  %v28 = vld [vmem:[%s1 + $0x8] sm:$0xff]
  %v29 = vld [vmem:[%s1 + $0x10] sm:$0xff]
  %v30 = vld [vmem:[%s1 + $0x18] sm:$0xff]
  %v31 = vld [vmem:[%s1 + $0x20] sm:$0xff]
  %v32 = vld [vmem:[%s1 + $0x28] sm:$0xff]
  %v33 = vld [vmem:[%s1 + $0x30] sm:$0xff]
  %v34 = vld [vmem:[%s1 + $0x38] sm:$0xff]
  %v35 = vld [vmem:[%s1 + $0x40] sm:$0xff]
  %v36 = vld [vmem:[%s1 + $0x48] sm:$0xff]
  %v37 = vld [vmem:[%s1 + $0x50] sm:$0xff]
  %v38 = vld [vmem:[%s1 + $0x58] sm:$0xff]
  %v39 = vld [vmem:[%s1 + $0x60] sm:$0xff]
  %v40 = vld [vmem:[%s1 + $0x68] sm:$0xff]
  %v41 = vld [vmem:[%s1 + $0x70] sm:$0xff]
  %v42 = vld [vmem:[%s1 + $0x78] sm:$0xff]
  %v43 = vld [vmem:[%s1 + $0x80] sm:$0xff]
  %v44 = vld [vmem:[%s1 + $0x88] sm:$0xff]
  %v45 = vld [vmem:[%s1 + $0x90] sm:$0xff]
  %v46 = vld [vmem:[%s1 + $0x98] sm:$0xff]
  %v47 = vld [vmem:[%s1 + $0xa0] sm:$0xff]
  %v48 = vld [vmem:[%s1 + $0xa8] sm:$0xff]
  %v49 = vld [vmem:[%s1 + $0xb0] sm:$0xff]
  %v50 = vld [vmem:[%s1 + $0xb8] sm:$0xff]
  %v51 = vld [vmem:[%s1 + $0xc0] sm:$0xff]
  %v52 = vld [vmem:[%s1 + $0xc8] sm:$0xff]
  %v53 = vld [vmem:[%s1 + $0xd0] sm:$0xff]
  %v54 = vld [vmem:[%s1 + $0xd8] sm:$0xff]
  %v55 = vld [vmem:[%s1 + $0xe0] sm:$0xff]
  %v56 = vld [vmem:[%s1 + $0xe8] sm:$0xff]
  %v57 = vld [vmem:[%s1 + $0xf0] sm:$0xff]
  %v58 = vld [vmem:[%s1 + $0xf8] sm:$0xff]
  %v59 = vld [vmem:[%s1 + $0x100] sm:$0xff]
  %v60 = vld [vmem:[%s1 + $0x108] sm:$0xff]
  %v61 = vld [vmem:[%s1 + $0x110] sm:$0xff]
  %v62 = vld [vmem:[%s1 + $0x118] sm:$0xff]
  %v63 = vld [vmem:[%s1 + $0x120] sm:$0xff]
  %v64 = vld [vmem:[%s1 + $0x128] sm:$0xff]
  %v65 = vld [vmem:[%s1 + $0x130] sm:$0xff]
  %v66 = vld [vmem:[%s1 + $0x138] sm:$0xff]
  %v67 = vld [vmem:[%s1 + $0x140] sm:$0xff]
  %v68 = vld [vmem:[%s1 + $0x148] sm:$0xff]
  %v69 = vld [vmem:[%s1 + $0x150] sm:$0xff]
  %v70 = vld [vmem:[%s1 + $0x158] sm:$0xff]
  %v71 = vld [vmem:[%s1 + $0x160] sm:$0xff]
  %v72 = vld [vmem:[%s1 + $0x168] sm:$0xff]
  %v73 = vld [vmem:[%s1 + $0x170] sm:$0xff]
  %v74 = vld [vmem:[%s1 + $0x178] sm:$0xff]
  %v75 = vld [vmem:[%s1 + $0x180] sm:$0xff]
  %v76 = vld [vmem:[%s1 + $0x188] sm:$0xff]
  %v77 = vld [vmem:[%s1 + $0x190] sm:$0xff]
  %v78 = vld [vmem:[%s1 + $0x198] sm:$0xff]
  %v79 = vld [vmem:[%s1 + $0x1a0] sm:$0xff]
  %v80 = vld [vmem:[%s1 + $0x1a8] sm:$0xff]
  %v81 = vld [vmem:[%s1 + $0x1b0] sm:$0xff]
  %v82 = vld [vmem:[%s1 + $0x1b8] sm:$0xff]
  %v83 = vld [vmem:[%s1 + $0x1c0] sm:$0xff]
  %v84 = vld [vmem:[%s1 + $0x1c8] sm:$0xff]
  %v85 = vld [vmem:[%s1 + $0x1d0] sm:$0xff]
  %v86 = vld [vmem:[%s1 + $0x1d8] sm:$0xff]
  %v87 = vld [vmem:[%s1 + $0x1e0] sm:$0xff]
  %v88 = vld [vmem:[%s1 + $0x1e8] sm:$0xff]
  %v89 = vld [vmem:[%s1 + $0x1f0] sm:$0xff]
  %v90 = vld [vmem:[%s1 + $0x1f8] sm:$0xff]
  %v91 = vld [vmem:[%s1 + $0x200] sm:$0xff]
  %v92 = vld [vmem:[%s1 + $0x208] sm:$0xff]
  %v93 = vld [vmem:[%s1 + $0x210] sm:$0xff]
  %v94 = vld [vmem:[%s1 + $0x218] sm:$0xff]
  %v95 = vld [vmem:[%s1 + $0x220] sm:$0xff]
  %v96 = vld [vmem:[%s1 + $0x228] sm:$0xff]
  %v97 = vld [vmem:[%s1 + $0x230] sm:$0xff]
  %v98 = vld [vmem:[%s1 + $0x238] sm:$0xff]
  %v108 = vunpack.c.l.b16 %v18
  %v109 = vunpack.c.h.b16 %v18
  %v110 = vunpack.c.l.b16 %v19
  %v111 = vunpack.c.h.b16 %v19
  %v112 = vunpack.c.l.b16 %v20
  %v113 = vunpack.c.l.b16 %v21
  %v114 = vunpack.c.h.b16 %v21
  %v115 = vunpack.c.l.b16 %v22
  %v116 = vunpack.c.h.b16 %v22
  %v117 = vunpack.c.l.b16 %v23
  %v118 = vunpack.c.l.b16 %v24
  %v119 = vunpack.c.h.b16 %v24
  %v120 = vunpack.c.l.b16 %v25
  %v121 = vunpack.c.h.b16 %v25
  %v122 = vunpack.c.l.b16 %v26
  %v123 = vpack.c.b16 %v113, %v108
  %v124 = vpack.c.b16 %v114, %v109
  %v125 = vpack.c.b16 %v115, %v110
  %v126 = vpack.c.b16 %v116, %v111
  %v127 = vpack.c.b16 %v117, %v112
  %v128 = vpack.c.b16 %v118, %v118
  %v129 = vpack.c.b16 %v119, %v119
  %v130 = vpack.c.b16 %v120, %v120
  %v131 = vpack.c.b16 %v121, %v121
  %v132 = vpack.c.b16 %v122, %v122
  %v213 = vunpack.c.l.b16 %v27
  %v214 = vunpack.c.h.b16 %v27
  %v215 = vunpack.c.l.b16 %v28
  %v216 = vunpack.c.h.b16 %v28
  %v217 = vunpack.c.l.b16 %v29
  %v218 = vunpack.c.h.b16 %v29
  %v219 = vunpack.c.l.b16 %v30
  %v220 = vunpack.c.h.b16 %v30
  %v221 = vunpack.c.l.b16 %v31
  %v222 = vunpack.c.h.b16 %v31
  %v223 = vunpack.c.l.b16 %v32
  %v224 = vunpack.c.h.b16 %v32
  %v225 = vunpack.c.l.b16 %v33
  %v226 = vunpack.c.h.b16 %v33
  %v227 = vunpack.c.l.b16 %v34
  %v228 = vunpack.c.h.b16 %v34
  %v229 = vunpack.c.l.b16 %v35
  %v230 = vunpack.c.h.b16 %v35
  %v231 = vunpack.c.l.b16 %v36
  %v232 = vunpack.c.h.b16 %v36
  %v233 = vunpack.c.l.b16 %v37
  %v234 = vunpack.c.h.b16 %v37
  %v235 = vunpack.c.l.b16 %v38
  %v236 = vunpack.c.h.b16 %v38
  %v237 = vunpack.c.l.b16 %v39
  %v238 = vunpack.c.h.b16 %v39
  %v239 = vunpack.c.l.b16 %v40
  %v240 = vunpack.c.h.b16 %v40
  %v241 = vunpack.c.l.b16 %v41
  %v242 = vunpack.c.h.b16 %v41
  %v243 = vunpack.c.l.b16 %v42
  %v244 = vunpack.c.h.b16 %v42
  %v245 = vunpack.c.l.b16 %v43
  %v246 = vunpack.c.h.b16 %v43
  %v247 = vunpack.c.l.b16 %v44
  %v248 = vunpack.c.h.b16 %v44
  %v249 = vunpack.c.l.b16 %v45
  %v250 = vunpack.c.h.b16 %v45
  %v251 = vunpack.c.l.b16 %v46
  %v252 = vunpack.c.h.b16 %v46
  %v253 = vunpack.c.l.b16 %v47
  %v254 = vunpack.c.h.b16 %v47
  %v255 = vunpack.c.l.b16 %v48
  %v256 = vunpack.c.h.b16 %v48
  %v257 = vunpack.c.l.b16 %v49
  %v258 = vunpack.c.h.b16 %v49
  %v259 = vunpack.c.l.b16 %v50
  %v260 = vunpack.c.h.b16 %v50
  %v261 = vunpack.c.l.b16 %v51
  %v262 = vunpack.c.h.b16 %v51
  %v263 = vunpack.c.l.b16 %v52
  %v264 = vunpack.c.h.b16 %v52
  %v265 = vunpack.c.l.b16 %v53
  %v266 = vunpack.c.h.b16 %v53
  %v267 = vunpack.c.l.b16 %v54
  %v268 = vunpack.c.h.b16 %v54
  %v269 = vunpack.c.l.b16 %v55
  %v270 = vunpack.c.h.b16 %v55
  %v271 = vunpack.c.l.b16 %v56
  %v272 = vunpack.c.h.b16 %v56
  %v273 = vunpack.c.l.b16 %v57
  %v274 = vunpack.c.h.b16 %v57
  %v275 = vunpack.c.l.b16 %v58
  %v276 = vunpack.c.h.b16 %v58
  %v277 = vunpack.c.l.b16 %v59
  %v278 = vunpack.c.h.b16 %v59
  %v279 = vunpack.c.l.b16 %v60
  %v280 = vunpack.c.h.b16 %v60
  %v281 = vunpack.c.l.b16 %v61
  %v282 = vunpack.c.h.b16 %v61
  %v283 = vunpack.c.l.b16 %v62
  %v284 = vunpack.c.h.b16 %v62
  %v285 = vunpack.c.l.b16 %v63
  %v286 = vunpack.c.h.b16 %v63
  %v287 = vunpack.c.l.b16 %v64
  %v288 = vunpack.c.h.b16 %v64
  %v289 = vunpack.c.l.b16 %v65
  %v290 = vunpack.c.h.b16 %v65
  %v291 = vunpack.c.l.b16 %v66
  %v292 = vunpack.c.h.b16 %v66
  %v293 = vunpack.c.l.b16 %v67
  %v294 = vunpack.c.h.b16 %v67
  %v295 = vunpack.c.l.b16 %v68
  %v296 = vunpack.c.h.b16 %v68
  %v297 = vunpack.c.l.b16 %v69
  %v298 = vunpack.c.h.b16 %v69
  %v299 = vunpack.c.l.b16 %v70
  %v300 = vunpack.c.h.b16 %v70
  %v301 = vunpack.c.l.b16 %v71
  %v302 = vunpack.c.h.b16 %v71
  %v303 = vunpack.c.l.b16 %v72
  %v304 = vunpack.c.h.b16 %v72
  %v305 = vunpack.c.l.b16 %v73
  %v306 = vunpack.c.h.b16 %v73
  %v307 = vunpack.c.l.b16 %v74
  %v308 = vunpack.c.h.b16 %v74
  %v309 = vunpack.c.l.b16 %v75
  %v310 = vunpack.c.h.b16 %v75
  %v311 = vunpack.c.l.b16 %v76
  %v312 = vunpack.c.h.b16 %v76
  %v313 = vunpack.c.l.b16 %v77
  %v314 = vunpack.c.h.b16 %v77
  %v315 = vunpack.c.l.b16 %v78
  %v316 = vunpack.c.h.b16 %v78
  %v317 = vunpack.c.l.b16 %v79
  %v318 = vunpack.c.h.b16 %v79
  %v319 = vunpack.c.l.b16 %v80
  %v320 = vunpack.c.h.b16 %v80
  %v321 = vunpack.c.l.b16 %v81
  %v322 = vunpack.c.h.b16 %v81
  %v323 = vunpack.c.l.b16 %v82
  %v324 = vunpack.c.h.b16 %v82
  %v325 = vunpack.c.l.b16 %v83
  %v326 = vunpack.c.h.b16 %v83
  %v327 = vunpack.c.l.b16 %v84
  %v328 = vunpack.c.h.b16 %v84
  %v329 = vunpack.c.l.b16 %v85
  %v330 = vunpack.c.h.b16 %v85
  %v331 = vunpack.c.l.b16 %v86
  %v332 = vunpack.c.h.b16 %v86
  %v333 = vunpack.c.l.b16 %v87
  %v334 = vunpack.c.h.b16 %v87
  %v335 = vunpack.c.l.b16 %v88
  %v336 = vunpack.c.h.b16 %v88
  %v337 = vunpack.c.l.b16 %v89
  %v338 = vunpack.c.h.b16 %v89
  %v339 = vunpack.c.l.b16 %v90
  %v340 = vunpack.c.h.b16 %v90
  %v341 = vunpack.c.l.b16 %v91
  %v342 = vunpack.c.h.b16 %v91
  %v343 = vunpack.c.l.b16 %v92
  %v344 = vunpack.c.h.b16 %v92
  %v345 = vunpack.c.l.b16 %v93
  %v346 = vunpack.c.h.b16 %v93
  %v347 = vunpack.c.l.b16 %v94
  %v348 = vunpack.c.h.b16 %v94
  %v349 = vunpack.c.l.b16 %v95
  %v350 = vunpack.c.h.b16 %v95
  %v351 = vunpack.c.l.b16 %v96
  %v352 = vunpack.c.h.b16 %v96
  %v353 = vunpack.c.l.b16 %v97
  %v354 = vunpack.c.h.b16 %v97
  %v355 = vunpack.c.l.b16 %v98
  %v356 = vunpack.c.h.b16 %v98
  %v357 = vpack.c.b16 %v215, %v213
  %v358 = vpack.c.b16 %v216, %v214
  %v359 = vpack.c.b16 %v219, %v217
  %v360 = vpack.c.b16 %v220, %v218
  %v361 = vpack.c.b16 %v223, %v221
  %v362 = vpack.c.b16 %v224, %v222
  %v363 = vpack.c.b16 %v227, %v225
  %v364 = vpack.c.b16 %v228, %v226
  %v365 = vpack.c.b16 %v231, %v229
  %v366 = vpack.c.b16 %v232, %v230
  %v367 = vpack.c.b16 %v235, %v233
  %v368 = vpack.c.b16 %v236, %v234
  %v369 = vpack.c.b16 %v239, %v237
  %v370 = vpack.c.b16 %v240, %v238
  %v371 = vpack.c.b16 %v243, %v241
  %v372 = vpack.c.b16 %v244, %v242
  %v373 = vpack.c.b16 %v247, %v245
  %v374 = vpack.c.b16 %v248, %v246
  %v375 = vpack.c.b16 %v251, %v249
  %v376 = vpack.c.b16 %v252, %v250
  %v377 = vpack.c.b16 %v255, %v253
  %v378 = vpack.c.b16 %v256, %v254
  %v379 = vpack.c.b16 %v259, %v257
  %v380 = vpack.c.b16 %v260, %v258
  %v381 = vpack.c.b16 %v263, %v261
  %v382 = vpack.c.b16 %v264, %v262
  %v383 = vpack.c.b16 %v267, %v265
  %v384 = vpack.c.b16 %v268, %v266
  %v385 = vpack.c.b16 %v271, %v269
  %v386 = vpack.c.b16 %v272, %v270
  %v387 = vpack.c.b16 %v275, %v273
  %v388 = vpack.c.b16 %v276, %v274
  %v389 = vpack.c.b16 %v279, %v277
  %v390 = vpack.c.b16 %v280, %v278
  %v391 = vpack.c.b16 %v283, %v281
  %v392 = vpack.c.b16 %v284, %v282
  %v393 = vpack.c.b16 %v287, %v285
  %v394 = vpack.c.b16 %v288, %v286
  %v395 = vpack.c.b16 %v291, %v289
  %v396 = vpack.c.b16 %v292, %v290
  %v397 = vpack.c.b16 %v295, %v293
  %v398 = vpack.c.b16 %v296, %v294
  %v399 = vpack.c.b16 %v299, %v297
  %v400 = vpack.c.b16 %v300, %v298
  %v401 = vpack.c.b16 %v303, %v301
  %v402 = vpack.c.b16 %v304, %v302
  %v403 = vpack.c.b16 %v307, %v305
  %v404 = vpack.c.b16 %v308, %v306
  %v405 = vpack.c.b16 %v311, %v309
  %v406 = vpack.c.b16 %v312, %v310
  %v407 = vpack.c.b16 %v315, %v313
  %v408 = vpack.c.b16 %v316, %v314
  %v409 = vpack.c.b16 %v319, %v317
  %v410 = vpack.c.b16 %v320, %v318
  %v411 = vpack.c.b16 %v323, %v321
  %v412 = vpack.c.b16 %v324, %v322
  %v413 = vpack.c.b16 %v327, %v325
  %v414 = vpack.c.b16 %v328, %v326
  %v415 = vpack.c.b16 %v331, %v329
  %v416 = vpack.c.b16 %v332, %v330
  %v417 = vpack.c.b16 %v335, %v333
  %v418 = vpack.c.b16 %v336, %v334
  %v419 = vpack.c.b16 %v339, %v337
  %v420 = vpack.c.b16 %v340, %v338
  %v421 = vpack.c.b16 %v343, %v341
  %v422 = vpack.c.b16 %v344, %v342
  %v423 = vpack.c.b16 %v347, %v345
  %v424 = vpack.c.b16 %v348, %v346
  %v425 = vpack.c.b16 %v351, %v349
  %v426 = vpack.c.b16 %v352, %v350
  %v427 = vpack.c.b16 %v355, %v353
  %v428 = vpack.c.b16 %v356, %v354
  %vm501 = vcmask 523264
  %v503 = vsel %vm501, %v127, 0
  %v506 = vsel %vm501, %v132, 0
  %508 = vmatprep.subr.bf16.mxu0 %v372
  %509 = vmatpush1.bf16.msra.mxu0 %v371
  %510 = vmatprep.subr.bf16.mxu0 %v370
  %511 = vmatpush1.bf16.msra.mxu0 %v369
  %512 = vmatprep.subr.bf16.mxu0 %v368
  %513 = vmatpush1.bf16.msra.mxu0 %v367
  %514 = vmatprep.subr.bf16.mxu0 %v366
  %515 = vmatpush1.bf16.msra.mxu0 %v365
  %516 = vmatprep.subr.bf16.mxu0 %v364
  %517 = vmatpush1.bf16.msra.mxu0 %v363
  %518 = vmatprep.subr.bf16.mxu0 %v362
  %519 = vmatpush1.bf16.msra.mxu0 %v361
  %520 = vmatprep.subr.bf16.mxu0 %v360
  %521 = vmatpush1.bf16.msra.mxu0 %v359
  %522 = vmatprep.subr.bf16.mxu0 %v358
  %523 = vmatpush1.bf16.msra.mxu0 %v357
  %524 = vmatprep.subr.bf16.mxu0 %v388
  %525 = vmatpush2.bf16.msra.mxu0 %v387
  %526 = vmatprep.subr.bf16.mxu0 %v386
  %527 = vmatpush2.bf16.msra.mxu0 %v385
  %528 = vmatprep.subr.bf16.mxu0 %v384
  %529 = vmatpush2.bf16.msra.mxu0 %v383
  %530 = vmatprep.subr.bf16.mxu0 %v382
  %531 = vmatpush2.bf16.msra.mxu0 %v381
  %532 = vmatprep.subr.bf16.mxu0 %v380
  %533 = vmatpush2.bf16.msra.mxu0 %v379
  %534 = vmatprep.subr.bf16.mxu0 %v378
  %535 = vmatpush2.bf16.msra.mxu0 %v377
  %536 = vmatprep.subr.bf16.mxu0 %v376
  %537 = vmatpush2.bf16.msra.mxu0 %v375
  %538 = vmatprep.subr.bf16.mxu0 %v374
  %539 = vmatpush2.bf16.msra.mxu0 %v373
  %540 = vmatprep.mubr.bf16.mxu0 %v124
  %541 = vmatmul.mubr.bf16.gmra.mxu0 %v123
  %v542 = vpop.f32.mrf.mxu0
  %v543 = vadd.f32 0.0, %v542
  %v544 = vpop.f32.mrf.mxu0
  %v545 = vadd.f32 0.0, %v544
  %v546 = vpop.f32.mrf.mxu0
  %v547 = vadd.f32 0.0, %v546
  %v548 = vpop.f32.mrf.mxu0
  %v549 = vadd.f32 0.0, %v548
  %550 = vmatprep.mubr.bf16.mxu0 %v129
  %551 = vmatmul.mubr.bf16.gmra.mxu0 %v128
  %v552 = vpop.f32.mrf.mxu0
  %v553 = vadd.f32 0.0, %v552
  %v554 = vpop.f32.mrf.mxu0
  %v555 = vadd.f32 0.0, %v554
  %v556 = vpop.f32.mrf.mxu0
  %v557 = vpop.f32.mrf.mxu0
  %558 = vdwg.mxu0
  %559 = vmatprep.subr.bf16.mxu0 %v404
  %560 = vmatpush1.bf16.msra.mxu0 %v403
  %561 = vmatprep.subr.bf16.mxu0 %v402
  %562 = vmatpush1.bf16.msra.mxu0 %v401
  %563 = vmatprep.subr.bf16.mxu0 %v400
  %564 = vmatpush1.bf16.msra.mxu0 %v399
  %565 = vmatprep.subr.bf16.mxu0 %v398
  %566 = vmatpush1.bf16.msra.mxu0 %v397
  %567 = vmatprep.subr.bf16.mxu0 %v396
  %568 = vmatpush1.bf16.msra.mxu0 %v395
  %569 = vmatprep.subr.bf16.mxu0 %v394
  %570 = vmatpush1.bf16.msra.mxu0 %v393
  %571 = vmatprep.subr.bf16.mxu0 %v392
  %572 = vmatpush1.bf16.msra.mxu0 %v391
  %573 = vmatprep.subr.bf16.mxu0 %v390
  %574 = vmatpush1.bf16.msra.mxu0 %v389
  %575 = vmatprep.subr.bf16.mxu0 %v420
  %576 = vmatpush2.bf16.msra.mxu0 %v419
  %577 = vmatprep.subr.bf16.mxu0 %v418
  %578 = vmatpush2.bf16.msra.mxu0 %v417
  %579 = vmatprep.subr.bf16.mxu0 %v416
  %580 = vmatpush2.bf16.msra.mxu0 %v415
  %581 = vmatprep.subr.bf16.mxu0 %v414
  %582 = vmatpush2.bf16.msra.mxu0 %v413
  %583 = vmatprep.subr.bf16.mxu0 %v412
  %584 = vmatpush2.bf16.msra.mxu0 %v411
  %585 = vmatprep.subr.bf16.mxu0 %v410
  %586 = vmatpush2.bf16.msra.mxu0 %v409
  %587 = vmatprep.subr.bf16.mxu0 %v408
  %588 = vmatpush2.bf16.msra.mxu0 %v407
  %589 = vmatprep.subr.bf16.mxu0 %v406
  %590 = vmatpush2.bf16.msra.mxu0 %v405
  %591 = vmatprep.mubr.bf16.mxu0 %v126
  %592 = vmatmul.mubr.bf16.gmra.mxu0 %v125
  %v593 = vpop.f32.mrf.mxu0
  %v594 = vadd.f32 %v543, %v593
  %v595 = vpop.f32.mrf.mxu0
  %v596 = vadd.f32 %v545, %v595
  %v597 = vpop.f32.mrf.mxu0
  %v598 = vadd.f32 %v547, %v597
  %v599 = vpop.f32.mrf.mxu0
  %v600 = vadd.f32 %v549, %v599
  %601 = vmatprep.mubr.bf16.mxu0 %v131
  %602 = vmatmul.mubr.bf16.gmra.mxu0 %v130
  %v603 = vpop.f32.mrf.mxu0
  %v604 = vadd.f32 %v553, %v603
  %v605 = vpop.f32.mrf.mxu0
  %v606 = vadd.f32 %v555, %v605
  %v607 = vpop.f32.mrf.mxu0
  %v608 = vpop.f32.mrf.mxu0
  %609 = vdwg.mxu0
  %610 = vmatprep.subr.bf16.mxu0 0
  %611 = vmatpush1.bf16.msra.mxu0 0
  %612 = vmatprep.subr.bf16.mxu0 0
  %613 = vmatpush1.bf16.msra.mxu0 0
  %614 = vmatprep.subr.bf16.mxu0 0
  %615 = vmatpush1.bf16.msra.mxu0 0
  %616 = vmatprep.subr.bf16.mxu0 0
  %617 = vmatpush1.bf16.msra.mxu0 0
  %618 = vmatprep.subr.bf16.mxu0 %v428
  %619 = vmatpush1.bf16.msra.mxu0 %v427
  %620 = vmatprep.subr.bf16.mxu0 %v426
  %621 = vmatpush1.bf16.msra.mxu0 %v425
  %622 = vmatprep.subr.bf16.mxu0 %v424
  %623 = vmatpush1.bf16.msra.mxu0 %v423
  %624 = vmatprep.subr.bf16.mxu0 %v422
  %625 = vmatpush1.bf16.msra.mxu0 %v421
  %626 = vmatprep.subr.bf16.mxu0 0
  %627 = vmatpush2.bf16.msra.mxu0 0
  %628 = vmatprep.subr.bf16.mxu0 0
  %629 = vmatpush2.bf16.msra.mxu0 0
  %630 = vmatprep.subr.bf16.mxu0 0
  %631 = vmatpush2.bf16.msra.mxu0 0
  %632 = vmatprep.subr.bf16.mxu0 0
  %633 = vmatpush2.bf16.msra.mxu0 0
  %634 = vmatprep.subr.bf16.mxu0 0
  %635 = vmatpush2.bf16.msra.mxu0 0
  %636 = vmatprep.subr.bf16.mxu0 0
  %637 = vmatpush2.bf16.msra.mxu0 0
  %638 = vmatprep.subr.bf16.mxu0 0
  %639 = vmatpush2.bf16.msra.mxu0 0
  %640 = vmatprep.subr.bf16.mxu0 0
  %641 = vmatpush2.bf16.msra.mxu0 0
  %642 = vmatprep.mubr.bf16.mxu0 0
  %643 = vmatmul.mubr.bf16.gmra.mxu0 %v503
  %v644 = vpop.f32.mrf.mxu0
  %v645 = vadd.f32 %v594, %v644
  %v646 = vpop.f32.mrf.mxu0
  %v647 = vadd.f32 %v596, %v646
  %v648 = vpop.f32.mrf.mxu0
  %v649 = vadd.f32 %v598, %v648
  %v650 = vpop.f32.mrf.mxu0
  %v651 = vadd.f32 %v600, %v650
  %652 = vmatprep.mubr.bf16.mxu0 0
  %653 = vmatmul.mubr.bf16.gmra.mxu0 %v506
  %v654 = vpop.f32.mrf.mxu0
  %v655 = vadd.f32 %v604, %v654
  %v656 = vpop.f32.mrf.mxu0
  %v657 = vadd.f32 %v606, %v656
  %v658 = vpop.f32.mrf.mxu0
  %v659 = vpop.f32.mrf.mxu0
  %660 = vdwg.mxu0
  %v661 = vld [vmem:[%s2] sm:$0x3]
  %v663 = vlaneseq
  %v664 = vshrl.u32 %v663, 7
  %v665 = vsub.s32 0, %v664
  %v666 = vrot.slane %v661, %v665
  %v667 = vlaneseq
  %v668 = vshrl.u32 %v667, 7
  %v669 = vsub.s32 1, %v668
  %v670 = vrot.slane %v661, %v669
  %v673 = vmul.f32 %v645, %v666
  %v674 = vmul.f32 %v647, %v670
  %v675 = vmul.f32 %v649, %v666
  %v676 = vmul.f32 %v651, %v670
  %v677 = vmul.f32 %v655, %v666
  %v678 = vmul.f32 %v657, %v670
  %v679 = vld [vmem:[%s3] sm:$0x3]
  %v681 = vlaneseq
  %v682 = vshrl.u32 %v681, 7
  %v683 = vsub.s32 0, %v682
  %v684 = vrot.slane %v679, %v683
  %v685 = vlaneseq
  %v686 = vshrl.u32 %v685, 7
  %v687 = vsub.s32 1, %v686
  %v688 = vrot.slane %v679, %v687
  %v691 = vadd.f32 %v673, %v684
  %v692 = vadd.f32 %v674, %v688
  %v693 = vadd.f32 %v675, %v684
  %v694 = vadd.f32 %v676, %v688
  %v695 = vadd.f32 %v677, %v684
  %v696 = vadd.f32 %v678, %v688
  %v697 = vlaneseq
  %v698 = vand.u32 %v697, 127
  %v699 = vadd.s32 %v698, 128
  %vm700 = vcmp.lt.s32.totalorder %v698, 128
  %vm701 = vcmp.lt.s32.totalorder %v699, 128
  %v702 = vmax.f32 %v691, 0.0
  %v703 = vmax.f32 %v692, 0.0
  %v704 = vmax.f32 %v693, 0.0
  %v705 = vmax.f32 %v694, 0.0
  %v706 = vmax.f32 %v695, 0.0
  %v707 = vmax.f32 %v696, 0.0
  %v708 = vsel %vm700, %v702, %v691
  %v709 = vsel %vm701, %v703, %v692
  %v710 = vsel %vm700, %v704, %v693
  %v711 = vsel %vm701, %v705, %v694
  %v712 = vsel %vm700, %v706, %v695
  %v713 = vsel %vm701, %v707, %v696
  %714 = vst [vmem:[%s4] sm:$0xff] %v708
  %715 = vst [vmem:[%s4 + $0x8] sm:$0xff] %v709
  %716 = vst [vmem:[%s4 + $0x10] sm:$0xff] %v710
  %717 = vst [vmem:[%s4 + $0x18] sm:$0xff] %v711
  %718 = vst [vmem:[%s4 + $0x20] sm:$0xff] %v712
  %719 = vst [vmem:[%s4 + $0x28] sm:$0xff] %v713
  // Predicated region
  $region18: #{cnn_forward.14} parent=0 // pred_check
    _
  $region19: #{cnn_forward.14} parent=0 // pred_check_branch
    %721 = sbr.rel (0) target = $region21
  $region20: #{cnn_forward.14} parent=0 // pred_region
    _
  $region21: #{cnn_forward.14} parent=0 // pred_fallthru
    _
  // Predicated region
  $region22: #{cnn_forward.14} parent=0 // pred_check
    _
  $region23: #{cnn_forward.14} parent=0 // pred_check_branch
    %723 = sbr.rel (0) target = $region25
  $region24: #{cnn_forward.14} parent=0 // pred_region
    _
  $region25: #{cnn_forward.14} parent=0 // pred_fallthru
    _

// kernel: cnn_forward.15
$region0: #{cnn_forward.15}
  #allocation0 [shape = 'u32[]', space=smem, size = 0x4, offset = 0x4, fixed_abs, tag = 'smem constant byte address 0x4 - core index']
  #allocation1 [shape = 'u32[144,128]{1,0:T(1,128)}', space=vmem, size = 0x12000, scoped, tag = 'internal scratch']
  %s0 = inlined_call_operand.vmem [shape: bf16[24,1152], index: 0, kind: input, shape index: {}]
  %s1 = inlined_call_operand.vmem [shape: bf16[1152,128], index: 1, kind: input, shape index: {}]
  %s2 = inlined_call_operand.vmem [shape: f32[1,128], index: 2, kind: input, shape index: {}]
  %s3 = inlined_call_operand.vmem [shape: f32[1,128], index: 3, kind: input, shape index: {}]
  %s4 = inlined_call_operand.vmem [shape: f32[24,128], index: 4, kind: input, shape index: {}]
  %s5 = inlined_call_operand.vmem [shape: f32[24,128], index: 5, kind: output, shape index: {}]
  %s6 = sld [smem:[#allocation0]]
  $region30: #{cnn_forward.15} parent=0
    _
  %s8 = ssub.s32 1, %s6
  %s9 = scalar_select 0, %s8, %s6
  // Predicated region
  $region2: #{cnn_forward.15} parent=0 // pred_check
    _
  $region3: #{cnn_forward.15} parent=0 // pred_check_branch
    %11 = sbr.rel (0) target = $region5
  $region4: #{cnn_forward.15} parent=0 // pred_region
    _
  $region5: #{cnn_forward.15} parent=0 // pred_fallthru
    _
  // Predicated region
  $region6: #{cnn_forward.15} parent=0 // pred_check
    _
  $region7: #{cnn_forward.15} parent=0 // pred_check_branch
    %13 = sbr.rel (0) target = $region9
  $region8: #{cnn_forward.15} parent=0 // pred_region
    _
  $region9: #{cnn_forward.15} parent=0 // pred_fallthru
    _
  // Predicated region
  $region10: #{cnn_forward.15} parent=0 // pred_check
    _
  $region11: #{cnn_forward.15} parent=0 // pred_check_branch
    %15 = sbr.rel (0) target = $region13
  $region12: #{cnn_forward.15} parent=0 // pred_region
    _
  $region13: #{cnn_forward.15} parent=0 // pred_fallthru
    _
  // Predicated region
  $region14: #{cnn_forward.15} parent=0 // pred_check
    _
  $region15: #{cnn_forward.15} parent=0 // pred_check_branch
    %17 = sbr.rel (0) target = $region17
  $region16: #{cnn_forward.15} parent=0 // pred_region
    _
  $region17: #{cnn_forward.15} parent=0 // pred_fallthru
    _
  // Predicated region
  $region18: #{cnn_forward.15} parent=0 // pred_check
    _
  $region19: #{cnn_forward.15} parent=0 // pred_check_branch
    %19 = sbr.rel (0) target = $region21
  $region20: #{cnn_forward.15} parent=0 // pred_region
    _
  $region21: #{cnn_forward.15} parent=0 // pred_fallthru
    _
  %v21 = vld [vmem:[%s0] sm:$0xff]
  %v22 = vld [vmem:[%s0 + $0x8] sm:$0xff]
  %v23 = vld [vmem:[%s0 + $0x10] sm:$0xff]
  %v24 = vld [vmem:[%s0 + $0x18] sm:$0xff]
  %v25 = vld [vmem:[%s0 + $0x20] sm:$0xf]
  %v26 = vld [vmem:[%s0 + $0x24] sm:$0xff]
  %v27 = vld [vmem:[%s0 + $0x2c] sm:$0xff]
  %v28 = vld [vmem:[%s0 + $0x34] sm:$0xff]
  %v29 = vld [vmem:[%s0 + $0x3c] sm:$0xff]
  %v30 = vld [vmem:[%s0 + $0x44] sm:$0xf]
  %v31 = vld [vmem:[%s0 + $0x48] sm:$0xff]
  %v32 = vld [vmem:[%s0 + $0x50] sm:$0xff]
  %v33 = vld [vmem:[%s0 + $0x58] sm:$0xff]
  %v34 = vld [vmem:[%s0 + $0x60] sm:$0xff]
  %v35 = vld [vmem:[%s0 + $0x68] sm:$0xf]
  %v36 = vld [vmem:[%s1] sm:$0xf]
  %v37 = vld [vmem:[%s1 + $0x4] sm:$0xf]
  %v38 = vld [vmem:[%s1 + $0x8] sm:$0xf]
  %v39 = vld [vmem:[%s1 + $0xc] sm:$0xf]
  %v40 = vld [vmem:[%s1 + $0x10] sm:$0xf]
  %v41 = vld [vmem:[%s1 + $0x14] sm:$0xf]
  %v42 = vld [vmem:[%s1 + $0x18] sm:$0xf]
  %v43 = vld [vmem:[%s1 + $0x1c] sm:$0xf]
  %v44 = vld [vmem:[%s1 + $0x20] sm:$0xf]
  %v45 = vld [vmem:[%s1 + $0x24] sm:$0xf]
  %v46 = vld [vmem:[%s1 + $0x28] sm:$0xf]
  %v47 = vld [vmem:[%s1 + $0x2c] sm:$0xf]
  %v48 = vld [vmem:[%s1 + $0x30] sm:$0xf]
  %v49 = vld [vmem:[%s1 + $0x34] sm:$0xf]
  %v50 = vld [vmem:[%s1 + $0x38] sm:$0xf]
  %v51 = vld [vmem:[%s1 + $0x3c] sm:$0xf]
  %v52 = vld [vmem:[%s1 + $0x40] sm:$0xf]
  %v53 = vld [vmem:[%s1 + $0x44] sm:$0xf]
  %v54 = vld [vmem:[%s1 + $0x48] sm:$0xf]
  %v55 = vld [vmem:[%s1 + $0x4c] sm:$0xf]
  %v56 = vld [vmem:[%s1 + $0x50] sm:$0xf]
  %v57 = vld [vmem:[%s1 + $0x54] sm:$0xf]
  %v58 = vld [vmem:[%s1 + $0x58] sm:$0xf]
  %v59 = vld [vmem:[%s1 + $0x5c] sm:$0xf]
  %v60 = vld [vmem:[%s1 + $0x60] sm:$0xf]
  %v61 = vld [vmem:[%s1 + $0x64] sm:$0xf]
  %v62 = vld [vmem:[%s1 + $0x68] sm:$0xf]
  %v63 = vld [vmem:[%s1 + $0x6c] sm:$0xf]
  %v64 = vld [vmem:[%s1 + $0x70] sm:$0xf]
  %v65 = vld [vmem:[%s1 + $0x74] sm:$0xf]
  %v66 = vld [vmem:[%s1 + $0x78] sm:$0xf]
  %v67 = vld [vmem:[%s1 + $0x7c] sm:$0xf]
  %v68 = vld [vmem:[%s1 + $0x80] sm:$0xf]
  %v69 = vld [vmem:[%s1 + $0x84] sm:$0xf]
  %v70 = vld [vmem:[%s1 + $0x88] sm:$0xf]
  %v71 = vld [vmem:[%s1 + $0x8c] sm:$0xf]
  %v72 = vld [vmem:[%s1 + $0x90] sm:$0xf]
  %v73 = vld [vmem:[%s1 + $0x94] sm:$0xf]
  %v74 = vld [vmem:[%s1 + $0x98] sm:$0xf]
  %v75 = vld [vmem:[%s1 + $0x9c] sm:$0xf]
  %v76 = vld [vmem:[%s1 + $0xa0] sm:$0xf]
  %v77 = vld [vmem:[%s1 + $0xa4] sm:$0xf]
  %v78 = vld [vmem:[%s1 + $0xa8] sm:$0xf]
  %v79 = vld [vmem:[%s1 + $0xac] sm:$0xf]
  %v80 = vld [vmem:[%s1 + $0xb0] sm:$0xf]
  %v81 = vld [vmem:[%s1 + $0xb4] sm:$0xf]
  %v82 = vld [vmem:[%s1 + $0xb8] sm:$0xf]
  %v83 = vld [vmem:[%s1 + $0xbc] sm:$0xf]
  %v84 = vld [vmem:[%s1 + $0xc0] sm:$0xf]
  %v85 = vld [vmem:[%s1 + $0xc4] sm:$0xf]
  %v86 = vld [vmem:[%s1 + $0xc8] sm:$0xf]
  %v87 = vld [vmem:[%s1 + $0xcc] sm:$0xf]
  %v88 = vld [vmem:[%s1 + $0xd0] sm:$0xf]
  %v89 = vld [vmem:[%s1 + $0xd4] sm:$0xf]
  %v90 = vld [vmem:[%s1 + $0xd8] sm:$0xf]
  %v91 = vld [vmem:[%s1 + $0xdc] sm:$0xf]
  %v92 = vld [vmem:[%s1 + $0xe0] sm:$0xf]
  %v93 = vld [vmem:[%s1 + $0xe4] sm:$0xf]
  %v94 = vld [vmem:[%s1 + $0xe8] sm:$0xf]
  %v95 = vld [vmem:[%s1 + $0xec] sm:$0xf]
  %v96 = vld [vmem:[%s1 + $0xf0] sm:$0xf]
  %v97 = vld [vmem:[%s1 + $0xf4] sm:$0xf]
  %v98 = vld [vmem:[%s1 + $0xf8] sm:$0xf]
  %v99 = vld [vmem:[%s1 + $0xfc] sm:$0xf]
  %v100 = vld [vmem:[%s1 + $0x100] sm:$0xf]
  %v101 = vld [vmem:[%s1 + $0x104] sm:$0xf]
  %v102 = vld [vmem:[%s1 + $0x108] sm:$0xf]
  %v103 = vld [vmem:[%s1 + $0x10c] sm:$0xf]
  %v104 = vld [vmem:[%s1 + $0x110] sm:$0xf]
  %v105 = vld [vmem:[%s1 + $0x114] sm:$0xf]
  %v106 = vld [vmem:[%s1 + $0x118] sm:$0xf]
  %v107 = vld [vmem:[%s1 + $0x11c] sm:$0xf]
  %v108 = vld [vmem:[%s1 + $0x120] sm:$0xf]
  %v109 = vld [vmem:[%s1 + $0x124] sm:$0xf]
  %v110 = vld [vmem:[%s1 + $0x128] sm:$0xf]
  %v111 = vld [vmem:[%s1 + $0x12c] sm:$0xf]
  %v112 = vld [vmem:[%s1 + $0x130] sm:$0xf]
  %v113 = vld [vmem:[%s1 + $0x134] sm:$0xf]
  %v114 = vld [vmem:[%s1 + $0x138] sm:$0xf]
  %v115 = vld [vmem:[%s1 + $0x13c] sm:$0xf]
  %v116 = vld [vmem:[%s1 + $0x140] sm:$0xf]
  %v117 = vld [vmem:[%s1 + $0x144] sm:$0xf]
  %v118 = vld [vmem:[%s1 + $0x148] sm:$0xf]
  %v119 = vld [vmem:[%s1 + $0x14c] sm:$0xf]
  %v120 = vld [vmem:[%s1 + $0x150] sm:$0xf]
  %v121 = vld [vmem:[%s1 + $0x154] sm:$0xf]
  %v122 = vld [vmem:[%s1 + $0x158] sm:$0xf]
  %v123 = vld [vmem:[%s1 + $0x15c] sm:$0xf]
  %v124 = vld [vmem:[%s1 + $0x160] sm:$0xf]
  %v125 = vld [vmem:[%s1 + $0x164] sm:$0xf]
  %v126 = vld [vmem:[%s1 + $0x168] sm:$0xf]
  %v127 = vld [vmem:[%s1 + $0x16c] sm:$0xf]
  %v128 = vld [vmem:[%s1 + $0x170] sm:$0xf]
  %v129 = vld [vmem:[%s1 + $0x174] sm:$0xf]
  %v130 = vld [vmem:[%s1 + $0x178] sm:$0xf]
  %v131 = vld [vmem:[%s1 + $0x17c] sm:$0xf]
  %v132 = vld [vmem:[%s1 + $0x180] sm:$0xf]
  %v133 = vld [vmem:[%s1 + $0x184] sm:$0xf]
  %v134 = vld [vmem:[%s1 + $0x188] sm:$0xf]
  %v135 = vld [vmem:[%s1 + $0x18c] sm:$0xf]
  %v136 = vld [vmem:[%s1 + $0x190] sm:$0xf]
  %v137 = vld [vmem:[%s1 + $0x194] sm:$0xf]
  %v138 = vld [vmem:[%s1 + $0x198] sm:$0xf]
  %v139 = vld [vmem:[%s1 + $0x19c] sm:$0xf]
  %v140 = vld [vmem:[%s1 + $0x1a0] sm:$0xf]
  %v141 = vld [vmem:[%s1 + $0x1a4] sm:$0xf]
  %v142 = vld [vmem:[%s1 + $0x1a8] sm:$0xf]
  %v143 = vld [vmem:[%s1 + $0x1ac] sm:$0xf]
  %v144 = vld [vmem:[%s1 + $0x1b0] sm:$0xf]
  %v145 = vld [vmem:[%s1 + $0x1b4] sm:$0xf]
  %v146 = vld [vmem:[%s1 + $0x1b8] sm:$0xf]
  %v147 = vld [vmem:[%s1 + $0x1bc] sm:$0xf]
  %v148 = vld [vmem:[%s1 + $0x1c0] sm:$0xf]
  %v149 = vld [vmem:[%s1 + $0x1c4] sm:$0xf]
  %v150 = vld [vmem:[%s1 + $0x1c8] sm:$0xf]
  %v151 = vld [vmem:[%s1 + $0x1cc] sm:$0xf]
  %v152 = vld [vmem:[%s1 + $0x1d0] sm:$0xf]
  %v153 = vld [vmem:[%s1 + $0x1d4] sm:$0xf]
  %v154 = vld [vmem:[%s1 + $0x1d8] sm:$0xf]
  %v155 = vld [vmem:[%s1 + $0x1dc] sm:$0xf]
  %v156 = vld [vmem:[%s1 + $0x1e0] sm:$0xf]
  %v157 = vld [vmem:[%s1 + $0x1e4] sm:$0xf]
  %v158 = vld [vmem:[%s1 + $0x1e8] sm:$0xf]
  %v159 = vld [vmem:[%s1 + $0x1ec] sm:$0xf]
  %v160 = vld [vmem:[%s1 + $0x1f0] sm:$0xf]
  %v161 = vld [vmem:[%s1 + $0x1f4] sm:$0xf]
  %v162 = vld [vmem:[%s1 + $0x1f8] sm:$0xf]
  %v163 = vld [vmem:[%s1 + $0x1fc] sm:$0xf]
  %v164 = vld [vmem:[%s1 + $0x200] sm:$0xf]
  %v165 = vld [vmem:[%s1 + $0x204] sm:$0xf]
  %v166 = vld [vmem:[%s1 + $0x208] sm:$0xf]
  %v167 = vld [vmem:[%s1 + $0x20c] sm:$0xf]
  %v168 = vld [vmem:[%s1 + $0x210] sm:$0xf]
  %v169 = vld [vmem:[%s1 + $0x214] sm:$0xf]
  %v170 = vld [vmem:[%s1 + $0x218] sm:$0xf]
  %v171 = vld [vmem:[%s1 + $0x21c] sm:$0xf]
  %v172 = vld [vmem:[%s1 + $0x220] sm:$0xf]
  %v173 = vld [vmem:[%s1 + $0x224] sm:$0xf]
  %v174 = vld [vmem:[%s1 + $0x228] sm:$0xf]
  %v175 = vld [vmem:[%s1 + $0x22c] sm:$0xf]
  %v176 = vld [vmem:[%s1 + $0x230] sm:$0xf]
  %v177 = vld [vmem:[%s1 + $0x234] sm:$0xf]
  %v178 = vld [vmem:[%s1 + $0x238] sm:$0xf]
  %v179 = vld [vmem:[%s1 + $0x23c] sm:$0xf]
  %v195 = vunpack.c.l.b16 %v21
  %v196 = vunpack.c.h.b16 %v21
  %v197 = vunpack.c.l.b16 %v22
  %v198 = vunpack.c.h.b16 %v22
  %v199 = vunpack.c.l.b16 %v23
  %v200 = vunpack.c.h.b16 %v23
  %v201 = vunpack.c.l.b16 %v24
  %v202 = vunpack.c.h.b16 %v24
  %v203 = vunpack.c.l.b16 %v25
  %v204 = vunpack.c.l.b16 %v26
  %v205 = vunpack.c.h.b16 %v26
  %v206 = vunpack.c.l.b16 %v27
  %v207 = vunpack.c.h.b16 %v27
  %v208 = vunpack.c.l.b16 %v28
  %v209 = vunpack.c.h.b16 %v28
  %v210 = vunpack.c.l.b16 %v29
  %v211 = vunpack.c.h.b16 %v29
  %v212 = vunpack.c.l.b16 %v30
  %v213 = vunpack.c.l.b16 %v31
  %v214 = vunpack.c.h.b16 %v31
  %v215 = vunpack.c.l.b16 %v32
  %v216 = vunpack.c.h.b16 %v32
  %v217 = vunpack.c.l.b16 %v33
  %v218 = vunpack.c.h.b16 %v33
  %v219 = vunpack.c.l.b16 %v34
  %v220 = vunpack.c.h.b16 %v34
  %v221 = vunpack.c.l.b16 %v35
  %v222 = vpack.c.b16 %v204, %v195
  %v223 = vpack.c.b16 %v205, %v196
  %v224 = vpack.c.b16 %v206, %v197
  %v225 = vpack.c.b16 %v207, %v198
  %v226 = vpack.c.b16 %v208, %v199
  %v227 = vpack.c.b16 %v209, %v200
  %v228 = vpack.c.b16 %v210, %v201
  %v229 = vpack.c.b16 %v211, %v202
  %v230 = vpack.c.b16 %v212, %v203
  %v231 = vpack.c.b16 %v213, %v213
  %v232 = vpack.c.b16 %v214, %v214
  %v233 = vpack.c.b16 %v215, %v215
  %v234 = vpack.c.b16 %v216, %v216
  %v235 = vpack.c.b16 %v217, %v217
  %v236 = vpack.c.b16 %v218, %v218
  %v237 = vpack.c.b16 %v219, %v219
  %v238 = vpack.c.b16 %v220, %v220
  %v239 = vpack.c.b16 %v221, %v221
  %v402 = vunpack.c.l.b16 %v36
  %v403 = vunpack.c.l.b16 %v37
  %v404 = vunpack.c.l.b16 %v38
  %v405 = vunpack.c.l.b16 %v39
  %v406 = vunpack.c.l.b16 %v40
  %v407 = vunpack.c.l.b16 %v41
  %v408 = vunpack.c.l.b16 %v42
  %v409 = vunpack.c.l.b16 %v43
  %v410 = vunpack.c.l.b16 %v44
  %v411 = vunpack.c.l.b16 %v45
  %v412 = vunpack.c.l.b16 %v46
  %v413 = vunpack.c.l.b16 %v47
  %v414 = vunpack.c.l.b16 %v48
  %v415 = vunpack.c.l.b16 %v49
  %v416 = vunpack.c.l.b16 %v50
  %v417 = vunpack.c.l.b16 %v51
  %v418 = vunpack.c.l.b16 %v52
  %v419 = vunpack.c.l.b16 %v53
  %v420 = vunpack.c.l.b16 %v54
  %v421 = vunpack.c.l.b16 %v55
  %v422 = vunpack.c.l.b16 %v56
  %v423 = vunpack.c.l.b16 %v57
  %v424 = vunpack.c.l.b16 %v58
  %v425 = vunpack.c.l.b16 %v59
  %v426 = vunpack.c.l.b16 %v60
  %v427 = vunpack.c.l.b16 %v61
  %v428 = vunpack.c.l.b16 %v62
  %v429 = vunpack.c.l.b16 %v63
  %v430 = vunpack.c.l.b16 %v64
  %v431 = vunpack.c.l.b16 %v65
  %v432 = vunpack.c.l.b16 %v66
  %v433 = vunpack.c.l.b16 %v67
  %v434 = vunpack.c.l.b16 %v68
  %v435 = vunpack.c.l.b16 %v69
  %v436 = vunpack.c.l.b16 %v70
  %v437 = vunpack.c.l.b16 %v71
  %v438 = vunpack.c.l.b16 %v72
  %v439 = vunpack.c.l.b16 %v73
  %v440 = vunpack.c.l.b16 %v74
  %v441 = vunpack.c.l.b16 %v75
  %v442 = vunpack.c.l.b16 %v76
  %v443 = vunpack.c.l.b16 %v77
  %v444 = vunpack.c.l.b16 %v78
  %v445 = vunpack.c.l.b16 %v79
  %v446 = vunpack.c.l.b16 %v80
  %v447 = vunpack.c.l.b16 %v81
  %v448 = vunpack.c.l.b16 %v82
  %v449 = vunpack.c.l.b16 %v83
  %v450 = vunpack.c.l.b16 %v84
  %v451 = vunpack.c.l.b16 %v85
  %v452 = vunpack.c.l.b16 %v86
  %v453 = vunpack.c.l.b16 %v87
  %v454 = vunpack.c.l.b16 %v88
  %v455 = vunpack.c.l.b16 %v89
  %v456 = vunpack.c.l.b16 %v90
  %v457 = vunpack.c.l.b16 %v91
  %v458 = vunpack.c.l.b16 %v92
  %v459 = vunpack.c.l.b16 %v93
  %v460 = vunpack.c.l.b16 %v94
  %v461 = vunpack.c.l.b16 %v95
  %v462 = vunpack.c.l.b16 %v96
  %v463 = vunpack.c.l.b16 %v97
  %v464 = vunpack.c.l.b16 %v98
  %v465 = vunpack.c.l.b16 %v99
  %v466 = vunpack.c.l.b16 %v100
  %v467 = vunpack.c.l.b16 %v101
  %v468 = vunpack.c.l.b16 %v102
  %v469 = vunpack.c.l.b16 %v103
  %v470 = vunpack.c.l.b16 %v104
  %v471 = vunpack.c.l.b16 %v105
  %v472 = vunpack.c.l.b16 %v106
  %v473 = vunpack.c.l.b16 %v107
  %v474 = vunpack.c.l.b16 %v108
  %v475 = vunpack.c.l.b16 %v109
  %v476 = vunpack.c.l.b16 %v110
  %v477 = vunpack.c.l.b16 %v111
  %v478 = vunpack.c.l.b16 %v112
  %v479 = vunpack.c.l.b16 %v113
  %v480 = vunpack.c.l.b16 %v114
  %v481 = vunpack.c.l.b16 %v115
  %v482 = vunpack.c.l.b16 %v116
  %v483 = vunpack.c.l.b16 %v117
  %v484 = vunpack.c.l.b16 %v118
  %v485 = vunpack.c.l.b16 %v119
  %v486 = vunpack.c.l.b16 %v120
  %v487 = vunpack.c.l.b16 %v121
  %v488 = vunpack.c.l.b16 %v122
  %v489 = vunpack.c.l.b16 %v123
  %v490 = vunpack.c.l.b16 %v124
  %v491 = vunpack.c.l.b16 %v125
  %v492 = vunpack.c.l.b16 %v126
  %v493 = vunpack.c.l.b16 %v127
  %v494 = vunpack.c.l.b16 %v128
  %v495 = vunpack.c.l.b16 %v129
  %v496 = vunpack.c.l.b16 %v130
  %v497 = vunpack.c.l.b16 %v131
  %v498 = vunpack.c.l.b16 %v132
  %v499 = vunpack.c.l.b16 %v133
  %v500 = vunpack.c.l.b16 %v134
  %v501 = vunpack.c.l.b16 %v135
  %v502 = vunpack.c.l.b16 %v136
  %v503 = vunpack.c.l.b16 %v137
  %v504 = vunpack.c.l.b16 %v138
  %v505 = vunpack.c.l.b16 %v139
  %v506 = vunpack.c.l.b16 %v140
  %v507 = vunpack.c.l.b16 %v141
  %v508 = vunpack.c.l.b16 %v142
  %v509 = vunpack.c.l.b16 %v143
  %v510 = vunpack.c.l.b16 %v144
  %v511 = vunpack.c.l.b16 %v145
  %v512 = vunpack.c.l.b16 %v146
  %v513 = vunpack.c.l.b16 %v147
  %v514 = vunpack.c.l.b16 %v148
  %v515 = vunpack.c.l.b16 %v149
  %v516 = vunpack.c.l.b16 %v150
  %v517 = vunpack.c.l.b16 %v151
  %v518 = vunpack.c.l.b16 %v152
  %v519 = vunpack.c.l.b16 %v153
  %v520 = vunpack.c.l.b16 %v154
  %v521 = vunpack.c.l.b16 %v155
  %v522 = vunpack.c.l.b16 %v156
  %v523 = vunpack.c.l.b16 %v157
  %v524 = vunpack.c.l.b16 %v158
  %v525 = vunpack.c.l.b16 %v159
  %v526 = vunpack.c.l.b16 %v160
  %v527 = vunpack.c.l.b16 %v161
  %v528 = vunpack.c.l.b16 %v162
  %v529 = vunpack.c.l.b16 %v163
  %v530 = vunpack.c.l.b16 %v164
  %v531 = vunpack.c.l.b16 %v165
  %v532 = vunpack.c.l.b16 %v166
  %v533 = vunpack.c.l.b16 %v167
  %v534 = vunpack.c.l.b16 %v168
  %v535 = vunpack.c.l.b16 %v169
  %v536 = vunpack.c.l.b16 %v170
  %v537 = vunpack.c.l.b16 %v171
  %v538 = vunpack.c.l.b16 %v172
  %v539 = vunpack.c.l.b16 %v173
  %v540 = vunpack.c.l.b16 %v174
  %v541 = vunpack.c.l.b16 %v175
  %v542 = vunpack.c.l.b16 %v176
  %v543 = vunpack.c.l.b16 %v177
  %v544 = vunpack.c.l.b16 %v178
  %v545 = vunpack.c.l.b16 %v179
  %v546 = vpack.c.b16 %v403, %v402
  %v547 = vpack.c.b16 %v405, %v404
  %v548 = vpack.c.b16 %v407, %v406
  %v549 = vpack.c.b16 %v409, %v408
  %v550 = vpack.c.b16 %v411, %v410
  %v551 = vpack.c.b16 %v413, %v412
  %v552 = vpack.c.b16 %v415, %v414
  %v553 = vpack.c.b16 %v417, %v416
  %v554 = vpack.c.b16 %v419, %v418
  %v555 = vpack.c.b16 %v421, %v420
  %v556 = vpack.c.b16 %v423, %v422
  %v557 = vpack.c.b16 %v425, %v424
  %v558 = vpack.c.b16 %v427, %v426
  %v559 = vpack.c.b16 %v429, %v428
  %v560 = vpack.c.b16 %v431, %v430
  %v561 = vpack.c.b16 %v433, %v432
  %v562 = vpack.c.b16 %v435, %v434
  %v563 = vpack.c.b16 %v437, %v436
  %v564 = vpack.c.b16 %v439, %v438
  %v565 = vpack.c.b16 %v441, %v440
  %v566 = vpack.c.b16 %v443, %v442
  %v567 = vpack.c.b16 %v445, %v444
  %v568 = vpack.c.b16 %v447, %v446
  %v569 = vpack.c.b16 %v449, %v448
  %v570 = vpack.c.b16 %v451, %v450
  %v571 = vpack.c.b16 %v453, %v452
  %v572 = vpack.c.b16 %v455, %v454
  %v573 = vpack.c.b16 %v457, %v456
  %v574 = vpack.c.b16 %v459, %v458
  %v575 = vpack.c.b16 %v461, %v460
  %v576 = vpack.c.b16 %v463, %v462
  %v577 = vpack.c.b16 %v465, %v464
  %v578 = vpack.c.b16 %v467, %v466
  %v579 = vpack.c.b16 %v469, %v468
  %v580 = vpack.c.b16 %v471, %v470
  %v581 = vpack.c.b16 %v473, %v472
  %v582 = vpack.c.b16 %v475, %v474
  %v583 = vpack.c.b16 %v477, %v476
  %v584 = vpack.c.b16 %v479, %v478
  %v585 = vpack.c.b16 %v481, %v480
  %v586 = vpack.c.b16 %v483, %v482
  %v587 = vpack.c.b16 %v485, %v484
  %v588 = vpack.c.b16 %v487, %v486
  %v589 = vpack.c.b16 %v489, %v488
  %v590 = vpack.c.b16 %v491, %v490
  %v591 = vpack.c.b16 %v493, %v492
  %v592 = vpack.c.b16 %v495, %v494
  %v593 = vpack.c.b16 %v497, %v496
  %v594 = vpack.c.b16 %v499, %v498
  %v595 = vpack.c.b16 %v501, %v500
  %v596 = vpack.c.b16 %v503, %v502
  %v597 = vpack.c.b16 %v505, %v504
  %v598 = vpack.c.b16 %v507, %v506
  %v599 = vpack.c.b16 %v509, %v508
  %v600 = vpack.c.b16 %v511, %v510
  %v601 = vpack.c.b16 %v513, %v512
  %v602 = vpack.c.b16 %v515, %v514
  %v603 = vpack.c.b16 %v517, %v516
  %v604 = vpack.c.b16 %v519, %v518
  %v605 = vpack.c.b16 %v521, %v520
  %v606 = vpack.c.b16 %v523, %v522
  %v607 = vpack.c.b16 %v525, %v524
  %v608 = vpack.c.b16 %v527, %v526
  %v609 = vpack.c.b16 %v529, %v528
  %v610 = vpack.c.b16 %v531, %v530
  %v611 = vpack.c.b16 %v533, %v532
  %v612 = vpack.c.b16 %v535, %v534
  %v613 = vpack.c.b16 %v537, %v536
  %v614 = vpack.c.b16 %v539, %v538
  %v615 = vpack.c.b16 %v541, %v540
  %v616 = vpack.c.b16 %v543, %v542
  %v617 = vpack.c.b16 %v545, %v544
  %690 = vmatprep.subr.bf16.mxu0 0
  %691 = vmatpush1.bf16.msra.mxu0 %v553
  %692 = vmatprep.subr.bf16.mxu0 0
  %693 = vmatpush1.bf16.msra.mxu0 %v552
  %694 = vmatprep.subr.bf16.mxu0 0
  %695 = vmatpush1.bf16.msra.mxu0 %v551
  %696 = vmatprep.subr.bf16.mxu0 0
  %697 = vmatpush1.bf16.msra.mxu0 %v550
  %698 = vmatprep.subr.bf16.mxu0 0
  %699 = vmatpush1.bf16.msra.mxu0 %v549
  %700 = vmatprep.subr.bf16.mxu0 0
  %701 = vmatpush1.bf16.msra.mxu0 %v548
  %702 = vmatprep.subr.bf16.mxu0 0
  %703 = vmatpush1.bf16.msra.mxu0 %v547
  %704 = vmatprep.subr.bf16.mxu0 0
  %705 = vmatpush1.bf16.msra.mxu0 %v546
  %706 = vmatprep.subr.bf16.mxu0 0
  %707 = vmatpush2.bf16.msra.mxu0 %v561
  %708 = vmatprep.subr.bf16.mxu0 0
  %709 = vmatpush2.bf16.msra.mxu0 %v560
  %710 = vmatprep.subr.bf16.mxu0 0
  %711 = vmatpush2.bf16.msra.mxu0 %v559
  %712 = vmatprep.subr.bf16.mxu0 0
  %713 = vmatpush2.bf16.msra.mxu0 %v558
  %714 = vmatprep.subr.bf16.mxu0 0
  %715 = vmatpush2.bf16.msra.mxu0 %v557
  %716 = vmatprep.subr.bf16.mxu0 0
  %717 = vmatpush2.bf16.msra.mxu0 %v556
  %718 = vmatprep.subr.bf16.mxu0 0
  %719 = vmatpush2.bf16.msra.mxu0 %v555
  %720 = vmatprep.subr.bf16.mxu0 0
  %721 = vmatpush2.bf16.msra.mxu0 %v554
  %722 = vmatprep.mubr.bf16.mxu0 %v223
  %723 = vmatmul.mubr.bf16.gmra.mxu0 %v222
  %v724 = vpop.f32.mrf.mxu0
  %v725 = vadd.f32 0.0, %v724
  %v726 = vpop.f32.mrf.mxu0
  %v727 = vpop.f32.mrf.mxu0
  %v728 = vadd.f32 0.0, %v727
  %v729 = vpop.f32.mrf.mxu0
  %730 = vmatprep.mubr.bf16.mxu0 %v232
  %731 = vmatmul.mubr.bf16.gmra.mxu0 %v231
  %v732 = vpop.f32.mrf.mxu0
  %v733 = vadd.f32 0.0, %v732
  %v734 = vpop.f32.mrf.mxu0
  %v735 = vpop.f32.mrf.mxu0
  %v736 = vpop.f32.mrf.mxu0
  %737 = vdwg.mxu0
  %738 = vmatprep.subr.bf16.mxu0 0
  %739 = vmatpush1.bf16.msra.mxu0 %v569
  %740 = vmatprep.subr.bf16.mxu0 0
  %741 = vmatpush1.bf16.msra.mxu0 %v568
  %742 = vmatprep.subr.bf16.mxu0 0
  %743 = vmatpush1.bf16.msra.mxu0 %v567
  %744 = vmatprep.subr.bf16.mxu0 0
  %745 = vmatpush1.bf16.msra.mxu0 %v566
  %746 = vmatprep.subr.bf16.mxu0 0
  %747 = vmatpush1.bf16.msra.mxu0 %v565
  %748 = vmatprep.subr.bf16.mxu0 0
  %749 = vmatpush1.bf16.msra.mxu0 %v564
  %750 = vmatprep.subr.bf16.mxu0 0
  %751 = vmatpush1.bf16.msra.mxu0 %v563
  %752 = vmatprep.subr.bf16.mxu0 0
  %753 = vmatpush1.bf16.msra.mxu0 %v562
  %754 = vmatprep.subr.bf16.mxu0 0
  %755 = vmatpush2.bf16.msra.mxu0 %v577
  %756 = vmatprep.subr.bf16.mxu0 0
  %757 = vmatpush2.bf16.msra.mxu0 %v576
  %758 = vmatprep.subr.bf16.mxu0 0
  %759 = vmatpush2.bf16.msra.mxu0 %v575
  %760 = vmatprep.subr.bf16.mxu0 0
  %761 = vmatpush2.bf16.msra.mxu0 %v574
  %762 = vmatprep.subr.bf16.mxu0 0
  %763 = vmatpush2.bf16.msra.mxu0 %v573
  %764 = vmatprep.subr.bf16.mxu0 0
  %765 = vmatpush2.bf16.msra.mxu0 %v572
  %766 = vmatprep.subr.bf16.mxu0 0
  %767 = vmatpush2.bf16.msra.mxu0 %v571
  %768 = vmatprep.subr.bf16.mxu0 0
  %769 = vmatpush2.bf16.msra.mxu0 %v570
  %770 = vmatprep.mubr.bf16.mxu0 %v225
  %771 = vmatmul.mubr.bf16.gmra.mxu0 %v224
  %v772 = vpop.f32.mrf.mxu0
  %v773 = vadd.f32 %v725, %v772
  %v774 = vpop.f32.mrf.mxu0
  %v775 = vpop.f32.mrf.mxu0
  %v776 = vadd.f32 %v728, %v775
  %v777 = vpop.f32.mrf.mxu0
  %778 = vmatprep.mubr.bf16.mxu0 %v234
  %779 = vmatmul.mubr.bf16.gmra.mxu0 %v233
  %v780 = vpop.f32.mrf.mxu0
  %v781 = vadd.f32 %v733, %v780
  %v782 = vpop.f32.mrf.mxu0
  %v783 = vpop.f32.mrf.mxu0
  %v784 = vpop.f32.mrf.mxu0
  %785 = vdwg.mxu0
  %786 = vmatprep.subr.bf16.mxu0 0
  %787 = vmatpush1.bf16.msra.mxu0 %v585
  %788 = vmatprep.subr.bf16.mxu0 0
  %789 = vmatpush1.bf16.msra.mxu0 %v584
  %790 = vmatprep.subr.bf16.mxu0 0
  %791 = vmatpush1.bf16.msra.mxu0 %v583
  %792 = vmatprep.subr.bf16.mxu0 0
  %793 = vmatpush1.bf16.msra.mxu0 %v582
  %794 = vmatprep.subr.bf16.mxu0 0
  %795 = vmatpush1.bf16.msra.mxu0 %v581
  %796 = vmatprep.subr.bf16.mxu0 0
  %797 = vmatpush1.bf16.msra.mxu0 %v580
  %798 = vmatprep.subr.bf16.mxu0 0
  %799 = vmatpush1.bf16.msra.mxu0 %v579
  %800 = vmatprep.subr.bf16.mxu0 0
  %801 = vmatpush1.bf16.msra.mxu0 %v578
  %802 = vmatprep.subr.bf16.mxu0 0
  %803 = vmatpush2.bf16.msra.mxu0 %v593
  %804 = vmatprep.subr.bf16.mxu0 0
  %805 = vmatpush2.bf16.msra.mxu0 %v592
  %806 = vmatprep.subr.bf16.mxu0 0
  %807 = vmatpush2.bf16.msra.mxu0 %v591
  %808 = vmatprep.subr.bf16.mxu0 0
  %809 = vmatpush2.bf16.msra.mxu0 %v590
  %810 = vmatprep.subr.bf16.mxu0 0
  %811 = vmatpush2.bf16.msra.mxu0 %v589
  %812 = vmatprep.subr.bf16.mxu0 0
  %813 = vmatpush2.bf16.msra.mxu0 %v588
  %814 = vmatprep.subr.bf16.mxu0 0
  %815 = vmatpush2.bf16.msra.mxu0 %v587
  %816 = vmatprep.subr.bf16.mxu0 0
  %817 = vmatpush2.bf16.msra.mxu0 %v586
  %818 = vmatprep.mubr.bf16.mxu0 %v227
  %819 = vmatmul.mubr.bf16.gmra.mxu0 %v226
  %v820 = vpop.f32.mrf.mxu0
  %v821 = vadd.f32 %v773, %v820
  %v822 = vpop.f32.mrf.mxu0
  %v823 = vpop.f32.mrf.mxu0
  %v824 = vadd.f32 %v776, %v823
  %v825 = vpop.f32.mrf.mxu0
  %826 = vmatprep.mubr.bf16.mxu0 %v236
  %827 = vmatmul.mubr.bf16.gmra.mxu0 %v235
  %v828 = vpop.f32.mrf.mxu0
  %v829 = vadd.f32 %v781, %v828
  %v830 = vpop.f32.mrf.mxu0
  %v831 = vpop.f32.mrf.mxu0
  %v832 = vpop.f32.mrf.mxu0
  %833 = vdwg.mxu0
  %834 = vmatprep.subr.bf16.mxu0 0
  %835 = vmatpush1.bf16.msra.mxu0 %v601
  %836 = vmatprep.subr.bf16.mxu0 0
  %837 = vmatpush1.bf16.msra.mxu0 %v600
  %838 = vmatprep.subr.bf16.mxu0 0
  %839 = vmatpush1.bf16.msra.mxu0 %v599
  %840 = vmatprep.subr.bf16.mxu0 0
  %841 = vmatpush1.bf16.msra.mxu0 %v598
  %842 = vmatprep.subr.bf16.mxu0 0
  %843 = vmatpush1.bf16.msra.mxu0 %v597
  %844 = vmatprep.subr.bf16.mxu0 0
  %845 = vmatpush1.bf16.msra.mxu0 %v596
  %846 = vmatprep.subr.bf16.mxu0 0
  %847 = vmatpush1.bf16.msra.mxu0 %v595
  %848 = vmatprep.subr.bf16.mxu0 0
  %849 = vmatpush1.bf16.msra.mxu0 %v594
  %850 = vmatprep.subr.bf16.mxu0 0
  %851 = vmatpush2.bf16.msra.mxu0 %v609
  %852 = vmatprep.subr.bf16.mxu0 0
  %853 = vmatpush2.bf16.msra.mxu0 %v608
  %854 = vmatprep.subr.bf16.mxu0 0
  %855 = vmatpush2.bf16.msra.mxu0 %v607
  %856 = vmatprep.subr.bf16.mxu0 0
  %857 = vmatpush2.bf16.msra.mxu0 %v606
  %858 = vmatprep.subr.bf16.mxu0 0
  %859 = vmatpush2.bf16.msra.mxu0 %v605
  %860 = vmatprep.subr.bf16.mxu0 0
  %861 = vmatpush2.bf16.msra.mxu0 %v604
  %862 = vmatprep.subr.bf16.mxu0 0
  %863 = vmatpush2.bf16.msra.mxu0 %v603
  %864 = vmatprep.subr.bf16.mxu0 0
  %865 = vmatpush2.bf16.msra.mxu0 %v602
  %866 = vmatprep.mubr.bf16.mxu0 %v229
  %867 = vmatmul.mubr.bf16.gmra.mxu0 %v228
  %v868 = vpop.f32.mrf.mxu0
  %v869 = vadd.f32 %v821, %v868
  %v870 = vpop.f32.mrf.mxu0
  %v871 = vpop.f32.mrf.mxu0
  %v872 = vadd.f32 %v824, %v871
  %v873 = vpop.f32.mrf.mxu0
  %874 = vmatprep.mubr.bf16.mxu0 %v238
  %875 = vmatmul.mubr.bf16.gmra.mxu0 %v237
  %v876 = vpop.f32.mrf.mxu0
  %v877 = vadd.f32 %v829, %v876
  %v878 = vpop.f32.mrf.mxu0
  %v879 = vpop.f32.mrf.mxu0
  %v880 = vpop.f32.mrf.mxu0
  %881 = vdwg.mxu0
  %882 = vmatprep.subr.bf16.mxu0 0
  %883 = vmatpush1.bf16.msra.mxu0 %v617
  %884 = vmatprep.subr.bf16.mxu0 0
  %885 = vmatpush1.bf16.msra.mxu0 %v616
  %886 = vmatprep.subr.bf16.mxu0 0
  %887 = vmatpush1.bf16.msra.mxu0 %v615
  %888 = vmatprep.subr.bf16.mxu0 0
  %889 = vmatpush1.bf16.msra.mxu0 %v614
  %890 = vmatprep.subr.bf16.mxu0 0
  %891 = vmatpush1.bf16.msra.mxu0 %v613
  %892 = vmatprep.subr.bf16.mxu0 0
  %893 = vmatpush1.bf16.msra.mxu0 %v612
  %894 = vmatprep.subr.bf16.mxu0 0
  %895 = vmatpush1.bf16.msra.mxu0 %v611
  %896 = vmatprep.subr.bf16.mxu0 0
  %897 = vmatpush1.bf16.msra.mxu0 %v610
  %898 = vmatprep.subr.bf16.mxu0 0
  %899 = vmatpush2.bf16.msra.mxu0 0
  %900 = vmatprep.subr.bf16.mxu0 0
  %901 = vmatpush2.bf16.msra.mxu0 0
  %902 = vmatprep.subr.bf16.mxu0 0
  %903 = vmatpush2.bf16.msra.mxu0 0
  %904 = vmatprep.subr.bf16.mxu0 0
  %905 = vmatpush2.bf16.msra.mxu0 0
  %906 = vmatprep.subr.bf16.mxu0 0
  %907 = vmatpush2.bf16.msra.mxu0 0
  %908 = vmatprep.subr.bf16.mxu0 0
  %909 = vmatpush2.bf16.msra.mxu0 0
  %910 = vmatprep.subr.bf16.mxu0 0
  %911 = vmatpush2.bf16.msra.mxu0 0
  %912 = vmatprep.subr.bf16.mxu0 0
  %913 = vmatpush2.bf16.msra.mxu0 0
  %914 = vmatprep.mubr.bf16.mxu0 0
  %915 = vmatmul.mubr.bf16.gmra.mxu0 %v230
  %v916 = vpop.f32.mrf.mxu0
  %v917 = vadd.f32 %v869, %v916
  %v918 = vpop.f32.mrf.mxu0
  %v919 = vpop.f32.mrf.mxu0
  %v920 = vadd.f32 %v872, %v919
  %v921 = vpop.f32.mrf.mxu0
  %922 = vmatprep.mubr.bf16.mxu0 0
  %923 = vmatmul.mubr.bf16.gmra.mxu0 %v239
  %v924 = vpop.f32.mrf.mxu0
  %v925 = vadd.f32 %v877, %v924
  %v926 = vpop.f32.mrf.mxu0
  %v927 = vpop.f32.mrf.mxu0
  %v928 = vpop.f32.mrf.mxu0
  %929 = vdwg.mxu0
  %v930 = vld [vmem:[%s2] sm:$0x1]
  %v932 = vlaneseq
  %v933 = vshrl.u32 %v932, 7
  %v934 = vsub.s32 0, %v933
  %v935 = vrot.slane %v930, %v934
  %v937 = vmul.f32 %v917, %v935
  %v938 = vmul.f32 %v920, %v935
  %v939 = vmul.f32 %v925, %v935
  %v940 = vld [vmem:[%s3] sm:$0x1]
  %v942 = vlaneseq
  %v943 = vshrl.u32 %v942, 7
  %v944 = vsub.s32 0, %v943
  %v945 = vrot.slane %v940, %v944
  %v947 = vadd.f32 %v937, %v945
  %v948 = vadd.f32 %v938, %v945
  %v949 = vadd.f32 %v939, %v945
  %v950 = vld [vmem:[%s4] sm:$0xff]
  %v951 = vld [vmem:[%s4 + $0x8] sm:$0xff]
  %v952 = vld [vmem:[%s4 + $0x10] sm:$0xff]
  %v953 = vadd.f32 %v947, %v950
  %v954 = vadd.f32 %v948, %v951
  %v955 = vadd.f32 %v949, %v952
  %v956 = vmax.f32 %v953, 0.0
  %v957 = vmax.f32 %v954, 0.0
  %v958 = vmax.f32 %v955, 0.0
  %959 = vst [vmem:[%s5] sm:$0xff] %v956
  %960 = vst [vmem:[%s5 + $0x8] sm:$0xff] %v957
  %961 = vst [vmem:[%s5 + $0x10] sm:$0xff] %v958
  // Predicated region
  $region22: #{cnn_forward.15} parent=0 // pred_check
    _
  $region23: #{cnn_forward.15} parent=0 // pred_check_branch
    %963 = sbr.rel (0) target = $region25
  $region24: #{cnn_forward.15} parent=0 // pred_region
    _
  $region25: #{cnn_forward.15} parent=0 // pred_fallthru
    _
  // Predicated region
  $region26: #{cnn_forward.15} parent=0 // pred_check
    _
  $region27: #{cnn_forward.15} parent=0 // pred_check_branch
    %965 = sbr.rel (0) target = $region29
  $region28: #{cnn_forward.15} parent=0 // pred_region
    _
  $region29: #{cnn_forward.15} parent=0 // pred_fallthru
    _

// kernel: cnn_forward.16
$region0: #{cnn_forward.16}
  #allocation0 [shape = 'u32[]', space=smem, size = 0x4, offset = 0x4, fixed_abs, tag = 'smem constant byte address 0x4 - core index']
  #allocation1 [shape = 'u32[144,128]{1,0:T(1,128)}', space=vmem, size = 0x12000, scoped, tag = 'internal scratch']
  %s0 = inlined_call_operand.vmem [shape: bf16[24,1152], index: 0, kind: input, shape index: {}]
  %s1 = inlined_call_operand.vmem [shape: bf16[1152,128], index: 1, kind: input, shape index: {}]
  %s2 = inlined_call_operand.vmem [shape: f32[1,128], index: 2, kind: input, shape index: {}]
  %s3 = inlined_call_operand.vmem [shape: f32[1,128], index: 3, kind: input, shape index: {}]
  %s4 = inlined_call_operand.vmem [shape: f32[24,128], index: 4, kind: output, shape index: {}]
  %s5 = sld [smem:[#allocation0]]
  $region26: #{cnn_forward.16} parent=0
    _
  %s7 = ssub.s32 1, %s5
  %s8 = scalar_select 0, %s7, %s5
  // Predicated region
  $region2: #{cnn_forward.16} parent=0 // pred_check
    _
  $region3: #{cnn_forward.16} parent=0 // pred_check_branch
    %10 = sbr.rel (0) target = $region5
  $region4: #{cnn_forward.16} parent=0 // pred_region
    _
  $region5: #{cnn_forward.16} parent=0 // pred_fallthru
    _
  // Predicated region
  $region6: #{cnn_forward.16} parent=0 // pred_check
    _
  $region7: #{cnn_forward.16} parent=0 // pred_check_branch
    %12 = sbr.rel (0) target = $region9
  $region8: #{cnn_forward.16} parent=0 // pred_region
    _
  $region9: #{cnn_forward.16} parent=0 // pred_fallthru
    _
  // Predicated region
  $region10: #{cnn_forward.16} parent=0 // pred_check
    _
  $region11: #{cnn_forward.16} parent=0 // pred_check_branch
    %14 = sbr.rel (0) target = $region13
  $region12: #{cnn_forward.16} parent=0 // pred_region
    _
  $region13: #{cnn_forward.16} parent=0 // pred_fallthru
    _
  // Predicated region
  $region14: #{cnn_forward.16} parent=0 // pred_check
    _
  $region15: #{cnn_forward.16} parent=0 // pred_check_branch
    %16 = sbr.rel (0) target = $region17
  $region16: #{cnn_forward.16} parent=0 // pred_region
    _
  $region17: #{cnn_forward.16} parent=0 // pred_fallthru
    _
  %v18 = vld [vmem:[%s0] sm:$0xff]
  %v19 = vld [vmem:[%s0 + $0x8] sm:$0xff]
  %v20 = vld [vmem:[%s0 + $0x10] sm:$0xff]
  %v21 = vld [vmem:[%s0 + $0x18] sm:$0xff]
  %v22 = vld [vmem:[%s0 + $0x20] sm:$0xf]
  %v23 = vld [vmem:[%s0 + $0x24] sm:$0xff]
  %v24 = vld [vmem:[%s0 + $0x2c] sm:$0xff]
  %v25 = vld [vmem:[%s0 + $0x34] sm:$0xff]
  %v26 = vld [vmem:[%s0 + $0x3c] sm:$0xff]
  %v27 = vld [vmem:[%s0 + $0x44] sm:$0xf]
  %v28 = vld [vmem:[%s0 + $0x48] sm:$0xff]
  %v29 = vld [vmem:[%s0 + $0x50] sm:$0xff]
  %v30 = vld [vmem:[%s0 + $0x58] sm:$0xff]
  %v31 = vld [vmem:[%s0 + $0x60] sm:$0xff]
  %v32 = vld [vmem:[%s0 + $0x68] sm:$0xf]
  %v33 = vld [vmem:[%s1] sm:$0xf]
  %v34 = vld [vmem:[%s1 + $0x4] sm:$0xf]
  %v35 = vld [vmem:[%s1 + $0x8] sm:$0xf]
  %v36 = vld [vmem:[%s1 + $0xc] sm:$0xf]
  %v37 = vld [vmem:[%s1 + $0x10] sm:$0xf]
  %v38 = vld [vmem:[%s1 + $0x14] sm:$0xf]
  %v39 = vld [vmem:[%s1 + $0x18] sm:$0xf]
  %v40 = vld [vmem:[%s1 + $0x1c] sm:$0xf]
  %v41 = vld [vmem:[%s1 + $0x20] sm:$0xf]
  %v42 = vld [vmem:[%s1 + $0x24] sm:$0xf]
  %v43 = vld [vmem:[%s1 + $0x28] sm:$0xf]
  %v44 = vld [vmem:[%s1 + $0x2c] sm:$0xf]
  %v45 = vld [vmem:[%s1 + $0x30] sm:$0xf]
  %v46 = vld [vmem:[%s1 + $0x34] sm:$0xf]
  %v47 = vld [vmem:[%s1 + $0x38] sm:$0xf]
  %v48 = vld [vmem:[%s1 + $0x3c] sm:$0xf]
  %v49 = vld [vmem:[%s1 + $0x40] sm:$0xf]
  %v50 = vld [vmem:[%s1 + $0x44] sm:$0xf]
  %v51 = vld [vmem:[%s1 + $0x48] sm:$0xf]
  %v52 = vld [vmem:[%s1 + $0x4c] sm:$0xf]
  %v53 = vld [vmem:[%s1 + $0x50] sm:$0xf]
  %v54 = vld [vmem:[%s1 + $0x54] sm:$0xf]
  %v55 = vld [vmem:[%s1 + $0x58] sm:$0xf]
  %v56 = vld [vmem:[%s1 + $0x5c] sm:$0xf]
  %v57 = vld [vmem:[%s1 + $0x60] sm:$0xf]
  %v58 = vld [vmem:[%s1 + $0x64] sm:$0xf]
  %v59 = vld [vmem:[%s1 + $0x68] sm:$0xf]
  %v60 = vld [vmem:[%s1 + $0x6c] sm:$0xf]
  %v61 = vld [vmem:[%s1 + $0x70] sm:$0xf]
  %v62 = vld [vmem:[%s1 + $0x74] sm:$0xf]
  %v63 = vld [vmem:[%s1 + $0x78] sm:$0xf]
  %v64 = vld [vmem:[%s1 + $0x7c] sm:$0xf]
  %v65 = vld [vmem:[%s1 + $0x80] sm:$0xf]
  %v66 = vld [vmem:[%s1 + $0x84] sm:$0xf]
  %v67 = vld [vmem:[%s1 + $0x88] sm:$0xf]
  %v68 = vld [vmem:[%s1 + $0x8c] sm:$0xf]
  %v69 = vld [vmem:[%s1 + $0x90] sm:$0xf]
  %v70 = vld [vmem:[%s1 + $0x94] sm:$0xf]
  %v71 = vld [vmem:[%s1 + $0x98] sm:$0xf]
  %v72 = vld [vmem:[%s1 + $0x9c] sm:$0xf]
  %v73 = vld [vmem:[%s1 + $0xa0] sm:$0xf]
  %v74 = vld [vmem:[%s1 + $0xa4] sm:$0xf]
  %v75 = vld [vmem:[%s1 + $0xa8] sm:$0xf]
  %v76 = vld [vmem:[%s1 + $0xac] sm:$0xf]
  %v77 = vld [vmem:[%s1 + $0xb0] sm:$0xf]
  %v78 = vld [vmem:[%s1 + $0xb4] sm:$0xf]
  %v79 = vld [vmem:[%s1 + $0xb8] sm:$0xf]
  %v80 = vld [vmem:[%s1 + $0xbc] sm:$0xf]
  %v81 = vld [vmem:[%s1 + $0xc0] sm:$0xf]
  %v82 = vld [vmem:[%s1 + $0xc4] sm:$0xf]
  %v83 = vld [vmem:[%s1 + $0xc8] sm:$0xf]
  %v84 = vld [vmem:[%s1 + $0xcc] sm:$0xf]
  %v85 = vld [vmem:[%s1 + $0xd0] sm:$0xf]
  %v86 = vld [vmem:[%s1 + $0xd4] sm:$0xf]
  %v87 = vld [vmem:[%s1 + $0xd8] sm:$0xf]
  %v88 = vld [vmem:[%s1 + $0xdc] sm:$0xf]
  %v89 = vld [vmem:[%s1 + $0xe0] sm:$0xf]
  %v90 = vld [vmem:[%s1 + $0xe4] sm:$0xf]
  %v91 = vld [vmem:[%s1 + $0xe8] sm:$0xf]
  %v92 = vld [vmem:[%s1 + $0xec] sm:$0xf]
  %v93 = vld [vmem:[%s1 + $0xf0] sm:$0xf]
  %v94 = vld [vmem:[%s1 + $0xf4] sm:$0xf]
  %v95 = vld [vmem:[%s1 + $0xf8] sm:$0xf]
  %v96 = vld [vmem:[%s1 + $0xfc] sm:$0xf]
  %v97 = vld [vmem:[%s1 + $0x100] sm:$0xf]
  %v98 = vld [vmem:[%s1 + $0x104] sm:$0xf]
  %v99 = vld [vmem:[%s1 + $0x108] sm:$0xf]
  %v100 = vld [vmem:[%s1 + $0x10c] sm:$0xf]
  %v101 = vld [vmem:[%s1 + $0x110] sm:$0xf]
  %v102 = vld [vmem:[%s1 + $0x114] sm:$0xf]
  %v103 = vld [vmem:[%s1 + $0x118] sm:$0xf]
  %v104 = vld [vmem:[%s1 + $0x11c] sm:$0xf]
  %v105 = vld [vmem:[%s1 + $0x120] sm:$0xf]
  %v106 = vld [vmem:[%s1 + $0x124] sm:$0xf]
  %v107 = vld [vmem:[%s1 + $0x128] sm:$0xf]
  %v108 = vld [vmem:[%s1 + $0x12c] sm:$0xf]
  %v109 = vld [vmem:[%s1 + $0x130] sm:$0xf]
  %v110 = vld [vmem:[%s1 + $0x134] sm:$0xf]
  %v111 = vld [vmem:[%s1 + $0x138] sm:$0xf]
  %v112 = vld [vmem:[%s1 + $0x13c] sm:$0xf]
  %v113 = vld [vmem:[%s1 + $0x140] sm:$0xf]
  %v114 = vld [vmem:[%s1 + $0x144] sm:$0xf]
  %v115 = vld [vmem:[%s1 + $0x148] sm:$0xf]
  %v116 = vld [vmem:[%s1 + $0x14c] sm:$0xf]
  %v117 = vld [vmem:[%s1 + $0x150] sm:$0xf]
  %v118 = vld [vmem:[%s1 + $0x154] sm:$0xf]
  %v119 = vld [vmem:[%s1 + $0x158] sm:$0xf]
  %v120 = vld [vmem:[%s1 + $0x15c] sm:$0xf]
  %v121 = vld [vmem:[%s1 + $0x160] sm:$0xf]
  %v122 = vld [vmem:[%s1 + $0x164] sm:$0xf]
  %v123 = vld [vmem:[%s1 + $0x168] sm:$0xf]
  %v124 = vld [vmem:[%s1 + $0x16c] sm:$0xf]
  %v125 = vld [vmem:[%s1 + $0x170] sm:$0xf]
  %v126 = vld [vmem:[%s1 + $0x174] sm:$0xf]
  %v127 = vld [vmem:[%s1 + $0x178] sm:$0xf]
  %v128 = vld [vmem:[%s1 + $0x17c] sm:$0xf]
  %v129 = vld [vmem:[%s1 + $0x180] sm:$0xf]
  %v130 = vld [vmem:[%s1 + $0x184] sm:$0xf]
  %v131 = vld [vmem:[%s1 + $0x188] sm:$0xf]
  %v132 = vld [vmem:[%s1 + $0x18c] sm:$0xf]
  %v133 = vld [vmem:[%s1 + $0x190] sm:$0xf]
  %v134 = vld [vmem:[%s1 + $0x194] sm:$0xf]
  %v135 = vld [vmem:[%s1 + $0x198] sm:$0xf]
  %v136 = vld [vmem:[%s1 + $0x19c] sm:$0xf]
  %v137 = vld [vmem:[%s1 + $0x1a0] sm:$0xf]
  %v138 = vld [vmem:[%s1 + $0x1a4] sm:$0xf]
  %v139 = vld [vmem:[%s1 + $0x1a8] sm:$0xf]
  %v140 = vld [vmem:[%s1 + $0x1ac] sm:$0xf]
  %v141 = vld [vmem:[%s1 + $0x1b0] sm:$0xf]
  %v142 = vld [vmem:[%s1 + $0x1b4] sm:$0xf]
  %v143 = vld [vmem:[%s1 + $0x1b8] sm:$0xf]
  %v144 = vld [vmem:[%s1 + $0x1bc] sm:$0xf]
  %v145 = vld [vmem:[%s1 + $0x1c0] sm:$0xf]
  %v146 = vld [vmem:[%s1 + $0x1c4] sm:$0xf]
  %v147 = vld [vmem:[%s1 + $0x1c8] sm:$0xf]
  %v148 = vld [vmem:[%s1 + $0x1cc] sm:$0xf]
  %v149 = vld [vmem:[%s1 + $0x1d0] sm:$0xf]
  %v150 = vld [vmem:[%s1 + $0x1d4] sm:$0xf]
  %v151 = vld [vmem:[%s1 + $0x1d8] sm:$0xf]
  %v152 = vld [vmem:[%s1 + $0x1dc] sm:$0xf]
  %v153 = vld [vmem:[%s1 + $0x1e0] sm:$0xf]
  %v154 = vld [vmem:[%s1 + $0x1e4] sm:$0xf]
  %v155 = vld [vmem:[%s1 + $0x1e8] sm:$0xf]
  %v156 = vld [vmem:[%s1 + $0x1ec] sm:$0xf]
  %v157 = vld [vmem:[%s1 + $0x1f0] sm:$0xf]
  %v158 = vld [vmem:[%s1 + $0x1f4] sm:$0xf]
  %v159 = vld [vmem:[%s1 + $0x1f8] sm:$0xf]
  %v160 = vld [vmem:[%s1 + $0x1fc] sm:$0xf]
  %v161 = vld [vmem:[%s1 + $0x200] sm:$0xf]
  %v162 = vld [vmem:[%s1 + $0x204] sm:$0xf]
  %v163 = vld [vmem:[%s1 + $0x208] sm:$0xf]
  %v164 = vld [vmem:[%s1 + $0x20c] sm:$0xf]
  %v165 = vld [vmem:[%s1 + $0x210] sm:$0xf]
  %v166 = vld [vmem:[%s1 + $0x214] sm:$0xf]
  %v167 = vld [vmem:[%s1 + $0x218] sm:$0xf]
  %v168 = vld [vmem:[%s1 + $0x21c] sm:$0xf]
  %v169 = vld [vmem:[%s1 + $0x220] sm:$0xf]
  %v170 = vld [vmem:[%s1 + $0x224] sm:$0xf]
  %v171 = vld [vmem:[%s1 + $0x228] sm:$0xf]
  %v172 = vld [vmem:[%s1 + $0x22c] sm:$0xf]
  %v173 = vld [vmem:[%s1 + $0x230] sm:$0xf]
  %v174 = vld [vmem:[%s1 + $0x234] sm:$0xf]
  %v175 = vld [vmem:[%s1 + $0x238] sm:$0xf]
  %v176 = vld [vmem:[%s1 + $0x23c] sm:$0xf]
  %v192 = vunpack.c.l.b16 %v18
  %v193 = vunpack.c.h.b16 %v18
  %v194 = vunpack.c.l.b16 %v19
  %v195 = vunpack.c.h.b16 %v19
  %v196 = vunpack.c.l.b16 %v20
  %v197 = vunpack.c.h.b16 %v20
  %v198 = vunpack.c.l.b16 %v21
  %v199 = vunpack.c.h.b16 %v21
  %v200 = vunpack.c.l.b16 %v22
  %v201 = vunpack.c.l.b16 %v23
  %v202 = vunpack.c.h.b16 %v23
  %v203 = vunpack.c.l.b16 %v24
  %v204 = vunpack.c.h.b16 %v24
  %v205 = vunpack.c.l.b16 %v25
  %v206 = vunpack.c.h.b16 %v25
  %v207 = vunpack.c.l.b16 %v26
  %v208 = vunpack.c.h.b16 %v26
  %v209 = vunpack.c.l.b16 %v27
  %v210 = vunpack.c.l.b16 %v28
  %v211 = vunpack.c.h.b16 %v28
  %v212 = vunpack.c.l.b16 %v29
  %v213 = vunpack.c.h.b16 %v29
  %v214 = vunpack.c.l.b16 %v30
  %v215 = vunpack.c.h.b16 %v30
  %v216 = vunpack.c.l.b16 %v31
  %v217 = vunpack.c.h.b16 %v31
  %v218 = vunpack.c.l.b16 %v32
  %v219 = vpack.c.b16 %v201, %v192
  %v220 = vpack.c.b16 %v202, %v193
  %v221 = vpack.c.b16 %v203, %v194
  %v222 = vpack.c.b16 %v204, %v195
  %v223 = vpack.c.b16 %v205, %v196
  %v224 = vpack.c.b16 %v206, %v197
  %v225 = vpack.c.b16 %v207, %v198
  %v226 = vpack.c.b16 %v208, %v199
  %v227 = vpack.c.b16 %v209, %v200
  %v228 = vpack.c.b16 %v210, %v210
  %v229 = vpack.c.b16 %v211, %v211
  %v230 = vpack.c.b16 %v212, %v212
  %v231 = vpack.c.b16 %v213, %v213
  %v232 = vpack.c.b16 %v214, %v214
  %v233 = vpack.c.b16 %v215, %v215
  %v234 = vpack.c.b16 %v216, %v216
  %v235 = vpack.c.b16 %v217, %v217
  %v236 = vpack.c.b16 %v218, %v218
  %v399 = vunpack.c.l.b16 %v33
  %v400 = vunpack.c.l.b16 %v34
  %v401 = vunpack.c.l.b16 %v35
  %v402 = vunpack.c.l.b16 %v36
  %v403 = vunpack.c.l.b16 %v37
  %v404 = vunpack.c.l.b16 %v38
  %v405 = vunpack.c.l.b16 %v39
  %v406 = vunpack.c.l.b16 %v40
  %v407 = vunpack.c.l.b16 %v41
  %v408 = vunpack.c.l.b16 %v42
  %v409 = vunpack.c.l.b16 %v43
  %v410 = vunpack.c.l.b16 %v44
  %v411 = vunpack.c.l.b16 %v45
  %v412 = vunpack.c.l.b16 %v46
  %v413 = vunpack.c.l.b16 %v47
  %v414 = vunpack.c.l.b16 %v48
  %v415 = vunpack.c.l.b16 %v49
  %v416 = vunpack.c.l.b16 %v50
  %v417 = vunpack.c.l.b16 %v51
  %v418 = vunpack.c.l.b16 %v52
  %v419 = vunpack.c.l.b16 %v53
  %v420 = vunpack.c.l.b16 %v54
  %v421 = vunpack.c.l.b16 %v55
  %v422 = vunpack.c.l.b16 %v56
  %v423 = vunpack.c.l.b16 %v57
  %v424 = vunpack.c.l.b16 %v58
  %v425 = vunpack.c.l.b16 %v59
  %v426 = vunpack.c.l.b16 %v60
  %v427 = vunpack.c.l.b16 %v61
  %v428 = vunpack.c.l.b16 %v62
  %v429 = vunpack.c.l.b16 %v63
  %v430 = vunpack.c.l.b16 %v64
  %v431 = vunpack.c.l.b16 %v65
  %v432 = vunpack.c.l.b16 %v66
  %v433 = vunpack.c.l.b16 %v67
  %v434 = vunpack.c.l.b16 %v68
  %v435 = vunpack.c.l.b16 %v69
  %v436 = vunpack.c.l.b16 %v70
  %v437 = vunpack.c.l.b16 %v71
  %v438 = vunpack.c.l.b16 %v72
  %v439 = vunpack.c.l.b16 %v73
  %v440 = vunpack.c.l.b16 %v74
  %v441 = vunpack.c.l.b16 %v75
  %v442 = vunpack.c.l.b16 %v76
  %v443 = vunpack.c.l.b16 %v77
  %v444 = vunpack.c.l.b16 %v78
  %v445 = vunpack.c.l.b16 %v79
  %v446 = vunpack.c.l.b16 %v80
  %v447 = vunpack.c.l.b16 %v81
  %v448 = vunpack.c.l.b16 %v82
  %v449 = vunpack.c.l.b16 %v83
  %v450 = vunpack.c.l.b16 %v84
  %v451 = vunpack.c.l.b16 %v85
  %v452 = vunpack.c.l.b16 %v86
  %v453 = vunpack.c.l.b16 %v87
  %v454 = vunpack.c.l.b16 %v88
  %v455 = vunpack.c.l.b16 %v89
  %v456 = vunpack.c.l.b16 %v90
  %v457 = vunpack.c.l.b16 %v91
  %v458 = vunpack.c.l.b16 %v92
  %v459 = vunpack.c.l.b16 %v93
  %v460 = vunpack.c.l.b16 %v94
  %v461 = vunpack.c.l.b16 %v95
  %v462 = vunpack.c.l.b16 %v96
  %v463 = vunpack.c.l.b16 %v97
  %v464 = vunpack.c.l.b16 %v98
  %v465 = vunpack.c.l.b16 %v99
  %v466 = vunpack.c.l.b16 %v100
  %v467 = vunpack.c.l.b16 %v101
  %v468 = vunpack.c.l.b16 %v102
  %v469 = vunpack.c.l.b16 %v103
  %v470 = vunpack.c.l.b16 %v104
  %v471 = vunpack.c.l.b16 %v105
  %v472 = vunpack.c.l.b16 %v106
  %v473 = vunpack.c.l.b16 %v107
  %v474 = vunpack.c.l.b16 %v108
  %v475 = vunpack.c.l.b16 %v109
  %v476 = vunpack.c.l.b16 %v110
  %v477 = vunpack.c.l.b16 %v111
  %v478 = vunpack.c.l.b16 %v112
  %v479 = vunpack.c.l.b16 %v113
  %v480 = vunpack.c.l.b16 %v114
  %v481 = vunpack.c.l.b16 %v115
  %v482 = vunpack.c.l.b16 %v116
  %v483 = vunpack.c.l.b16 %v117
  %v484 = vunpack.c.l.b16 %v118
  %v485 = vunpack.c.l.b16 %v119
  %v486 = vunpack.c.l.b16 %v120
  %v487 = vunpack.c.l.b16 %v121
  %v488 = vunpack.c.l.b16 %v122
  %v489 = vunpack.c.l.b16 %v123
  %v490 = vunpack.c.l.b16 %v124
  %v491 = vunpack.c.l.b16 %v125
  %v492 = vunpack.c.l.b16 %v126
  %v493 = vunpack.c.l.b16 %v127
  %v494 = vunpack.c.l.b16 %v128
  %v495 = vunpack.c.l.b16 %v129
  %v496 = vunpack.c.l.b16 %v130
  %v497 = vunpack.c.l.b16 %v131
  %v498 = vunpack.c.l.b16 %v132
  %v499 = vunpack.c.l.b16 %v133
  %v500 = vunpack.c.l.b16 %v134
  %v501 = vunpack.c.l.b16 %v135
  %v502 = vunpack.c.l.b16 %v136
  %v503 = vunpack.c.l.b16 %v137
  %v504 = vunpack.c.l.b16 %v138
  %v505 = vunpack.c.l.b16 %v139
  %v506 = vunpack.c.l.b16 %v140
  %v507 = vunpack.c.l.b16 %v141
  %v508 = vunpack.c.l.b16 %v142
  %v509 = vunpack.c.l.b16 %v143
  %v510 = vunpack.c.l.b16 %v144
  %v511 = vunpack.c.l.b16 %v145
  %v512 = vunpack.c.l.b16 %v146
  %v513 = vunpack.c.l.b16 %v147
  %v514 = vunpack.c.l.b16 %v148
  %v515 = vunpack.c.l.b16 %v149
  %v516 = vunpack.c.l.b16 %v150
  %v517 = vunpack.c.l.b16 %v151
  %v518 = vunpack.c.l.b16 %v152
  %v519 = vunpack.c.l.b16 %v153
  %v520 = vunpack.c.l.b16 %v154
  %v521 = vunpack.c.l.b16 %v155
  %v522 = vunpack.c.l.b16 %v156
  %v523 = vunpack.c.l.b16 %v157
  %v524 = vunpack.c.l.b16 %v158
  %v525 = vunpack.c.l.b16 %v159
  %v526 = vunpack.c.l.b16 %v160
  %v527 = vunpack.c.l.b16 %v161
  %v528 = vunpack.c.l.b16 %v162
  %v529 = vunpack.c.l.b16 %v163
  %v530 = vunpack.c.l.b16 %v164
  %v531 = vunpack.c.l.b16 %v165
  %v532 = vunpack.c.l.b16 %v166
  %v533 = vunpack.c.l.b16 %v167
  %v534 = vunpack.c.l.b16 %v168
  %v535 = vunpack.c.l.b16 %v169
  %v536 = vunpack.c.l.b16 %v170
  %v537 = vunpack.c.l.b16 %v171
  %v538 = vunpack.c.l.b16 %v172
  %v539 = vunpack.c.l.b16 %v173
  %v540 = vunpack.c.l.b16 %v174
  %v541 = vunpack.c.l.b16 %v175
  %v542 = vunpack.c.l.b16 %v176
  %v543 = vpack.c.b16 %v400, %v399
  %v544 = vpack.c.b16 %v402, %v401
  %v545 = vpack.c.b16 %v404, %v403
  %v546 = vpack.c.b16 %v406, %v405
  %v547 = vpack.c.b16 %v408, %v407
  %v548 = vpack.c.b16 %v410, %v409
  %v549 = vpack.c.b16 %v412, %v411
  %v550 = vpack.c.b16 %v414, %v413
  %v551 = vpack.c.b16 %v416, %v415
  %v552 = vpack.c.b16 %v418, %v417
  %v553 = vpack.c.b16 %v420, %v419
  %v554 = vpack.c.b16 %v422, %v421
  %v555 = vpack.c.b16 %v424, %v423
  %v556 = vpack.c.b16 %v426, %v425
  %v557 = vpack.c.b16 %v428, %v427
  %v558 = vpack.c.b16 %v430, %v429
  %v559 = vpack.c.b16 %v432, %v431
  %v560 = vpack.c.b16 %v434, %v433
  %v561 = vpack.c.b16 %v436, %v435
  %v562 = vpack.c.b16 %v438, %v437
  %v563 = vpack.c.b16 %v440, %v439
  %v564 = vpack.c.b16 %v442, %v441
  %v565 = vpack.c.b16 %v444, %v443
  %v566 = vpack.c.b16 %v446, %v445
  %v567 = vpack.c.b16 %v448, %v447
  %v568 = vpack.c.b16 %v450, %v449
  %v569 = vpack.c.b16 %v452, %v451
  %v570 = vpack.c.b16 %v454, %v453
  %v571 = vpack.c.b16 %v456, %v455
  %v572 = vpack.c.b16 %v458, %v457
  %v573 = vpack.c.b16 %v460, %v459
  %v574 = vpack.c.b16 %v462, %v461
  %v575 = vpack.c.b16 %v464, %v463
  %v576 = vpack.c.b16 %v466, %v465
  %v577 = vpack.c.b16 %v468, %v467
  %v578 = vpack.c.b16 %v470, %v469
  %v579 = vpack.c.b16 %v472, %v471
  %v580 = vpack.c.b16 %v474, %v473
  %v581 = vpack.c.b16 %v476, %v475
  %v582 = vpack.c.b16 %v478, %v477
  %v583 = vpack.c.b16 %v480, %v479
  %v584 = vpack.c.b16 %v482, %v481
  %v585 = vpack.c.b16 %v484, %v483
  %v586 = vpack.c.b16 %v486, %v485
  %v587 = vpack.c.b16 %v488, %v487
  %v588 = vpack.c.b16 %v490, %v489
  %v589 = vpack.c.b16 %v492, %v491
  %v590 = vpack.c.b16 %v494, %v493
  %v591 = vpack.c.b16 %v496, %v495
  %v592 = vpack.c.b16 %v498, %v497
  %v593 = vpack.c.b16 %v500, %v499
  %v594 = vpack.c.b16 %v502, %v501
  %v595 = vpack.c.b16 %v504, %v503
  %v596 = vpack.c.b16 %v506, %v505
  %v597 = vpack.c.b16 %v508, %v507
  %v598 = vpack.c.b16 %v510, %v509
  %v599 = vpack.c.b16 %v512, %v511
  %v600 = vpack.c.b16 %v514, %v513
  %v601 = vpack.c.b16 %v516, %v515
  %v602 = vpack.c.b16 %v518, %v517
  %v603 = vpack.c.b16 %v520, %v519
  %v604 = vpack.c.b16 %v522, %v521
  %v605 = vpack.c.b16 %v524, %v523
  %v606 = vpack.c.b16 %v526, %v525
  %v607 = vpack.c.b16 %v528, %v527
  %v608 = vpack.c.b16 %v530, %v529
  %v609 = vpack.c.b16 %v532, %v531
  %v610 = vpack.c.b16 %v534, %v533
  %v611 = vpack.c.b16 %v536, %v535
  %v612 = vpack.c.b16 %v538, %v537
  %v613 = vpack.c.b16 %v540, %v539
  %v614 = vpack.c.b16 %v542, %v541
  %687 = vmatprep.subr.bf16.mxu0 0
  %688 = vmatpush1.bf16.msra.mxu0 %v550
  %689 = vmatprep.subr.bf16.mxu0 0
  %690 = vmatpush1.bf16.msra.mxu0 %v549
  %691 = vmatprep.subr.bf16.mxu0 0
  %692 = vmatpush1.bf16.msra.mxu0 %v548
  %693 = vmatprep.subr.bf16.mxu0 0
  %694 = vmatpush1.bf16.msra.mxu0 %v547
  %695 = vmatprep.subr.bf16.mxu0 0
  %696 = vmatpush1.bf16.msra.mxu0 %v546
  %697 = vmatprep.subr.bf16.mxu0 0
  %698 = vmatpush1.bf16.msra.mxu0 %v545
  %699 = vmatprep.subr.bf16.mxu0 0
  %700 = vmatpush1.bf16.msra.mxu0 %v544
  %701 = vmatprep.subr.bf16.mxu0 0
  %702 = vmatpush1.bf16.msra.mxu0 %v543
  %703 = vmatprep.subr.bf16.mxu0 0
  %704 = vmatpush2.bf16.msra.mxu0 %v558
  %705 = vmatprep.subr.bf16.mxu0 0
  %706 = vmatpush2.bf16.msra.mxu0 %v557
  %707 = vmatprep.subr.bf16.mxu0 0
  %708 = vmatpush2.bf16.msra.mxu0 %v556
  %709 = vmatprep.subr.bf16.mxu0 0
  %710 = vmatpush2.bf16.msra.mxu0 %v555
  %711 = vmatprep.subr.bf16.mxu0 0
  %712 = vmatpush2.bf16.msra.mxu0 %v554
  %713 = vmatprep.subr.bf16.mxu0 0
  %714 = vmatpush2.bf16.msra.mxu0 %v553
  %715 = vmatprep.subr.bf16.mxu0 0
  %716 = vmatpush2.bf16.msra.mxu0 %v552
  %717 = vmatprep.subr.bf16.mxu0 0
  %718 = vmatpush2.bf16.msra.mxu0 %v551
  %719 = vmatprep.mubr.bf16.mxu0 %v220
  %720 = vmatmul.mubr.bf16.gmra.mxu0 %v219
  %v721 = vpop.f32.mrf.mxu0
  %v722 = vadd.f32 0.0, %v721
  %v723 = vpop.f32.mrf.mxu0
  %v724 = vpop.f32.mrf.mxu0
  %v725 = vadd.f32 0.0, %v724
  %v726 = vpop.f32.mrf.mxu0
  %727 = vmatprep.mubr.bf16.mxu0 %v229
  %728 = vmatmul.mubr.bf16.gmra.mxu0 %v228
  %v729 = vpop.f32.mrf.mxu0
  %v730 = vadd.f32 0.0, %v729
  %v731 = vpop.f32.mrf.mxu0
  %v732 = vpop.f32.mrf.mxu0
  %v733 = vpop.f32.mrf.mxu0
  %734 = vdwg.mxu0
  %735 = vmatprep.subr.bf16.mxu0 0
  %736 = vmatpush1.bf16.msra.mxu0 %v566
  %737 = vmatprep.subr.bf16.mxu0 0
  %738 = vmatpush1.bf16.msra.mxu0 %v565
  %739 = vmatprep.subr.bf16.mxu0 0
  %740 = vmatpush1.bf16.msra.mxu0 %v564
  %741 = vmatprep.subr.bf16.mxu0 0
  %742 = vmatpush1.bf16.msra.mxu0 %v563
  %743 = vmatprep.subr.bf16.mxu0 0
  %744 = vmatpush1.bf16.msra.mxu0 %v562
  %745 = vmatprep.subr.bf16.mxu0 0
  %746 = vmatpush1.bf16.msra.mxu0 %v561
  %747 = vmatprep.subr.bf16.mxu0 0
  %748 = vmatpush1.bf16.msra.mxu0 %v560
  %749 = vmatprep.subr.bf16.mxu0 0
  %750 = vmatpush1.bf16.msra.mxu0 %v559
  %751 = vmatprep.subr.bf16.mxu0 0
  %752 = vmatpush2.bf16.msra.mxu0 %v574
  %753 = vmatprep.subr.bf16.mxu0 0
  %754 = vmatpush2.bf16.msra.mxu0 %v573
  %755 = vmatprep.subr.bf16.mxu0 0
  %756 = vmatpush2.bf16.msra.mxu0 %v572
  %757 = vmatprep.subr.bf16.mxu0 0
  %758 = vmatpush2.bf16.msra.mxu0 %v571
  %759 = vmatprep.subr.bf16.mxu0 0
  %760 = vmatpush2.bf16.msra.mxu0 %v570
  %761 = vmatprep.subr.bf16.mxu0 0
  %762 = vmatpush2.bf16.msra.mxu0 %v569
  %763 = vmatprep.subr.bf16.mxu0 0
  %764 = vmatpush2.bf16.msra.mxu0 %v568
  %765 = vmatprep.subr.bf16.mxu0 0
  %766 = vmatpush2.bf16.msra.mxu0 %v567
  %767 = vmatprep.mubr.bf16.mxu0 %v222
  %768 = vmatmul.mubr.bf16.gmra.mxu0 %v221
  %v769 = vpop.f32.mrf.mxu0
  %v770 = vadd.f32 %v722, %v769
  %v771 = vpop.f32.mrf.mxu0
  %v772 = vpop.f32.mrf.mxu0
  %v773 = vadd.f32 %v725, %v772
  %v774 = vpop.f32.mrf.mxu0
  %775 = vmatprep.mubr.bf16.mxu0 %v231
  %776 = vmatmul.mubr.bf16.gmra.mxu0 %v230
  %v777 = vpop.f32.mrf.mxu0
  %v778 = vadd.f32 %v730, %v777
  %v779 = vpop.f32.mrf.mxu0
  %v780 = vpop.f32.mrf.mxu0
  %v781 = vpop.f32.mrf.mxu0
  %782 = vdwg.mxu0
  %783 = vmatprep.subr.bf16.mxu0 0
  %784 = vmatpush1.bf16.msra.mxu0 %v582
  %785 = vmatprep.subr.bf16.mxu0 0
  %786 = vmatpush1.bf16.msra.mxu0 %v581
  %787 = vmatprep.subr.bf16.mxu0 0
  %788 = vmatpush1.bf16.msra.mxu0 %v580
  %789 = vmatprep.subr.bf16.mxu0 0
  %790 = vmatpush1.bf16.msra.mxu0 %v579
  %791 = vmatprep.subr.bf16.mxu0 0
  %792 = vmatpush1.bf16.msra.mxu0 %v578
  %793 = vmatprep.subr.bf16.mxu0 0
  %794 = vmatpush1.bf16.msra.mxu0 %v577
  %795 = vmatprep.subr.bf16.mxu0 0
  %796 = vmatpush1.bf16.msra.mxu0 %v576
  %797 = vmatprep.subr.bf16.mxu0 0
  %798 = vmatpush1.bf16.msra.mxu0 %v575
  %799 = vmatprep.subr.bf16.mxu0 0
  %800 = vmatpush2.bf16.msra.mxu0 %v590
  %801 = vmatprep.subr.bf16.mxu0 0
  %802 = vmatpush2.bf16.msra.mxu0 %v589
  %803 = vmatprep.subr.bf16.mxu0 0
  %804 = vmatpush2.bf16.msra.mxu0 %v588
  %805 = vmatprep.subr.bf16.mxu0 0
  %806 = vmatpush2.bf16.msra.mxu0 %v587
  %807 = vmatprep.subr.bf16.mxu0 0
  %808 = vmatpush2.bf16.msra.mxu0 %v586
  %809 = vmatprep.subr.bf16.mxu0 0
  %810 = vmatpush2.bf16.msra.mxu0 %v585
  %811 = vmatprep.subr.bf16.mxu0 0
  %812 = vmatpush2.bf16.msra.mxu0 %v584
  %813 = vmatprep.subr.bf16.mxu0 0
  %814 = vmatpush2.bf16.msra.mxu0 %v583
  %815 = vmatprep.mubr.bf16.mxu0 %v224
  %816 = vmatmul.mubr.bf16.gmra.mxu0 %v223
  %v817 = vpop.f32.mrf.mxu0
  %v818 = vadd.f32 %v770, %v817
  %v819 = vpop.f32.mrf.mxu0
  %v820 = vpop.f32.mrf.mxu0
  %v821 = vadd.f32 %v773, %v820
  %v822 = vpop.f32.mrf.mxu0
  %823 = vmatprep.mubr.bf16.mxu0 %v233
  %824 = vmatmul.mubr.bf16.gmra.mxu0 %v232
  %v825 = vpop.f32.mrf.mxu0
  %v826 = vadd.f32 %v778, %v825
  %v827 = vpop.f32.mrf.mxu0
  %v828 = vpop.f32.mrf.mxu0
  %v829 = vpop.f32.mrf.mxu0
  %830 = vdwg.mxu0
  %831 = vmatprep.subr.bf16.mxu0 0
  %832 = vmatpush1.bf16.msra.mxu0 %v598
  %833 = vmatprep.subr.bf16.mxu0 0
  %834 = vmatpush1.bf16.msra.mxu0 %v597
  %835 = vmatprep.subr.bf16.mxu0 0
  %836 = vmatpush1.bf16.msra.mxu0 %v596
  %837 = vmatprep.subr.bf16.mxu0 0
  %838 = vmatpush1.bf16.msra.mxu0 %v595
  %839 = vmatprep.subr.bf16.mxu0 0
  %840 = vmatpush1.bf16.msra.mxu0 %v594
  %841 = vmatprep.subr.bf16.mxu0 0
  %842 = vmatpush1.bf16.msra.mxu0 %v593
  %843 = vmatprep.subr.bf16.mxu0 0
  %844 = vmatpush1.bf16.msra.mxu0 %v592
  %845 = vmatprep.subr.bf16.mxu0 0
  %846 = vmatpush1.bf16.msra.mxu0 %v591
  %847 = vmatprep.subr.bf16.mxu0 0
  %848 = vmatpush2.bf16.msra.mxu0 %v606
  %849 = vmatprep.subr.bf16.mxu0 0
  %850 = vmatpush2.bf16.msra.mxu0 %v605
  %851 = vmatprep.subr.bf16.mxu0 0
  %852 = vmatpush2.bf16.msra.mxu0 %v604
  %853 = vmatprep.subr.bf16.mxu0 0
  %854 = vmatpush2.bf16.msra.mxu0 %v603
  %855 = vmatprep.subr.bf16.mxu0 0
  %856 = vmatpush2.bf16.msra.mxu0 %v602
  %857 = vmatprep.subr.bf16.mxu0 0
  %858 = vmatpush2.bf16.msra.mxu0 %v601
  %859 = vmatprep.subr.bf16.mxu0 0
  %860 = vmatpush2.bf16.msra.mxu0 %v600
  %861 = vmatprep.subr.bf16.mxu0 0
  %862 = vmatpush2.bf16.msra.mxu0 %v599
  %863 = vmatprep.mubr.bf16.mxu0 %v226
  %864 = vmatmul.mubr.bf16.gmra.mxu0 %v225
  %v865 = vpop.f32.mrf.mxu0
  %v866 = vadd.f32 %v818, %v865
  %v867 = vpop.f32.mrf.mxu0
  %v868 = vpop.f32.mrf.mxu0
  %v869 = vadd.f32 %v821, %v868
  %v870 = vpop.f32.mrf.mxu0
  %871 = vmatprep.mubr.bf16.mxu0 %v235
  %872 = vmatmul.mubr.bf16.gmra.mxu0 %v234
  %v873 = vpop.f32.mrf.mxu0
  %v874 = vadd.f32 %v826, %v873
  %v875 = vpop.f32.mrf.mxu0
  %v876 = vpop.f32.mrf.mxu0
  %v877 = vpop.f32.mrf.mxu0
  %878 = vdwg.mxu0
  %879 = vmatprep.subr.bf16.mxu0 0
  %880 = vmatpush1.bf16.msra.mxu0 %v614
  %881 = vmatprep.subr.bf16.mxu0 0
  %882 = vmatpush1.bf16.msra.mxu0 %v613
  %883 = vmatprep.subr.bf16.mxu0 0
  %884 = vmatpush1.bf16.msra.mxu0 %v612
  %885 = vmatprep.subr.bf16.mxu0 0
  %886 = vmatpush1.bf16.msra.mxu0 %v611
  %887 = vmatprep.subr.bf16.mxu0 0
  %888 = vmatpush1.bf16.msra.mxu0 %v610
  %889 = vmatprep.subr.bf16.mxu0 0
  %890 = vmatpush1.bf16.msra.mxu0 %v609
  %891 = vmatprep.subr.bf16.mxu0 0
  %892 = vmatpush1.bf16.msra.mxu0 %v608
  %893 = vmatprep.subr.bf16.mxu0 0
  %894 = vmatpush1.bf16.msra.mxu0 %v607
  %895 = vmatprep.subr.bf16.mxu0 0
  %896 = vmatpush2.bf16.msra.mxu0 0
  %897 = vmatprep.subr.bf16.mxu0 0
  %898 = vmatpush2.bf16.msra.mxu0 0
  %899 = vmatprep.subr.bf16.mxu0 0
  %900 = vmatpush2.bf16.msra.mxu0 0
  %901 = vmatprep.subr.bf16.mxu0 0
  %902 = vmatpush2.bf16.msra.mxu0 0
  %903 = vmatprep.subr.bf16.mxu0 0
  %904 = vmatpush2.bf16.msra.mxu0 0
  %905 = vmatprep.subr.bf16.mxu0 0
  %906 = vmatpush2.bf16.msra.mxu0 0
  %907 = vmatprep.subr.bf16.mxu0 0
  %908 = vmatpush2.bf16.msra.mxu0 0
  %909 = vmatprep.subr.bf16.mxu0 0
  %910 = vmatpush2.bf16.msra.mxu0 0
  %911 = vmatprep.mubr.bf16.mxu0 0
  %912 = vmatmul.mubr.bf16.gmra.mxu0 %v227
  %v913 = vpop.f32.mrf.mxu0
  %v914 = vadd.f32 %v866, %v913
  %v915 = vpop.f32.mrf.mxu0
  %v916 = vpop.f32.mrf.mxu0
  %v917 = vadd.f32 %v869, %v916
  %v918 = vpop.f32.mrf.mxu0
  %919 = vmatprep.mubr.bf16.mxu0 0
  %920 = vmatmul.mubr.bf16.gmra.mxu0 %v236
  %v921 = vpop.f32.mrf.mxu0
  %v922 = vadd.f32 %v874, %v921
  %v923 = vpop.f32.mrf.mxu0
  %v924 = vpop.f32.mrf.mxu0
  %v925 = vpop.f32.mrf.mxu0
  %926 = vdwg.mxu0
  %v927 = vld [vmem:[%s2] sm:$0x1]
  %v929 = vlaneseq
  %v930 = vshrl.u32 %v929, 7
  %v931 = vsub.s32 0, %v930
  %v932 = vrot.slane %v927, %v931
  %v934 = vmul.f32 %v914, %v932
  %v935 = vmul.f32 %v917, %v932
  %v936 = vmul.f32 %v922, %v932
  %v937 = vld [vmem:[%s3] sm:$0x1]
  %v939 = vlaneseq
  %v940 = vshrl.u32 %v939, 7
  %v941 = vsub.s32 0, %v940
  %v942 = vrot.slane %v937, %v941
  %v944 = vadd.f32 %v934, %v942
  %v945 = vadd.f32 %v935, %v942
  %v946 = vadd.f32 %v936, %v942
  %v947 = vmax.f32 %v944, 0.0
  %v948 = vmax.f32 %v945, 0.0
  %v949 = vmax.f32 %v946, 0.0
  %950 = vst [vmem:[%s4] sm:$0xff] %v947
  %951 = vst [vmem:[%s4 + $0x8] sm:$0xff] %v948
  %952 = vst [vmem:[%s4 + $0x10] sm:$0xff] %v949
  // Predicated region
  $region18: #{cnn_forward.16} parent=0 // pred_check
    _
  $region19: #{cnn_forward.16} parent=0 // pred_check_branch
    %954 = sbr.rel (0) target = $region21
  $region20: #{cnn_forward.16} parent=0 // pred_region
    _
  $region21: #{cnn_forward.16} parent=0 // pred_fallthru
    _
  // Predicated region
  $region22: #{cnn_forward.16} parent=0 // pred_check
    _
  $region23: #{cnn_forward.16} parent=0 // pred_check_branch
    %956 = sbr.rel (0) target = $region25
  $region24: #{cnn_forward.16} parent=0 // pred_region
    _
  $region25: #{cnn_forward.16} parent=0 // pred_fallthru
    _

</llo_original>
